<compile_context>
chip_gen: v7x
topology: tpu7x:2x2x1
jax: 0.10.0
libtpu: 0.0.40
codegen_flags: <defaults>
</compile_context>

<pallas_src>
import jax
import jax.numpy as jnp
from jax.experimental import pallas as pl
from jax.experimental.pallas import tpu as pltpu

IN_FEATURES = 3 * 32 * 32      # 3072
NUM_HIDDEN = 512
NUM_CLASSES = 10
C_PAD = 128                    # lane-aligned padded class dim


def _round_up(n, m):
    return ((n + m - 1) // m) * m


def _net_kernel(x_ref, w1_ref, scale_ref, w2_ref, logp_ref, inter_ref):
    # x_ref:     (TB, 3072)   flattened input tile (f32)
    # w1_ref:    (3072, 512)  fc1 weight, transposed (bf16), resident across grid
    # scale_ref: (1, 512)     ReLU_Scaler per-feature scale (f32)
    # w2_ref:    (512, 128)   fc2 weight, transposed + zero-padded (bf16), resident
    # logp_ref:  (TB, 128)    log_softmax output tile (padded, f32)
    # inter_ref: (TB, 512)    intermediate (scaled ReLU) output tile (f32)
    x = x_ref[...].astype(jnp.bfloat16)

    # fc1 (no bias), bf16 MXU matmul with f32 accumulation, then ReLU.
    h = jnp.dot(x, w1_ref[...], preferred_element_type=jnp.float32)
    h = jnp.maximum(h, 0.0)

    # ReLU_Scaler: per-hidden-unit learnable scale (f32, VPU — co-issues with MXU).
    h = h * scale_ref[...]
    inter_ref[...] = h

    # fc2 (no bias), bf16 MXU matmul with f32 accumulation.
    logits = jnp.dot(h.astype(jnp.bfloat16), w2_ref[...],
                     preferred_element_type=jnp.float32)

    # log_softmax over the class dim; mask out the zero-padded lanes >= 10.
    col = jax.lax.broadcasted_iota(jnp.int32, logits.shape, 1)
    valid = col < NUM_CLASSES
    masked = jnp.where(valid, logits, jnp.float32(-1e30))
    m = jnp.max(masked, axis=-1, keepdims=True)
    expz = jnp.where(valid, jnp.exp(masked - m), 0.0)
    lse = jnp.log(jnp.sum(expz, axis=-1, keepdims=True)) + m
    logp_ref[...] = masked - lse


def net_forward(x, w1_t, scale, w2_t_pad, tb=256):
    """x: (B, 3, 32, 32) float32.

    Returns (log_probs (B, 10), intermediate (B, 512)).
    w1_t: (3072, 512) bf16; scale: (1, 512) f32; w2_t_pad: (512, 128) bf16.
    """
    B = x.shape[0]
    x_flat = x.reshape(B, IN_FEATURES)

    # Batch tile: multiple of 8 (sublane), capped at `tb` (256 fills the MXU M dim).
    tb = min(tb, _round_up(B, 8))
    B_pad = _round_up(B, tb)
    if B_pad != B:
        x_flat = jnp.pad(x_flat, ((0, B_pad - B), (0, 0)))

    grid = (B_pad // tb,)

    logp_pad, inter = pl.pallas_call(
        _net_kernel,
        out_shape=(
            jax.ShapeDtypeStruct((B_pad, C_PAD), jnp.float32),
            jax.ShapeDtypeStruct((B_pad, NUM_HIDDEN), jnp.float32),
        ),
        grid=grid,
        in_specs=[
            # x streams per batch tile (double-buffered by default).
            pl.BlockSpec((tb, IN_FEATURES), lambda i: (i, 0)),
            # Weights / scale: constant block index -> loaded once, VMEM-resident.
            pl.BlockSpec((IN_FEATURES, NUM_HIDDEN), lambda i: (0, 0)),
            pl.BlockSpec((1, NUM_HIDDEN), lambda i: (0, 0)),
            pl.BlockSpec((NUM_HIDDEN, C_PAD), lambda i: (0, 0)),
        ],
        out_specs=(
            pl.BlockSpec((tb, C_PAD), lambda i: (i, 0)),
            pl.BlockSpec((tb, NUM_HIDDEN), lambda i: (i, 0)),
        ),
        compiler_params=pltpu.CompilerParams(
            dimension_semantics=("parallel",),   # megacore-shard batch tiles on v7x
            vmem_limit_bytes=32 << 20,           # ~14 MiB actual footprint @ tb=256
        ),
    )(x_flat, w1_t, scale, w2_t_pad)

    return logp_pad[:B, :NUM_CLASSES], inter[:B]


def init_params(key):
    """Deterministic init matching the module's shapes (PyTorch-style uniform)."""
    k1, k2 = jax.random.split(key)
    bound1 = 1.0 / jnp.sqrt(jnp.float32(IN_FEATURES))
    bound2 = 1.0 / jnp.sqrt(jnp.float32(NUM_HIDDEN))
    # fc1.weight is (512, 3072) in PyTorch; store transposed (3072, 512) as bf16.
    w1_t = jax.random.uniform(k1, (IN_FEATURES, NUM_HIDDEN), jnp.float32,
                              minval=-bound1, maxval=bound1).astype(jnp.bfloat16)
    # fc2.weight is (10, 512); store transposed, zero-pad to (512, 128), bf16.
    w2_t = jax.random.uniform(k2, (NUM_HIDDEN, NUM_CLASSES), jnp.float32,
                              minval=-bound2, maxval=bound2)
    w2_t_pad = (jnp.zeros((NUM_HIDDEN, C_PAD), jnp.float32)
                .at[:, :NUM_CLASSES].set(w2_t)).astype(jnp.bfloat16)
    # ReLU_Scaler: per-feature scale, initialized to ones (identity scaling), kept f32.
    scale = jnp.ones((1, NUM_HIDDEN), jnp.float32)
    return w1_t, scale, w2_t_pad


if __name__ == "__main__":
    key = jax.random.PRNGKey(0)
    kx, kp = jax.random.split(key)

    w1_t, scale, w2_t_pad = init_params(kp)

    # Small test: B=24 with tb=8 exercises the batch-tiled grid (3 steps).
    B = 24
    x = jax.random.normal(kx, (B, 3, 32, 32), jnp.float32)

    log_probs, intermediate = net_forward(x, w1_t, scale, w2_t_pad, tb=8)
    jax.block_until_ready((log_probs, intermediate))

    # Reference check in plain JAX (same bf16-input / f32-accumulate matmuls).
    x_flat = x.reshape(B, IN_FEATURES)
    h_ref = jnp.maximum(
        jnp.dot(x_flat.astype(jnp.bfloat16), w1_t,
                preferred_element_type=jnp.float32), 0.0) * scale
    logits_ref = jnp.dot(h_ref.astype(jnp.bfloat16),
                         w2_t_pad[:, :NUM_CLASSES],
                         preferred_element_type=jnp.float32)
    logp_ref = jax.nn.log_softmax(logits_ref, axis=-1)

    assert log_probs.shape == (B, NUM_CLASSES)
    assert intermediate.shape == (B, NUM_HIDDEN)
    assert jnp.allclose(log_probs, logp_ref, atol=5e-3, rtol=5e-3)
    assert jnp.allclose(intermediate, h_ref, atol=5e-3, rtol=5e-3)

    print("KERNEL_OK")
</pallas_src>

<mosaic_0001>
module attributes {stable_mosaic.version = 11 : i64} {
  func.func @_net_kernel(%arg0: i32, %arg1: memref<8x3072xf32, #tpu.memory_space<vmem>>, %arg2: memref<3072x512xbf16, #tpu.memory_space<vmem>>, %arg3: memref<1x512xf32, #tpu.memory_space<vmem>>, %arg4: memref<512x128xbf16, #tpu.memory_space<vmem>>, %arg5: memref<8x128xf32, #tpu.memory_space<vmem>>, %arg6: memref<8x512xf32, #tpu.memory_space<vmem>>) attributes {dimension_semantics = [#tpu.dimension_semantics<parallel>], iteration_bounds = array<i64: 3>, scalar_prefetch = 0 : i64, scratch_operands = 0 : i64, tpu.core_type = #tpu.core_type<tc>, window_params = [{transform_indices = @transform_0, window_bounds = array<i64: 8, 3072>}, {pipeline_mode = #tpu.pipeline_mode<synchronous>, transform_indices = @transform_1, window_bounds = array<i64: 3072, 512>}, {pipeline_mode = #tpu.pipeline_mode<synchronous>, transform_indices = @transform_2, window_bounds = array<i64: 1, 512>}, {pipeline_mode = #tpu.pipeline_mode<synchronous>, transform_indices = @transform_3, window_bounds = array<i64: 512, 128>}, {transform_indices = @transform_4, window_bounds = array<i64: 8, 128>}, {transform_indices = @transform_5, window_bounds = array<i64: 8, 512>}]} {
    %c0 = arith.constant 0 : index
    %c0_0 = arith.constant 0 : index
    %0 = vector.load %arg1[%c0, %c0_0] : memref<8x3072xf32, #tpu.memory_space<vmem>>, vector<8x3072xf32>
    %1 = arith.truncf %0 : vector<8x3072xf32> to vector<8x3072xbf16>
    %c0_1 = arith.constant 0 : index
    %c0_2 = arith.constant 0 : index
    %2 = vector.load %arg2[%c0_1, %c0_2] : memref<3072x512xbf16, #tpu.memory_space<vmem>>, vector<3072x512xbf16>
    %cst = arith.constant dense<0.000000e+00> : vector<8x512xf32>
    %3 = tpu.matmul %1, %2, %cst {dimension_numbers = #tpu.dot_dimension_numbers<[1], [0], [0], [1], [0, 0, 1, 1], [], []>} : vector<8x3072xbf16>, vector<3072x512xbf16>, vector<8x512xf32> -> vector<8x512xf32>
    %cst_3 = arith.constant 0.000000e+00 : f32
    %4 = vector.broadcast %cst_3 : f32 to vector<8x512xf32>
    %5 = arith.maximumf %3, %4 : vector<8x512xf32>
    %c0_4 = arith.constant 0 : index
    %c0_5 = arith.constant 0 : index
    %6 = vector.load %arg3[%c0_4, %c0_5] : memref<1x512xf32, #tpu.memory_space<vmem>>, vector<1x512xf32>
    %7 = vector.broadcast %6 : vector<1x512xf32> to vector<8x512xf32>
    %8 = arith.mulf %5, %7 : vector<8x512xf32>
    %c0_6 = arith.constant 0 : index
    %c0_7 = arith.constant 0 : index
    %9 = vector.load %arg6[%c0_6, %c0_7] : memref<8x512xf32, #tpu.memory_space<vmem>>, vector<8x512xf32>
    tpu.vector_store %arg6[%c0_6, %c0_7], %8 {strides = array<i32>} : memref<8x512xf32, #tpu.memory_space<vmem>>, vector<8x512xf32>,
    %10 = arith.truncf %8 : vector<8x512xf32> to vector<8x512xbf16>
    %c0_8 = arith.constant 0 : index
    %c0_9 = arith.constant 0 : index
    %11 = vector.load %arg4[%c0_8, %c0_9] : memref<512x128xbf16, #tpu.memory_space<vmem>>, vector<512x128xbf16>
    %cst_10 = arith.constant dense<0.000000e+00> : vector<8x128xf32>
    %12 = tpu.matmul %10, %11, %cst_10 {dimension_numbers = #tpu.dot_dimension_numbers<[1], [0], [0], [1], [0, 0, 1, 1], [], []>} : vector<8x512xbf16>, vector<512x128xbf16>, vector<8x128xf32> -> vector<8x128xf32>
    %13 = tpu.iota {dimensions = array<i32: 1>} : vector<8x128xi32>
    %c10_i32 = arith.constant 10 : i32
    %14 = vector.broadcast %c10_i32 : i32 to vector<8x128xi32>
    %15 = arith.cmpi slt, %13, %14 : vector<8x128xi32>
    %cst_11 = arith.constant -1.000000e+30 : f32
    %16 = vector.broadcast %cst_11 : f32 to vector<8x128xf32>
    %17 = arith.select %15, %12, %16 : vector<8x128xi1>, vector<8x128xf32>
    %cst_12 = arith.constant dense<0xFF800000> : vector<8xf32>
    %18 = vector.multi_reduction <maximumf>, %17, %cst_12 [1] : vector<8x128xf32> to vector<8xf32>
    %19 = vector.shape_cast %18 : vector<8xf32> to vector<8x1xf32>
    %20 = vector.broadcast %19 : vector<8x1xf32> to vector<8x128xf32>
    %21 = arith.subf %17, %20 : vector<8x128xf32>
    %22 = math.exp %21 : vector<8x128xf32>
    %cst_13 = arith.constant 0.000000e+00 : f32
    %23 = vector.broadcast %cst_13 : f32 to vector<8x128xf32>
    %24 = arith.select %15, %22, %23 : vector<8x128xi1>, vector<8x128xf32>
    %cst_14 = arith.constant dense<0.000000e+00> : vector<8xf32>
    %25 = vector.multi_reduction <add>, %24, %cst_14 [1] : vector<8x128xf32> to vector<8xf32>
    %26 = vector.shape_cast %25 : vector<8xf32> to vector<8x1xf32>
    %27 = math.log %26 : vector<8x1xf32>
    %28 = arith.addf %27, %19 : vector<8x1xf32>
    %29 = vector.broadcast %28 : vector<8x1xf32> to vector<8x128xf32>
    %30 = arith.subf %17, %29 : vector<8x128xf32>
    %c0_15 = arith.constant 0 : index
    %c0_16 = arith.constant 0 : index
    %31 = vector.load %arg5[%c0_15, %c0_16] : memref<8x128xf32, #tpu.memory_space<vmem>>, vector<8x128xf32>
    tpu.vector_store %arg5[%c0_15, %c0_16], %30 {strides = array<i32>} : memref<8x128xf32, #tpu.memory_space<vmem>>, vector<8x128xf32>,
    return
  }
  func.func @transform_0(%arg0: i32) -> (i32, i32) {
    %c0_i32 = arith.constant 0 : i32
    %c0_i32_0 = arith.constant 0 : i32
    return %arg0, %c0_i32 : i32, i32
  }
  func.func @transform_1(%arg0: i32) -> (i32, i32) {
    %c0_i32 = arith.constant 0 : i32
    %c0_i32_0 = arith.constant 0 : i32
    %c0_i32_1 = arith.constant 0 : i32
    return %c0_i32, %c0_i32_0 : i32, i32
  }
  func.func @transform_2(%arg0: i32) -> (i32, i32) {
    %c0_i32 = arith.constant 0 : i32
    %c0_i32_0 = arith.constant 0 : i32
    %c0_i32_1 = arith.constant 0 : i32
    return %c0_i32, %c0_i32_0 : i32, i32
  }
  func.func @transform_3(%arg0: i32) -> (i32, i32) {
    %c0_i32 = arith.constant 0 : i32
    %c0_i32_0 = arith.constant 0 : i32
    %c0_i32_1 = arith.constant 0 : i32
    return %c0_i32, %c0_i32_0 : i32, i32
  }
  func.func @transform_4(%arg0: i32) -> (i32, i32) {
    %c0_i32 = arith.constant 0 : i32
    %c0_i32_0 = arith.constant 0 : i32
    return %arg0, %c0_i32 : i32, i32
  }
  func.func @transform_5(%arg0: i32) -> (i32, i32) {
    %c0_i32 = arith.constant 0 : i32
    %c0_i32_0 = arith.constant 0 : i32
    return %arg0, %c0_i32 : i32, i32
  }
}

</mosaic_0001>

<llo_original>
// kernel: tpu_custom_call.1
$region0: #{tpu_custom_call.1}
  #allocation0 [shape = 'u32[]', space=smem, size = 0x4, offset = 0x4, fixed_abs, tag = 'smem constant byte address 0x4 - core index']
  #allocation1 [shape = 'u32[144,128]{1,0:T(1,128)}', space=vmem, size = 0x12000, scoped, tag = 'internal scratch']
  %s0 = inlined_call_operand.hbm [shape: f32[24,3072], index: 0, kind: input, shape index: {}]
  %s1 = inlined_call_operand.hbm [shape: bf16[3072,512], index: 1, kind: input, shape index: {}]
  %s2 = inlined_call_operand.hbm [shape: f32[1,512], index: 2, kind: input, shape index: {}]
  %s3 = inlined_call_operand.hbm [shape: bf16[512,128], index: 3, kind: input, shape index: {}]
  %s4 = inlined_call_operand.hbm [shape: f32[24,128], index: 4, kind: output, shape index: {0}]
  %s5 = inlined_call_operand.hbm [shape: f32[24,512], index: 5, kind: output, shape index: {1}]
  %6 = xla_tuple %s4, %s5
  %s7 = sld [smem:[#allocation0]]
  $region73: #{tpu_custom_call.1} parent=0
    _
  %s9 = ssub.s32 1, %s7
  %s10 = scalar_select 0, %s9, %s7
  $region1: #{tpu_custom_call.1} parent=0
    #allocation2 [shape = 'u8[196608]{0}', space=vmem, size = 0x30000, scoped, tag = 'input window, operand 0']
    #allocation3 [shape = 's32[2]{0}', space=sflag, size = 0x8, scoped, tag = 'scoped memory for tpu_custom_call.1']
    #allocation4 [shape = 's32[2]{0}', space=sflag, size = 0x8, scoped, tag = 'scoped memory for tpu_custom_call.1']
    #allocation5 [shape = 'u8[3145728]{0}', space=vmem, size = 0x300000, scoped, tag = 'input window, operand 1, single buffered']
    #allocation6 [shape = 's32[1]{0}', space=sflag, size = 0x4, scoped, tag = 'scoped memory for tpu_custom_call.1']
    #allocation7 [shape = 'u8[2048]{0}', space=vmem, size = 0x800, scoped, tag = 'input window, operand 2, single buffered']
    #allocation8 [shape = 'u8[131072]{0}', space=vmem, size = 0x20000, scoped, tag = 'input window, operand 3, single buffered']
    #allocation9 [shape = 's32[1]{0}', space=sflag, size = 0x4, scoped, tag = 'scoped memory for tpu_custom_call.1']
    #allocation10 [shape = 'u8[8192]{0}', space=vmem, size = 0x2000, scoped, tag = 'output window, operand 0']
    #allocation11 [shape = 'u8[32768]{0}', space=vmem, size = 0x8000, scoped, tag = 'output window, operand 1']
    #allocation12 [shape = 's32[2]{0}', space=sflag, size = 0x8, scoped, tag = 'scoped memory for tpu_custom_call.1']
    %11 = vsyncpa [#allocation3], 0
    %s12 = scalar_lea.sflag [#allocation3], 1
    %13 = vsyncpa %s12, 0
    %14 = vsyncpa [#allocation6], 0
    %15 = vsyncpa [#allocation9], 0
    %16 = vsyncpa [#allocation4], 0
    %s17 = scalar_lea.sflag [#allocation4], 1
    %18 = vsyncpa %s17, 0
    %19 = vsyncpa [#allocation12], 0
    %s20 = scalar_lea.sflag [#allocation12], 1
    %21 = vsyncpa %s20, 0
    loop: start=0, step=1, limit=5
    $region2: #{tpu_custom_call.1} parent=1 // loop_pre_header
      _
    $region3: #{tpu_custom_call.1} parent=1 // loop_header
      %s23 = sphi 0, %s27
      %p24 = scmp.ge.s32.totalorder %s23, 5
      %s33 = sphi 0, %s35
      %s36 = sphi 0, %s33
      %s37 = sphi 0, %s36
      %s53 = sphi 0, %s37
      %s57 = sphi 0, %s57
      %s59 = sphi 0, %s57
      %s60 = sphi 0, %s59
      %s74 = sphi 0, %s60
      %s78 = sphi 0, %s78
      %s80 = sphi 0, %s78
      %s81 = sphi 0, %s80
      %s95 = sphi 0, %s81
      %s99 = sphi 0, %s99
      %s101 = sphi 0, %s99
      %s102 = sphi 0, %s101
      %s116 = sphi 0, %s102
      %s122 = sphi 0, %s124
      %s125 = sphi 0, %s122
      %s126 = sphi 0, %s125
      %s142 = sphi 0, %s126
      %s148 = sphi 0, %s150
      %s151 = sphi 0, %s148
      %s152 = sphi 0, %s151
      %s168 = sphi 0, %s152
    $region4: #{tpu_custom_call.1} parent=1 // loop_header_branch
      %26 = sbr.rel (%p24) target = $region8
    $region5: #{tpu_custom_call.1} parent=1 // loop_body
      %s28 = ssub.s32 %s23, 1
      %s29 = ssub.s32 %s23, 2
      %s30 = sadd.s32 %s23, 1
      %s31 = ssub.s32 %s23, %s30
      %p32 = scmp.eq.s32.totalorder %s31, 0
      %s34 = sadd.s32 %s33, 1
      %s35 = scalar_select %p32, %s33, %s34
      %p38 = pneg %p32
      %p39 = scmp.eq.s32.totalorder %s23, 2
      %p40 = por %p38, %p39
      %p41 = scmp.ne.s32.totalorder %s33, %s36
      %p42 = scmp.eq.s32.totalorder %s23, 0
      %p43 = por %p41, %p42
      %p44 = scmp.ne.s32.totalorder %s33, %s36
      %p45 = scmp.eq.s32.totalorder %s28, 2
      %p46 = por %p44, %p45
      %p47 = scmp.ne.s32.totalorder %s36, %s37
      %p48 = scmp.eq.s32.totalorder %s28, 0
      %p49 = por %p47, %p48
      %p50 = scmp.ne.s32.totalorder %s36, %s37
      %p51 = scmp.eq.s32.totalorder %s29, 2
      %p52 = por %p50, %p51
      %p54 = scmp.ne.s32.totalorder %s37, %s53
      %p55 = scmp.eq.s32.totalorder %s29, 0
      %p56 = por %p54, %p55
      %s58 = sadd.s32 %s57, 1
      %p61 = scmp.eq.s32.totalorder %s23, 2
      %p62 = scmp.ne.s32.totalorder %s57, %s59
      %p63 = scmp.eq.s32.totalorder %s23, 0
      %p64 = por %p62, %p63
      %p65 = scmp.ne.s32.totalorder %s57, %s59
      %p66 = scmp.eq.s32.totalorder %s28, 2
      %p67 = por %p65, %p66
      %p68 = scmp.ne.s32.totalorder %s59, %s60
      %p69 = scmp.eq.s32.totalorder %s28, 0
      %p70 = por %p68, %p69
      %p71 = scmp.ne.s32.totalorder %s59, %s60
      %p72 = scmp.eq.s32.totalorder %s29, 2
      %p73 = por %p71, %p72
      %p75 = scmp.ne.s32.totalorder %s60, %s74
      %p76 = scmp.eq.s32.totalorder %s29, 0
      %p77 = por %p75, %p76
      %s79 = sadd.s32 %s78, 1
      %p82 = scmp.eq.s32.totalorder %s23, 2
      %p83 = scmp.ne.s32.totalorder %s78, %s80
      %p84 = scmp.eq.s32.totalorder %s23, 0
      %p85 = por %p83, %p84
      %p86 = scmp.ne.s32.totalorder %s78, %s80
      %p87 = scmp.eq.s32.totalorder %s28, 2
      %p88 = por %p86, %p87
      %p89 = scmp.ne.s32.totalorder %s80, %s81
      %p90 = scmp.eq.s32.totalorder %s28, 0
      %p91 = por %p89, %p90
      %p92 = scmp.ne.s32.totalorder %s80, %s81
      %p93 = scmp.eq.s32.totalorder %s29, 2
      %p94 = por %p92, %p93
      %p96 = scmp.ne.s32.totalorder %s81, %s95
      %p97 = scmp.eq.s32.totalorder %s29, 0
      %p98 = por %p96, %p97
      %s100 = sadd.s32 %s99, 1
      %p103 = scmp.eq.s32.totalorder %s23, 2
      %p104 = scmp.ne.s32.totalorder %s99, %s101
      %p105 = scmp.eq.s32.totalorder %s23, 0
      %p106 = por %p104, %p105
      %p107 = scmp.ne.s32.totalorder %s99, %s101
      %p108 = scmp.eq.s32.totalorder %s28, 2
      %p109 = por %p107, %p108
      %p110 = scmp.ne.s32.totalorder %s101, %s102
      %p111 = scmp.eq.s32.totalorder %s28, 0
      %p112 = por %p110, %p111
      %p113 = scmp.ne.s32.totalorder %s101, %s102
      %p114 = scmp.eq.s32.totalorder %s29, 2
      %p115 = por %p113, %p114
      %p117 = scmp.ne.s32.totalorder %s102, %s116
      %p118 = scmp.eq.s32.totalorder %s29, 0
      %p119 = por %p117, %p118
      %s120 = ssub.s32 %s23, %s30
      %p121 = scmp.eq.s32.totalorder %s120, 0
      %s123 = sadd.s32 %s122, 1
      %s124 = scalar_select %p121, %s122, %s123
      %p127 = pneg %p121
      %p128 = scmp.eq.s32.totalorder %s23, 2
      %p129 = por %p127, %p128
      %p130 = scmp.ne.s32.totalorder %s122, %s125
      %p131 = scmp.eq.s32.totalorder %s23, 0
      %p132 = por %p130, %p131
      %p133 = scmp.ne.s32.totalorder %s122, %s125
      %p134 = scmp.eq.s32.totalorder %s28, 2
      %p135 = por %p133, %p134
      %p136 = scmp.ne.s32.totalorder %s125, %s126
      %p137 = scmp.eq.s32.totalorder %s28, 0
      %p138 = por %p136, %p137
      %p139 = scmp.ne.s32.totalorder %s125, %s126
      %p140 = scmp.eq.s32.totalorder %s29, 2
      %p141 = por %p139, %p140
      %p143 = scmp.ne.s32.totalorder %s126, %s142
      %p144 = scmp.eq.s32.totalorder %s29, 0
      %p145 = por %p143, %p144
      %s146 = ssub.s32 %s23, %s30
      %p147 = scmp.eq.s32.totalorder %s146, 0
      %s149 = sadd.s32 %s148, 1
      %s150 = scalar_select %p147, %s148, %s149
      %p153 = pneg %p147
      %p154 = scmp.eq.s32.totalorder %s23, 2
      %p155 = por %p153, %p154
      %p156 = scmp.ne.s32.totalorder %s148, %s151
      %p157 = scmp.eq.s32.totalorder %s23, 0
      %p158 = por %p156, %p157
      %p159 = scmp.ne.s32.totalorder %s148, %s151
      %p160 = scmp.eq.s32.totalorder %s28, 2
      %p161 = por %p159, %p160
      %p162 = scmp.ne.s32.totalorder %s151, %s152
      %p163 = scmp.eq.s32.totalorder %s28, 0
      %p164 = por %p162, %p163
      %p165 = scmp.ne.s32.totalorder %s151, %s152
      %p166 = scmp.eq.s32.totalorder %s29, 2
      %p167 = por %p165, %p166
      %p169 = scmp.ne.s32.totalorder %s152, %s168
      %p170 = scmp.eq.s32.totalorder %s29, 0
      %p171 = por %p169, %p170
      %p172 = scmp.le.s32.totalorder 1, %s23
      %p173 = scmp.lt.s32.totalorder %s23, 4
      %p174 = pnand %p172, %p173
      %p175 = pneg %p174
      // Predicated region
      $region9: #{tpu_custom_call.1} parent=5 // pred_check
        _
      $region10: #{tpu_custom_call.1} parent=5 // pred_check_branch
        %177 = sbr.rel (%p174) target = $region12
      $region11: #{tpu_custom_call.1} parent=5 // pred_region
        %s178 = ssub.s32 %s23, 1
        // Predicated region
        $region13: #{tpu_custom_call.1} parent=11 // pred_check
          %p179 = pneg %p70
        $region14: #{tpu_custom_call.1} parent=11 // pred_check_branch
          %181 = sbr.rel (%p179) target = $region16
        $region15: #{tpu_custom_call.1} parent=11 // pred_region
          %s183 = ssub.s32 98304, 98304
          %184 = vsyncadd [#allocation6], %s183
          %s185 = sshll.u32 [#allocation5], 4
          %s186 = int_to_ptr.vmem [resolvable:$true] %s185
          %191 = dma.hbm_to_vmem [thread:$0]  %s1, 98304, %s186, [#allocation6], 256, 256, 16
        $region16: #{tpu_custom_call.1} parent=11 // pred_fallthru
          _
        // Predicated region
        $region17: #{tpu_custom_call.1} parent=11 // pred_check
          %p192 = pneg %p91
        $region18: #{tpu_custom_call.1} parent=11 // pred_check_branch
          %194 = sbr.rel (%p192) target = $region20
        $region19: #{tpu_custom_call.1} parent=11 // pred_region
          %s196 = ssub.s32 64, 64
          %197 = vsyncadd [#allocation6], %s196
          %s199 = sshll.u32 [#allocation7], 4
          %s200 = int_to_ptr.vmem [resolvable:$true] %s199
          %202 = dma.hbm_to_vmem [thread:$0]  %s2, 64, %s200, [#allocation6]
        $region20: #{tpu_custom_call.1} parent=11 // pred_fallthru
          _
        // Predicated region
        $region21: #{tpu_custom_call.1} parent=11 // pred_check
          %p203 = pneg %p112
        $region22: #{tpu_custom_call.1} parent=11 // pred_check_branch
          %205 = sbr.rel (%p203) target = $region24
        $region23: #{tpu_custom_call.1} parent=11 // pred_region
          %s207 = ssub.s32 4096, 4096
          %208 = vsyncadd [#allocation9], %s207
          %s209 = sshll.u32 [#allocation8], 4
          %s210 = int_to_ptr.vmem [resolvable:$true] %s209
          %215 = dma.hbm_to_vmem [thread:$0]  %s3, 4096, %s210, [#allocation9], 64, 64, 4
        $region24: #{tpu_custom_call.1} parent=11 // pred_fallthru
          _
      $region12: #{tpu_custom_call.1} parent=5 // pred_fallthru
        _
      %p216 = scmp.lt.s32.totalorder %s23, 3
      // Predicated region
      $region25: #{tpu_custom_call.1} parent=5 // pred_check
        %p217 = pneg %p216
      $region26: #{tpu_custom_call.1} parent=5 // pred_check_branch
        %219 = sbr.rel (%p217) target = $region28
      $region27: #{tpu_custom_call.1} parent=5 // pred_region
        // Predicated region
        $region29: #{tpu_custom_call.1} parent=27 // pred_check
          %p220 = pneg %p43
        $region30: #{tpu_custom_call.1} parent=27 // pred_check_branch
          %222 = sbr.rel (%p220) target = $region32
        $region31: #{tpu_custom_call.1} parent=27 // pred_region
          %s223 = sand.u32 %s33, 1
          %s224 = scalar_lea.sflag [#allocation3], %s223
          %s225 = sand.u32 %s33, 1
          %s226 = smul.addr %s225, 192
          %s227 = scalar_lea.vmem [#allocation2], %s226
          %s229 = ssub.s32 3072, 3072
          %230 = vsyncadd %s224, %s229
          %s231 = smul.addr %s23, 24
          %s232 = smul.addr %s231, 128
          %s233 = scalar_lea.hbm %s0, %s232
          %s235 = sshll.u32 %s227, 4
          %s236 = int_to_ptr.vmem [resolvable:$true] %s235
          %238 = dma.hbm_to_vmem [thread:$0]  %s233, 3072, %s236, %s224
        $region32: #{tpu_custom_call.1} parent=27 // pred_fallthru
          _
      $region28: #{tpu_custom_call.1} parent=5 // pred_fallthru
        _
      %p239 = scmp.le.s32.totalorder 1, %s23
      %p240 = scmp.lt.s32.totalorder %s23, 4
      %p241 = pnand %p239, %p240
      %p242 = pneg %p241
      // Predicated region
      $region33: #{tpu_custom_call.1} parent=5 // pred_check
        _
      $region34: #{tpu_custom_call.1} parent=5 // pred_check_branch
        %244 = sbr.rel (%p241) target = $region36
      $region35: #{tpu_custom_call.1} parent=5 // pred_region
        %s245 = ssub.s32 %s23, 1
        %s246 = sand.u32 %s36, 1
        %s247 = scalar_lea.sflag [#allocation3], %s246
        %s248 = sand.u32 %s36, 1
        %s249 = smul.addr %s248, 192
        %s250 = scalar_lea.vmem [#allocation2], %s249
        // Predicated region
        $region37: #{tpu_custom_call.1} parent=35 // pred_check
          %p251 = pneg %p49
        $region38: #{tpu_custom_call.1} parent=35 // pred_check_branch
          %253 = sbr.rel (%p251) target = $region40
        $region39: #{tpu_custom_call.1} parent=35 // pred_region
          %254 = dma.done %s247, 3072
        $region40: #{tpu_custom_call.1} parent=35 // pred_fallthru
          _
        // Predicated region
        $region41: #{tpu_custom_call.1} parent=35 // pred_check
          %p255 = pneg %p70
        $region42: #{tpu_custom_call.1} parent=35 // pred_check_branch
          %257 = sbr.rel (%p255) target = $region44
        $region43: #{tpu_custom_call.1} parent=35 // pred_region
          %258 = dma.done [#allocation6], 98304
        $region44: #{tpu_custom_call.1} parent=35 // pred_fallthru
          _
        // Predicated region
        $region45: #{tpu_custom_call.1} parent=35 // pred_check
          %p259 = pneg %p91
        $region46: #{tpu_custom_call.1} parent=35 // pred_check_branch
          %261 = sbr.rel (%p259) target = $region48
        $region47: #{tpu_custom_call.1} parent=35 // pred_region
          %262 = dma.done [#allocation6], 64
        $region48: #{tpu_custom_call.1} parent=35 // pred_fallthru
          _
        // Predicated region
        $region49: #{tpu_custom_call.1} parent=35 // pred_check
          %p263 = pneg %p112
        $region50: #{tpu_custom_call.1} parent=35 // pred_check_branch
          %265 = sbr.rel (%p263) target = $region52
        $region51: #{tpu_custom_call.1} parent=35 // pred_region
          %266 = dma.done [#allocation9], 4096
        $region52: #{tpu_custom_call.1} parent=35 // pred_fallthru
          _
        %s267 = sand.u32 %s36, 1
        %s268 = scalar_lea.sflag [#allocation3], %s267
        %s269 = sand.u32 %s36, 1
        %s270 = smul.addr %s269, 192
        %s271 = scalar_lea.vmem [#allocation2], %s270
        %p272 = pneg %p49
        %p273 = pneg %p46
        %p274 = pneg %p70
        %p275 = pneg %p67
        %p276 = pneg %p91
        %p277 = pneg %p88
        %p278 = pneg %p112
        %p279 = pneg %p109
        %p280 = pneg %p138
        %p281 = pneg %p135
        %s282 = sand.u32 %s125, 1
        %s283 = scalar_lea.sflag [#allocation4], %s282
        %s284 = sand.u32 %s125, 1
        %s285 = smul.addr %s284, 8
        %s286 = scalar_lea.vmem [#allocation10], %s285
        %p287 = pneg %p164
        %p288 = pneg %p161
        %s289 = sand.u32 %s151, 1
        %s290 = scalar_lea.sflag [#allocation12], %s289
        %s291 = sand.u32 %s151, 1
        %s292 = smul.addr %s291, 32
        %s293 = scalar_lea.vmem [#allocation11], %s292
        %v295 = vld [vmem:[%s250] sm:$0xff]
        %v296 = vld [vmem:[%s250 + $0x8] sm:$0xff]
        %v297 = vld [vmem:[%s250 + $0x10] sm:$0xff]
        %v298 = vld [vmem:[%s250 + $0x18] sm:$0xff]
        %v299 = vld [vmem:[%s250 + $0x20] sm:$0xff]
        %v300 = vld [vmem:[%s250 + $0x28] sm:$0xff]
        %v301 = vld [vmem:[%s250 + $0x30] sm:$0xff]
        %v302 = vld [vmem:[%s250 + $0x38] sm:$0xff]
        %v303 = vld [vmem:[%s250 + $0x40] sm:$0xff]
        %v304 = vld [vmem:[%s250 + $0x48] sm:$0xff]
        %v305 = vld [vmem:[%s250 + $0x50] sm:$0xff]
        %v306 = vld [vmem:[%s250 + $0x58] sm:$0xff]
        %v307 = vld [vmem:[%s250 + $0x60] sm:$0xff]
        %v308 = vld [vmem:[%s250 + $0x68] sm:$0xff]
        %v309 = vld [vmem:[%s250 + $0x70] sm:$0xff]
        %v310 = vld [vmem:[%s250 + $0x78] sm:$0xff]
        %v311 = vld [vmem:[%s250 + $0x80] sm:$0xff]
        %v312 = vld [vmem:[%s250 + $0x88] sm:$0xff]
        %v313 = vld [vmem:[%s250 + $0x90] sm:$0xff]
        %v314 = vld [vmem:[%s250 + $0x98] sm:$0xff]
        %v315 = vld [vmem:[%s250 + $0xa0] sm:$0xff]
        %v316 = vld [vmem:[%s250 + $0xa8] sm:$0xff]
        %v317 = vld [vmem:[%s250 + $0xb0] sm:$0xff]
        %v318 = vld [vmem:[%s250 + $0xb8] sm:$0xff]
        %v319 = vpack.c.bf16 %v295, %v295
        %v320 = vpack.c.bf16 %v296, %v296
        %v321 = vpack.c.bf16 %v297, %v297
        %v322 = vpack.c.bf16 %v298, %v298
        %v323 = vpack.c.bf16 %v299, %v299
        %v324 = vpack.c.bf16 %v300, %v300
        %v325 = vpack.c.bf16 %v301, %v301
        %v326 = vpack.c.bf16 %v302, %v302
        %v327 = vpack.c.bf16 %v303, %v303
        %v328 = vpack.c.bf16 %v304, %v304
        %v329 = vpack.c.bf16 %v305, %v305
        %v330 = vpack.c.bf16 %v306, %v306
        %v331 = vpack.c.bf16 %v307, %v307
        %v332 = vpack.c.bf16 %v308, %v308
        %v333 = vpack.c.bf16 %v309, %v309
        %v334 = vpack.c.bf16 %v310, %v310
        %v335 = vpack.c.bf16 %v311, %v311
        %v336 = vpack.c.bf16 %v312, %v312
        %v337 = vpack.c.bf16 %v313, %v313
        %v338 = vpack.c.bf16 %v314, %v314
        %v339 = vpack.c.bf16 %v315, %v315
        %v340 = vpack.c.bf16 %v316, %v316
        %v341 = vpack.c.bf16 %v317, %v317
        %v342 = vpack.c.bf16 %v318, %v318
        %v343 = vld [vmem:[#allocation5] sm:$0xff]
        %v344 = vld [vmem:[#allocation5 + $0x8] sm:$0xff]
        %v345 = vld [vmem:[#allocation5 + $0x10] sm:$0xff]
        %v346 = vld [vmem:[#allocation5 + $0x18] sm:$0xff]
        %v347 = vld [vmem:[#allocation5 + $0x20] sm:$0xff]
        %v348 = vld [vmem:[#allocation5 + $0x28] sm:$0xff]
        %v349 = vld [vmem:[#allocation5 + $0x30] sm:$0xff]
        %v350 = vld [vmem:[#allocation5 + $0x38] sm:$0xff]
        %v351 = vld [vmem:[#allocation5 + $0x40] sm:$0xff]
        %v352 = vld [vmem:[#allocation5 + $0x48] sm:$0xff]
        %v353 = vld [vmem:[#allocation5 + $0x50] sm:$0xff]
        %v354 = vld [vmem:[#allocation5 + $0x58] sm:$0xff]
        %v355 = vld [vmem:[#allocation5 + $0x60] sm:$0xff]
        %v356 = vld [vmem:[#allocation5 + $0x68] sm:$0xff]
        %v357 = vld [vmem:[#allocation5 + $0x70] sm:$0xff]
        %v358 = vld [vmem:[#allocation5 + $0x78] sm:$0xff]
        %v359 = vld [vmem:[#allocation5 + $0x80] sm:$0xff]
        %v360 = vld [vmem:[#allocation5 + $0x88] sm:$0xff]
        %v361 = vld [vmem:[#allocation5 + $0x90] sm:$0xff]
        %v362 = vld [vmem:[#allocation5 + $0x98] sm:$0xff]
        %v363 = vld [vmem:[#allocation5 + $0xa0] sm:$0xff]
        %v364 = vld [vmem:[#allocation5 + $0xa8] sm:$0xff]
        %v365 = vld [vmem:[#allocation5 + $0xb0] sm:$0xff]
        %v366 = vld [vmem:[#allocation5 + $0xb8] sm:$0xff]
        %v367 = vld [vmem:[#allocation5 + $0xc0] sm:$0xff]
        %v368 = vld [vmem:[#allocation5 + $0xc8] sm:$0xff]
        %v369 = vld [vmem:[#allocation5 + $0xd0] sm:$0xff]
        %v370 = vld [vmem:[#allocation5 + $0xd8] sm:$0xff]
        %v371 = vld [vmem:[#allocation5 + $0xe0] sm:$0xff]
        %v372 = vld [vmem:[#allocation5 + $0xe8] sm:$0xff]
        %v373 = vld [vmem:[#allocation5 + $0xf0] sm:$0xff]
        %v374 = vld [vmem:[#allocation5 + $0xf8] sm:$0xff]
        %v375 = vld [vmem:[#allocation5 + $0x100] sm:$0xff]
        %v376 = vld [vmem:[#allocation5 + $0x108] sm:$0xff]
        %v377 = vld [vmem:[#allocation5 + $0x110] sm:$0xff]
        %v378 = vld [vmem:[#allocation5 + $0x118] sm:$0xff]
        %v379 = vld [vmem:[#allocation5 + $0x120] sm:$0xff]
        %v380 = vld [vmem:[#allocation5 + $0x128] sm:$0xff]
        %v381 = vld [vmem:[#allocation5 + $0x130] sm:$0xff]
        %v382 = vld [vmem:[#allocation5 + $0x138] sm:$0xff]
        %v383 = vld [vmem:[#allocation5 + $0x140] sm:$0xff]
        %v384 = vld [vmem:[#allocation5 + $0x148] sm:$0xff]
        %v385 = vld [vmem:[#allocation5 + $0x150] sm:$0xff]
        %v386 = vld [vmem:[#allocation5 + $0x158] sm:$0xff]
        %v387 = vld [vmem:[#allocation5 + $0x160] sm:$0xff]
        %v388 = vld [vmem:[#allocation5 + $0x168] sm:$0xff]
        %v389 = vld [vmem:[#allocation5 + $0x170] sm:$0xff]
        %v390 = vld [vmem:[#allocation5 + $0x178] sm:$0xff]
        %v391 = vld [vmem:[#allocation5 + $0x180] sm:$0xff]
        %v392 = vld [vmem:[#allocation5 + $0x188] sm:$0xff]
        %v393 = vld [vmem:[#allocation5 + $0x190] sm:$0xff]
        %v394 = vld [vmem:[#allocation5 + $0x198] sm:$0xff]
        %v395 = vld [vmem:[#allocation5 + $0x1a0] sm:$0xff]
        %v396 = vld [vmem:[#allocation5 + $0x1a8] sm:$0xff]
        %v397 = vld [vmem:[#allocation5 + $0x1b0] sm:$0xff]
        %v398 = vld [vmem:[#allocation5 + $0x1b8] sm:$0xff]
        %v399 = vld [vmem:[#allocation5 + $0x1c0] sm:$0xff]
        %v400 = vld [vmem:[#allocation5 + $0x1c8] sm:$0xff]
        %v401 = vld [vmem:[#allocation5 + $0x1d0] sm:$0xff]
        %v402 = vld [vmem:[#allocation5 + $0x1d8] sm:$0xff]
        %v403 = vld [vmem:[#allocation5 + $0x1e0] sm:$0xff]
        %v404 = vld [vmem:[#allocation5 + $0x1e8] sm:$0xff]
        %v405 = vld [vmem:[#allocation5 + $0x1f0] sm:$0xff]
        %v406 = vld [vmem:[#allocation5 + $0x1f8] sm:$0xff]
        %v407 = vld [vmem:[#allocation5 + $0x200] sm:$0xff]
        %v408 = vld [vmem:[#allocation5 + $0x208] sm:$0xff]
        %v409 = vld [vmem:[#allocation5 + $0x210] sm:$0xff]
        %v410 = vld [vmem:[#allocation5 + $0x218] sm:$0xff]
        %v411 = vld [vmem:[#allocation5 + $0x220] sm:$0xff]
        %v412 = vld [vmem:[#allocation5 + $0x228] sm:$0xff]
        %v413 = vld [vmem:[#allocation5 + $0x230] sm:$0xff]
        %v414 = vld [vmem:[#allocation5 + $0x238] sm:$0xff]
        %v415 = vld [vmem:[#allocation5 + $0x240] sm:$0xff]
        %v416 = vld [vmem:[#allocation5 + $0x248] sm:$0xff]
        %v417 = vld [vmem:[#allocation5 + $0x250] sm:$0xff]
        %v418 = vld [vmem:[#allocation5 + $0x258] sm:$0xff]
        %v419 = vld [vmem:[#allocation5 + $0x260] sm:$0xff]
        %v420 = vld [vmem:[#allocation5 + $0x268] sm:$0xff]
        %v421 = vld [vmem:[#allocation5 + $0x270] sm:$0xff]
        %v422 = vld [vmem:[#allocation5 + $0x278] sm:$0xff]
        %v423 = vld [vmem:[#allocation5 + $0x280] sm:$0xff]
        %v424 = vld [vmem:[#allocation5 + $0x288] sm:$0xff]
        %v425 = vld [vmem:[#allocation5 + $0x290] sm:$0xff]
        %v426 = vld [vmem:[#allocation5 + $0x298] sm:$0xff]
        %v427 = vld [vmem:[#allocation5 + $0x2a0] sm:$0xff]
        %v428 = vld [vmem:[#allocation5 + $0x2a8] sm:$0xff]
        %v429 = vld [vmem:[#allocation5 + $0x2b0] sm:$0xff]
        %v430 = vld [vmem:[#allocation5 + $0x2b8] sm:$0xff]
        %v431 = vld [vmem:[#allocation5 + $0x2c0] sm:$0xff]
        %v432 = vld [vmem:[#allocation5 + $0x2c8] sm:$0xff]
        %v433 = vld [vmem:[#allocation5 + $0x2d0] sm:$0xff]
        %v434 = vld [vmem:[#allocation5 + $0x2d8] sm:$0xff]
        %v435 = vld [vmem:[#allocation5 + $0x2e0] sm:$0xff]
        %v436 = vld [vmem:[#allocation5 + $0x2e8] sm:$0xff]
        %v437 = vld [vmem:[#allocation5 + $0x2f0] sm:$0xff]
        %v438 = vld [vmem:[#allocation5 + $0x2f8] sm:$0xff]
        %v439 = vld [vmem:[#allocation5 + $0x300] sm:$0xff]
        %v440 = vld [vmem:[#allocation5 + $0x308] sm:$0xff]
        %v441 = vld [vmem:[#allocation5 + $0x310] sm:$0xff]
        %v442 = vld [vmem:[#allocation5 + $0x318] sm:$0xff]
        %v443 = vld [vmem:[#allocation5 + $0x320] sm:$0xff]
        %v444 = vld [vmem:[#allocation5 + $0x328] sm:$0xff]
        %v445 = vld [vmem:[#allocation5 + $0x330] sm:$0xff]
        %v446 = vld [vmem:[#allocation5 + $0x338] sm:$0xff]
        %v447 = vld [vmem:[#allocation5 + $0x340] sm:$0xff]
        %v448 = vld [vmem:[#allocation5 + $0x348] sm:$0xff]
        %v449 = vld [vmem:[#allocation5 + $0x350] sm:$0xff]
        %v450 = vld [vmem:[#allocation5 + $0x358] sm:$0xff]
        %v451 = vld [vmem:[#allocation5 + $0x360] sm:$0xff]
        %v452 = vld [vmem:[#allocation5 + $0x368] sm:$0xff]
        %v453 = vld [vmem:[#allocation5 + $0x370] sm:$0xff]
        %v454 = vld [vmem:[#allocation5 + $0x378] sm:$0xff]
        %v455 = vld [vmem:[#allocation5 + $0x380] sm:$0xff]
        %v456 = vld [vmem:[#allocation5 + $0x388] sm:$0xff]
        %v457 = vld [vmem:[#allocation5 + $0x390] sm:$0xff]
        %v458 = vld [vmem:[#allocation5 + $0x398] sm:$0xff]
        %v459 = vld [vmem:[#allocation5 + $0x3a0] sm:$0xff]
        %v460 = vld [vmem:[#allocation5 + $0x3a8] sm:$0xff]
        %v461 = vld [vmem:[#allocation5 + $0x3b0] sm:$0xff]
        %v462 = vld [vmem:[#allocation5 + $0x3b8] sm:$0xff]
        %v463 = vld [vmem:[#allocation5 + $0x3c0] sm:$0xff]
        %v464 = vld [vmem:[#allocation5 + $0x3c8] sm:$0xff]
        %v465 = vld [vmem:[#allocation5 + $0x3d0] sm:$0xff]
        %v466 = vld [vmem:[#allocation5 + $0x3d8] sm:$0xff]
        %v467 = vld [vmem:[#allocation5 + $0x3e0] sm:$0xff]
        %v468 = vld [vmem:[#allocation5 + $0x3e8] sm:$0xff]
        %v469 = vld [vmem:[#allocation5 + $0x3f0] sm:$0xff]
        %v470 = vld [vmem:[#allocation5 + $0x3f8] sm:$0xff]
        %v471 = vld [vmem:[#allocation5 + $0x400] sm:$0xff]
        %v472 = vld [vmem:[#allocation5 + $0x408] sm:$0xff]
        %v473 = vld [vmem:[#allocation5 + $0x410] sm:$0xff]
        %v474 = vld [vmem:[#allocation5 + $0x418] sm:$0xff]
        %v475 = vld [vmem:[#allocation5 + $0x420] sm:$0xff]
        %v476 = vld [vmem:[#allocation5 + $0x428] sm:$0xff]
        %v477 = vld [vmem:[#allocation5 + $0x430] sm:$0xff]
        %v478 = vld [vmem:[#allocation5 + $0x438] sm:$0xff]
        %v479 = vld [vmem:[#allocation5 + $0x440] sm:$0xff]
        %v480 = vld [vmem:[#allocation5 + $0x448] sm:$0xff]
        %v481 = vld [vmem:[#allocation5 + $0x450] sm:$0xff]
        %v482 = vld [vmem:[#allocation5 + $0x458] sm:$0xff]
        %v483 = vld [vmem:[#allocation5 + $0x460] sm:$0xff]
        %v484 = vld [vmem:[#allocation5 + $0x468] sm:$0xff]
        %v485 = vld [vmem:[#allocation5 + $0x470] sm:$0xff]
        %v486 = vld [vmem:[#allocation5 + $0x478] sm:$0xff]
        %v487 = vld [vmem:[#allocation5 + $0x480] sm:$0xff]
        %v488 = vld [vmem:[#allocation5 + $0x488] sm:$0xff]
        %v489 = vld [vmem:[#allocation5 + $0x490] sm:$0xff]
        %v490 = vld [vmem:[#allocation5 + $0x498] sm:$0xff]
        %v491 = vld [vmem:[#allocation5 + $0x4a0] sm:$0xff]
        %v492 = vld [vmem:[#allocation5 + $0x4a8] sm:$0xff]
        %v493 = vld [vmem:[#allocation5 + $0x4b0] sm:$0xff]
        %v494 = vld [vmem:[#allocation5 + $0x4b8] sm:$0xff]
        %v495 = vld [vmem:[#allocation5 + $0x4c0] sm:$0xff]
        %v496 = vld [vmem:[#allocation5 + $0x4c8] sm:$0xff]
        %v497 = vld [vmem:[#allocation5 + $0x4d0] sm:$0xff]
        %v498 = vld [vmem:[#allocation5 + $0x4d8] sm:$0xff]
        %v499 = vld [vmem:[#allocation5 + $0x4e0] sm:$0xff]
        %v500 = vld [vmem:[#allocation5 + $0x4e8] sm:$0xff]
        %v501 = vld [vmem:[#allocation5 + $0x4f0] sm:$0xff]
        %v502 = vld [vmem:[#allocation5 + $0x4f8] sm:$0xff]
        %v503 = vld [vmem:[#allocation5 + $0x500] sm:$0xff]
        %v504 = vld [vmem:[#allocation5 + $0x508] sm:$0xff]
        %v505 = vld [vmem:[#allocation5 + $0x510] sm:$0xff]
        %v506 = vld [vmem:[#allocation5 + $0x518] sm:$0xff]
        %v507 = vld [vmem:[#allocation5 + $0x520] sm:$0xff]
        %v508 = vld [vmem:[#allocation5 + $0x528] sm:$0xff]
        %v509 = vld [vmem:[#allocation5 + $0x530] sm:$0xff]
        %v510 = vld [vmem:[#allocation5 + $0x538] sm:$0xff]
        %v511 = vld [vmem:[#allocation5 + $0x540] sm:$0xff]
        %v512 = vld [vmem:[#allocation5 + $0x548] sm:$0xff]
        %v513 = vld [vmem:[#allocation5 + $0x550] sm:$0xff]
        %v514 = vld [vmem:[#allocation5 + $0x558] sm:$0xff]
        %v515 = vld [vmem:[#allocation5 + $0x560] sm:$0xff]
        %v516 = vld [vmem:[#allocation5 + $0x568] sm:$0xff]
        %v517 = vld [vmem:[#allocation5 + $0x570] sm:$0xff]
        %v518 = vld [vmem:[#allocation5 + $0x578] sm:$0xff]
        %v519 = vld [vmem:[#allocation5 + $0x580] sm:$0xff]
        %v520 = vld [vmem:[#allocation5 + $0x588] sm:$0xff]
        %v521 = vld [vmem:[#allocation5 + $0x590] sm:$0xff]
        %v522 = vld [vmem:[#allocation5 + $0x598] sm:$0xff]
        %v523 = vld [vmem:[#allocation5 + $0x5a0] sm:$0xff]
        %v524 = vld [vmem:[#allocation5 + $0x5a8] sm:$0xff]
        %v525 = vld [vmem:[#allocation5 + $0x5b0] sm:$0xff]
        %v526 = vld [vmem:[#allocation5 + $0x5b8] sm:$0xff]
        %v527 = vld [vmem:[#allocation5 + $0x5c0] sm:$0xff]
        %v528 = vld [vmem:[#allocation5 + $0x5c8] sm:$0xff]
        %v529 = vld [vmem:[#allocation5 + $0x5d0] sm:$0xff]
        %v530 = vld [vmem:[#allocation5 + $0x5d8] sm:$0xff]
        %v531 = vld [vmem:[#allocation5 + $0x5e0] sm:$0xff]
        %v532 = vld [vmem:[#allocation5 + $0x5e8] sm:$0xff]
        %v533 = vld [vmem:[#allocation5 + $0x5f0] sm:$0xff]
        %v534 = vld [vmem:[#allocation5 + $0x5f8] sm:$0xff]
        %v535 = vld [vmem:[#allocation5 + $0x600] sm:$0xff]
        %v536 = vld [vmem:[#allocation5 + $0x608] sm:$0xff]
        %v537 = vld [vmem:[#allocation5 + $0x610] sm:$0xff]
        %v538 = vld [vmem:[#allocation5 + $0x618] sm:$0xff]
        %v539 = vld [vmem:[#allocation5 + $0x620] sm:$0xff]
        %v540 = vld [vmem:[#allocation5 + $0x628] sm:$0xff]
        %v541 = vld [vmem:[#allocation5 + $0x630] sm:$0xff]
        %v542 = vld [vmem:[#allocation5 + $0x638] sm:$0xff]
        %v543 = vld [vmem:[#allocation5 + $0x640] sm:$0xff]
        %v544 = vld [vmem:[#allocation5 + $0x648] sm:$0xff]
        %v545 = vld [vmem:[#allocation5 + $0x650] sm:$0xff]
        %v546 = vld [vmem:[#allocation5 + $0x658] sm:$0xff]
        %v547 = vld [vmem:[#allocation5 + $0x660] sm:$0xff]
        %v548 = vld [vmem:[#allocation5 + $0x668] sm:$0xff]
        %v549 = vld [vmem:[#allocation5 + $0x670] sm:$0xff]
        %v550 = vld [vmem:[#allocation5 + $0x678] sm:$0xff]
        %v551 = vld [vmem:[#allocation5 + $0x680] sm:$0xff]
        %v552 = vld [vmem:[#allocation5 + $0x688] sm:$0xff]
        %v553 = vld [vmem:[#allocation5 + $0x690] sm:$0xff]
        %v554 = vld [vmem:[#allocation5 + $0x698] sm:$0xff]
        %v555 = vld [vmem:[#allocation5 + $0x6a0] sm:$0xff]
        %v556 = vld [vmem:[#allocation5 + $0x6a8] sm:$0xff]
        %v557 = vld [vmem:[#allocation5 + $0x6b0] sm:$0xff]
        %v558 = vld [vmem:[#allocation5 + $0x6b8] sm:$0xff]
        %v559 = vld [vmem:[#allocation5 + $0x6c0] sm:$0xff]
        %v560 = vld [vmem:[#allocation5 + $0x6c8] sm:$0xff]
        %v561 = vld [vmem:[#allocation5 + $0x6d0] sm:$0xff]
        %v562 = vld [vmem:[#allocation5 + $0x6d8] sm:$0xff]
        %v563 = vld [vmem:[#allocation5 + $0x6e0] sm:$0xff]
        %v564 = vld [vmem:[#allocation5 + $0x6e8] sm:$0xff]
        %v565 = vld [vmem:[#allocation5 + $0x6f0] sm:$0xff]
        %v566 = vld [vmem:[#allocation5 + $0x6f8] sm:$0xff]
        %v567 = vld [vmem:[#allocation5 + $0x700] sm:$0xff]
        %v568 = vld [vmem:[#allocation5 + $0x708] sm:$0xff]
        %v569 = vld [vmem:[#allocation5 + $0x710] sm:$0xff]
        %v570 = vld [vmem:[#allocation5 + $0x718] sm:$0xff]
        %v571 = vld [vmem:[#allocation5 + $0x720] sm:$0xff]
        %v572 = vld [vmem:[#allocation5 + $0x728] sm:$0xff]
        %v573 = vld [vmem:[#allocation5 + $0x730] sm:$0xff]
        %v574 = vld [vmem:[#allocation5 + $0x738] sm:$0xff]
        %v575 = vld [vmem:[#allocation5 + $0x740] sm:$0xff]
        %v576 = vld [vmem:[#allocation5 + $0x748] sm:$0xff]
        %v577 = vld [vmem:[#allocation5 + $0x750] sm:$0xff]
        %v578 = vld [vmem:[#allocation5 + $0x758] sm:$0xff]
        %v579 = vld [vmem:[#allocation5 + $0x760] sm:$0xff]
        %v580 = vld [vmem:[#allocation5 + $0x768] sm:$0xff]
        %v581 = vld [vmem:[#allocation5 + $0x770] sm:$0xff]
        %v582 = vld [vmem:[#allocation5 + $0x778] sm:$0xff]
        %v583 = vld [vmem:[#allocation5 + $0x780] sm:$0xff]
        %v584 = vld [vmem:[#allocation5 + $0x788] sm:$0xff]
        %v585 = vld [vmem:[#allocation5 + $0x790] sm:$0xff]
        %v586 = vld [vmem:[#allocation5 + $0x798] sm:$0xff]
        %v587 = vld [vmem:[#allocation5 + $0x7a0] sm:$0xff]
        %v588 = vld [vmem:[#allocation5 + $0x7a8] sm:$0xff]
        %v589 = vld [vmem:[#allocation5 + $0x7b0] sm:$0xff]
        %v590 = vld [vmem:[#allocation5 + $0x7b8] sm:$0xff]
        %v591 = vld [vmem:[#allocation5 + $0x7c0] sm:$0xff]
        %v592 = vld [vmem:[#allocation5 + $0x7c8] sm:$0xff]
        %v593 = vld [vmem:[#allocation5 + $0x7d0] sm:$0xff]
        %v594 = vld [vmem:[#allocation5 + $0x7d8] sm:$0xff]
        %v595 = vld [vmem:[#allocation5 + $0x7e0] sm:$0xff]
        %v596 = vld [vmem:[#allocation5 + $0x7e8] sm:$0xff]
        %v597 = vld [vmem:[#allocation5 + $0x7f0] sm:$0xff]
        %v598 = vld [vmem:[#allocation5 + $0x7f8] sm:$0xff]
        %v599 = vld [vmem:[#allocation5 + $0x800] sm:$0xff]
        %v600 = vld [vmem:[#allocation5 + $0x808] sm:$0xff]
        %v601 = vld [vmem:[#allocation5 + $0x810] sm:$0xff]
        %v602 = vld [vmem:[#allocation5 + $0x818] sm:$0xff]
        %v603 = vld [vmem:[#allocation5 + $0x820] sm:$0xff]
        %v604 = vld [vmem:[#allocation5 + $0x828] sm:$0xff]
        %v605 = vld [vmem:[#allocation5 + $0x830] sm:$0xff]
        %v606 = vld [vmem:[#allocation5 + $0x838] sm:$0xff]
        %v607 = vld [vmem:[#allocation5 + $0x840] sm:$0xff]
        %v608 = vld [vmem:[#allocation5 + $0x848] sm:$0xff]
        %v609 = vld [vmem:[#allocation5 + $0x850] sm:$0xff]
        %v610 = vld [vmem:[#allocation5 + $0x858] sm:$0xff]
        %v611 = vld [vmem:[#allocation5 + $0x860] sm:$0xff]
        %v612 = vld [vmem:[#allocation5 + $0x868] sm:$0xff]
        %v613 = vld [vmem:[#allocation5 + $0x870] sm:$0xff]
        %v614 = vld [vmem:[#allocation5 + $0x878] sm:$0xff]
        %v615 = vld [vmem:[#allocation5 + $0x880] sm:$0xff]
        %v616 = vld [vmem:[#allocation5 + $0x888] sm:$0xff]
        %v617 = vld [vmem:[#allocation5 + $0x890] sm:$0xff]
        %v618 = vld [vmem:[#allocation5 + $0x898] sm:$0xff]
        %v619 = vld [vmem:[#allocation5 + $0x8a0] sm:$0xff]
        %v620 = vld [vmem:[#allocation5 + $0x8a8] sm:$0xff]
        %v621 = vld [vmem:[#allocation5 + $0x8b0] sm:$0xff]
        %v622 = vld [vmem:[#allocation5 + $0x8b8] sm:$0xff]
        %v623 = vld [vmem:[#allocation5 + $0x8c0] sm:$0xff]
        %v624 = vld [vmem:[#allocation5 + $0x8c8] sm:$0xff]
        %v625 = vld [vmem:[#allocation5 + $0x8d0] sm:$0xff]
        %v626 = vld [vmem:[#allocation5 + $0x8d8] sm:$0xff]
        %v627 = vld [vmem:[#allocation5 + $0x8e0] sm:$0xff]
        %v628 = vld [vmem:[#allocation5 + $0x8e8] sm:$0xff]
        %v629 = vld [vmem:[#allocation5 + $0x8f0] sm:$0xff]
        %v630 = vld [vmem:[#allocation5 + $0x8f8] sm:$0xff]
        %v631 = vld [vmem:[#allocation5 + $0x900] sm:$0xff]
        %v632 = vld [vmem:[#allocation5 + $0x908] sm:$0xff]
        %v633 = vld [vmem:[#allocation5 + $0x910] sm:$0xff]
        %v634 = vld [vmem:[#allocation5 + $0x918] sm:$0xff]
        %v635 = vld [vmem:[#allocation5 + $0x920] sm:$0xff]
        %v636 = vld [vmem:[#allocation5 + $0x928] sm:$0xff]
        %v637 = vld [vmem:[#allocation5 + $0x930] sm:$0xff]
        %v638 = vld [vmem:[#allocation5 + $0x938] sm:$0xff]
        %v639 = vld [vmem:[#allocation5 + $0x940] sm:$0xff]
        %v640 = vld [vmem:[#allocation5 + $0x948] sm:$0xff]
        %v641 = vld [vmem:[#allocation5 + $0x950] sm:$0xff]
        %v642 = vld [vmem:[#allocation5 + $0x958] sm:$0xff]
        %v643 = vld [vmem:[#allocation5 + $0x960] sm:$0xff]
        %v644 = vld [vmem:[#allocation5 + $0x968] sm:$0xff]
        %v645 = vld [vmem:[#allocation5 + $0x970] sm:$0xff]
        %v646 = vld [vmem:[#allocation5 + $0x978] sm:$0xff]
        %v647 = vld [vmem:[#allocation5 + $0x980] sm:$0xff]
        %v648 = vld [vmem:[#allocation5 + $0x988] sm:$0xff]
        %v649 = vld [vmem:[#allocation5 + $0x990] sm:$0xff]
        %v650 = vld [vmem:[#allocation5 + $0x998] sm:$0xff]
        %v651 = vld [vmem:[#allocation5 + $0x9a0] sm:$0xff]
        %v652 = vld [vmem:[#allocation5 + $0x9a8] sm:$0xff]
        %v653 = vld [vmem:[#allocation5 + $0x9b0] sm:$0xff]
        %v654 = vld [vmem:[#allocation5 + $0x9b8] sm:$0xff]
        %v655 = vld [vmem:[#allocation5 + $0x9c0] sm:$0xff]
        %v656 = vld [vmem:[#allocation5 + $0x9c8] sm:$0xff]
        %v657 = vld [vmem:[#allocation5 + $0x9d0] sm:$0xff]
        %v658 = vld [vmem:[#allocation5 + $0x9d8] sm:$0xff]
        %v659 = vld [vmem:[#allocation5 + $0x9e0] sm:$0xff]
        %v660 = vld [vmem:[#allocation5 + $0x9e8] sm:$0xff]
        %v661 = vld [vmem:[#allocation5 + $0x9f0] sm:$0xff]
        %v662 = vld [vmem:[#allocation5 + $0x9f8] sm:$0xff]
        %v663 = vld [vmem:[#allocation5 + $0xa00] sm:$0xff]
        %v664 = vld [vmem:[#allocation5 + $0xa08] sm:$0xff]
        %v665 = vld [vmem:[#allocation5 + $0xa10] sm:$0xff]
        %v666 = vld [vmem:[#allocation5 + $0xa18] sm:$0xff]
        %v667 = vld [vmem:[#allocation5 + $0xa20] sm:$0xff]
        %v668 = vld [vmem:[#allocation5 + $0xa28] sm:$0xff]
        %v669 = vld [vmem:[#allocation5 + $0xa30] sm:$0xff]
        %v670 = vld [vmem:[#allocation5 + $0xa38] sm:$0xff]
        %v671 = vld [vmem:[#allocation5 + $0xa40] sm:$0xff]
        %v672 = vld [vmem:[#allocation5 + $0xa48] sm:$0xff]
        %v673 = vld [vmem:[#allocation5 + $0xa50] sm:$0xff]
        %v674 = vld [vmem:[#allocation5 + $0xa58] sm:$0xff]
        %v675 = vld [vmem:[#allocation5 + $0xa60] sm:$0xff]
        %v676 = vld [vmem:[#allocation5 + $0xa68] sm:$0xff]
        %v677 = vld [vmem:[#allocation5 + $0xa70] sm:$0xff]
        %v678 = vld [vmem:[#allocation5 + $0xa78] sm:$0xff]
        %v679 = vld [vmem:[#allocation5 + $0xa80] sm:$0xff]
        %v680 = vld [vmem:[#allocation5 + $0xa88] sm:$0xff]
        %v681 = vld [vmem:[#allocation5 + $0xa90] sm:$0xff]
        %v682 = vld [vmem:[#allocation5 + $0xa98] sm:$0xff]
        %v683 = vld [vmem:[#allocation5 + $0xaa0] sm:$0xff]
        %v684 = vld [vmem:[#allocation5 + $0xaa8] sm:$0xff]
        %v685 = vld [vmem:[#allocation5 + $0xab0] sm:$0xff]
        %v686 = vld [vmem:[#allocation5 + $0xab8] sm:$0xff]
        %v687 = vld [vmem:[#allocation5 + $0xac0] sm:$0xff]
        %v688 = vld [vmem:[#allocation5 + $0xac8] sm:$0xff]
        %v689 = vld [vmem:[#allocation5 + $0xad0] sm:$0xff]
        %v690 = vld [vmem:[#allocation5 + $0xad8] sm:$0xff]
        %v691 = vld [vmem:[#allocation5 + $0xae0] sm:$0xff]
        %v692 = vld [vmem:[#allocation5 + $0xae8] sm:$0xff]
        %v693 = vld [vmem:[#allocation5 + $0xaf0] sm:$0xff]
        %v694 = vld [vmem:[#allocation5 + $0xaf8] sm:$0xff]
        %v695 = vld [vmem:[#allocation5 + $0xb00] sm:$0xff]
        %v696 = vld [vmem:[#allocation5 + $0xb08] sm:$0xff]
        %v697 = vld [vmem:[#allocation5 + $0xb10] sm:$0xff]
        %v698 = vld [vmem:[#allocation5 + $0xb18] sm:$0xff]
        %v699 = vld [vmem:[#allocation5 + $0xb20] sm:$0xff]
        %v700 = vld [vmem:[#allocation5 + $0xb28] sm:$0xff]
        %v701 = vld [vmem:[#allocation5 + $0xb30] sm:$0xff]
        %v702 = vld [vmem:[#allocation5 + $0xb38] sm:$0xff]
        %v703 = vld [vmem:[#allocation5 + $0xb40] sm:$0xff]
        %v704 = vld [vmem:[#allocation5 + $0xb48] sm:$0xff]
        %v705 = vld [vmem:[#allocation5 + $0xb50] sm:$0xff]
        %v706 = vld [vmem:[#allocation5 + $0xb58] sm:$0xff]
        %v707 = vld [vmem:[#allocation5 + $0xb60] sm:$0xff]
        %v708 = vld [vmem:[#allocation5 + $0xb68] sm:$0xff]
        %v709 = vld [vmem:[#allocation5 + $0xb70] sm:$0xff]
        %v710 = vld [vmem:[#allocation5 + $0xb78] sm:$0xff]
        %v711 = vld [vmem:[#allocation5 + $0xb80] sm:$0xff]
        %v712 = vld [vmem:[#allocation5 + $0xb88] sm:$0xff]
        %v713 = vld [vmem:[#allocation5 + $0xb90] sm:$0xff]
        %v714 = vld [vmem:[#allocation5 + $0xb98] sm:$0xff]
        %v715 = vld [vmem:[#allocation5 + $0xba0] sm:$0xff]
        %v716 = vld [vmem:[#allocation5 + $0xba8] sm:$0xff]
        %v717 = vld [vmem:[#allocation5 + $0xbb0] sm:$0xff]
        %v718 = vld [vmem:[#allocation5 + $0xbb8] sm:$0xff]
        %v719 = vld [vmem:[#allocation5 + $0xbc0] sm:$0xff]
        %v720 = vld [vmem:[#allocation5 + $0xbc8] sm:$0xff]
        %v721 = vld [vmem:[#allocation5 + $0xbd0] sm:$0xff]
        %v722 = vld [vmem:[#allocation5 + $0xbd8] sm:$0xff]
        %v723 = vld [vmem:[#allocation5 + $0xbe0] sm:$0xff]
        %v724 = vld [vmem:[#allocation5 + $0xbe8] sm:$0xff]
        %v725 = vld [vmem:[#allocation5 + $0xbf0] sm:$0xff]
        %v726 = vld [vmem:[#allocation5 + $0xbf8] sm:$0xff]
        %v727 = vld [vmem:[#allocation5 + $0xc00] sm:$0xff]
        %v728 = vld [vmem:[#allocation5 + $0xc08] sm:$0xff]
        %v729 = vld [vmem:[#allocation5 + $0xc10] sm:$0xff]
        %v730 = vld [vmem:[#allocation5 + $0xc18] sm:$0xff]
        %v731 = vld [vmem:[#allocation5 + $0xc20] sm:$0xff]
        %v732 = vld [vmem:[#allocation5 + $0xc28] sm:$0xff]
        %v733 = vld [vmem:[#allocation5 + $0xc30] sm:$0xff]
        %v734 = vld [vmem:[#allocation5 + $0xc38] sm:$0xff]
        %v735 = vld [vmem:[#allocation5 + $0xc40] sm:$0xff]
        %v736 = vld [vmem:[#allocation5 + $0xc48] sm:$0xff]
        %v737 = vld [vmem:[#allocation5 + $0xc50] sm:$0xff]
        %v738 = vld [vmem:[#allocation5 + $0xc58] sm:$0xff]
        %v739 = vld [vmem:[#allocation5 + $0xc60] sm:$0xff]
        %v740 = vld [vmem:[#allocation5 + $0xc68] sm:$0xff]
        %v741 = vld [vmem:[#allocation5 + $0xc70] sm:$0xff]
        %v742 = vld [vmem:[#allocation5 + $0xc78] sm:$0xff]
        %v743 = vld [vmem:[#allocation5 + $0xc80] sm:$0xff]
        %v744 = vld [vmem:[#allocation5 + $0xc88] sm:$0xff]
        %v745 = vld [vmem:[#allocation5 + $0xc90] sm:$0xff]
        %v746 = vld [vmem:[#allocation5 + $0xc98] sm:$0xff]
        %v747 = vld [vmem:[#allocation5 + $0xca0] sm:$0xff]
        %v748 = vld [vmem:[#allocation5 + $0xca8] sm:$0xff]
        %v749 = vld [vmem:[#allocation5 + $0xcb0] sm:$0xff]
        %v750 = vld [vmem:[#allocation5 + $0xcb8] sm:$0xff]
        %v751 = vld [vmem:[#allocation5 + $0xcc0] sm:$0xff]
        %v752 = vld [vmem:[#allocation5 + $0xcc8] sm:$0xff]
        %v753 = vld [vmem:[#allocation5 + $0xcd0] sm:$0xff]
        %v754 = vld [vmem:[#allocation5 + $0xcd8] sm:$0xff]
        %v755 = vld [vmem:[#allocation5 + $0xce0] sm:$0xff]
        %v756 = vld [vmem:[#allocation5 + $0xce8] sm:$0xff]
        %v757 = vld [vmem:[#allocation5 + $0xcf0] sm:$0xff]
        %v758 = vld [vmem:[#allocation5 + $0xcf8] sm:$0xff]
        %v759 = vld [vmem:[#allocation5 + $0xd00] sm:$0xff]
        %v760 = vld [vmem:[#allocation5 + $0xd08] sm:$0xff]
        %v761 = vld [vmem:[#allocation5 + $0xd10] sm:$0xff]
        %v762 = vld [vmem:[#allocation5 + $0xd18] sm:$0xff]
        %v763 = vld [vmem:[#allocation5 + $0xd20] sm:$0xff]
        %v764 = vld [vmem:[#allocation5 + $0xd28] sm:$0xff]
        %v765 = vld [vmem:[#allocation5 + $0xd30] sm:$0xff]
        %v766 = vld [vmem:[#allocation5 + $0xd38] sm:$0xff]
        %v767 = vld [vmem:[#allocation5 + $0xd40] sm:$0xff]
        %v768 = vld [vmem:[#allocation5 + $0xd48] sm:$0xff]
        %v769 = vld [vmem:[#allocation5 + $0xd50] sm:$0xff]
        %v770 = vld [vmem:[#allocation5 + $0xd58] sm:$0xff]
        %v771 = vld [vmem:[#allocation5 + $0xd60] sm:$0xff]
        %v772 = vld [vmem:[#allocation5 + $0xd68] sm:$0xff]
        %v773 = vld [vmem:[#allocation5 + $0xd70] sm:$0xff]
        %v774 = vld [vmem:[#allocation5 + $0xd78] sm:$0xff]
        %v775 = vld [vmem:[#allocation5 + $0xd80] sm:$0xff]
        %v776 = vld [vmem:[#allocation5 + $0xd88] sm:$0xff]
        %v777 = vld [vmem:[#allocation5 + $0xd90] sm:$0xff]
        %v778 = vld [vmem:[#allocation5 + $0xd98] sm:$0xff]
        %v779 = vld [vmem:[#allocation5 + $0xda0] sm:$0xff]
        %v780 = vld [vmem:[#allocation5 + $0xda8] sm:$0xff]
        %v781 = vld [vmem:[#allocation5 + $0xdb0] sm:$0xff]
        %v782 = vld [vmem:[#allocation5 + $0xdb8] sm:$0xff]
        %v783 = vld [vmem:[#allocation5 + $0xdc0] sm:$0xff]
        %v784 = vld [vmem:[#allocation5 + $0xdc8] sm:$0xff]
        %v785 = vld [vmem:[#allocation5 + $0xdd0] sm:$0xff]
        %v786 = vld [vmem:[#allocation5 + $0xdd8] sm:$0xff]
        %v787 = vld [vmem:[#allocation5 + $0xde0] sm:$0xff]
        %v788 = vld [vmem:[#allocation5 + $0xde8] sm:$0xff]
        %v789 = vld [vmem:[#allocation5 + $0xdf0] sm:$0xff]
        %v790 = vld [vmem:[#allocation5 + $0xdf8] sm:$0xff]
        %v791 = vld [vmem:[#allocation5 + $0xe00] sm:$0xff]
        %v792 = vld [vmem:[#allocation5 + $0xe08] sm:$0xff]
        %v793 = vld [vmem:[#allocation5 + $0xe10] sm:$0xff]
        %v794 = vld [vmem:[#allocation5 + $0xe18] sm:$0xff]
        %v795 = vld [vmem:[#allocation5 + $0xe20] sm:$0xff]
        %v796 = vld [vmem:[#allocation5 + $0xe28] sm:$0xff]
        %v797 = vld [vmem:[#allocation5 + $0xe30] sm:$0xff]
        %v798 = vld [vmem:[#allocation5 + $0xe38] sm:$0xff]
        %v799 = vld [vmem:[#allocation5 + $0xe40] sm:$0xff]
        %v800 = vld [vmem:[#allocation5 + $0xe48] sm:$0xff]
        %v801 = vld [vmem:[#allocation5 + $0xe50] sm:$0xff]
        %v802 = vld [vmem:[#allocation5 + $0xe58] sm:$0xff]
        %v803 = vld [vmem:[#allocation5 + $0xe60] sm:$0xff]
        %v804 = vld [vmem:[#allocation5 + $0xe68] sm:$0xff]
        %v805 = vld [vmem:[#allocation5 + $0xe70] sm:$0xff]
        %v806 = vld [vmem:[#allocation5 + $0xe78] sm:$0xff]
        %v807 = vld [vmem:[#allocation5 + $0xe80] sm:$0xff]
        %v808 = vld [vmem:[#allocation5 + $0xe88] sm:$0xff]
        %v809 = vld [vmem:[#allocation5 + $0xe90] sm:$0xff]
        %v810 = vld [vmem:[#allocation5 + $0xe98] sm:$0xff]
        %v811 = vld [vmem:[#allocation5 + $0xea0] sm:$0xff]
        %v812 = vld [vmem:[#allocation5 + $0xea8] sm:$0xff]
        %v813 = vld [vmem:[#allocation5 + $0xeb0] sm:$0xff]
        %v814 = vld [vmem:[#allocation5 + $0xeb8] sm:$0xff]
        %v815 = vld [vmem:[#allocation5 + $0xec0] sm:$0xff]
        %v816 = vld [vmem:[#allocation5 + $0xec8] sm:$0xff]
        %v817 = vld [vmem:[#allocation5 + $0xed0] sm:$0xff]
        %v818 = vld [vmem:[#allocation5 + $0xed8] sm:$0xff]
        %v819 = vld [vmem:[#allocation5 + $0xee0] sm:$0xff]
        %v820 = vld [vmem:[#allocation5 + $0xee8] sm:$0xff]
        %v821 = vld [vmem:[#allocation5 + $0xef0] sm:$0xff]
        %v822 = vld [vmem:[#allocation5 + $0xef8] sm:$0xff]
        %v823 = vld [vmem:[#allocation5 + $0xf00] sm:$0xff]
        %v824 = vld [vmem:[#allocation5 + $0xf08] sm:$0xff]
        %v825 = vld [vmem:[#allocation5 + $0xf10] sm:$0xff]
        %v826 = vld [vmem:[#allocation5 + $0xf18] sm:$0xff]
        %v827 = vld [vmem:[#allocation5 + $0xf20] sm:$0xff]
        %v828 = vld [vmem:[#allocation5 + $0xf28] sm:$0xff]
        %v829 = vld [vmem:[#allocation5 + $0xf30] sm:$0xff]
        %v830 = vld [vmem:[#allocation5 + $0xf38] sm:$0xff]
        %v831 = vld [vmem:[#allocation5 + $0xf40] sm:$0xff]
        %v832 = vld [vmem:[#allocation5 + $0xf48] sm:$0xff]
        %v833 = vld [vmem:[#allocation5 + $0xf50] sm:$0xff]
        %v834 = vld [vmem:[#allocation5 + $0xf58] sm:$0xff]
        %v835 = vld [vmem:[#allocation5 + $0xf60] sm:$0xff]
        %v836 = vld [vmem:[#allocation5 + $0xf68] sm:$0xff]
        %v837 = vld [vmem:[#allocation5 + $0xf70] sm:$0xff]
        %v838 = vld [vmem:[#allocation5 + $0xf78] sm:$0xff]
        %v839 = vld [vmem:[#allocation5 + $0xf80] sm:$0xff]
        %v840 = vld [vmem:[#allocation5 + $0xf88] sm:$0xff]
        %v841 = vld [vmem:[#allocation5 + $0xf90] sm:$0xff]
        %v842 = vld [vmem:[#allocation5 + $0xf98] sm:$0xff]
        %v843 = vld [vmem:[#allocation5 + $0xfa0] sm:$0xff]
        %v844 = vld [vmem:[#allocation5 + $0xfa8] sm:$0xff]
        %v845 = vld [vmem:[#allocation5 + $0xfb0] sm:$0xff]
        %v846 = vld [vmem:[#allocation5 + $0xfb8] sm:$0xff]
        %v847 = vld [vmem:[#allocation5 + $0xfc0] sm:$0xff]
        %v848 = vld [vmem:[#allocation5 + $0xfc8] sm:$0xff]
        %v849 = vld [vmem:[#allocation5 + $0xfd0] sm:$0xff]
        %v850 = vld [vmem:[#allocation5 + $0xfd8] sm:$0xff]
        %v851 = vld [vmem:[#allocation5 + $0xfe0] sm:$0xff]
        %v852 = vld [vmem:[#allocation5 + $0xfe8] sm:$0xff]
        %v853 = vld [vmem:[#allocation5 + $0xff0] sm:$0xff]
        %v854 = vld [vmem:[#allocation5 + $0xff8] sm:$0xff]
        %v855 = vld [vmem:[#allocation5 + $0x1000] sm:$0xff]
        %v856 = vld [vmem:[#allocation5 + $0x1008] sm:$0xff]
        %v857 = vld [vmem:[#allocation5 + $0x1010] sm:$0xff]
        %v858 = vld [vmem:[#allocation5 + $0x1018] sm:$0xff]
        %v859 = vld [vmem:[#allocation5 + $0x1020] sm:$0xff]
        %v860 = vld [vmem:[#allocation5 + $0x1028] sm:$0xff]
        %v861 = vld [vmem:[#allocation5 + $0x1030] sm:$0xff]
        %v862 = vld [vmem:[#allocation5 + $0x1038] sm:$0xff]
        %v863 = vld [vmem:[#allocation5 + $0x1040] sm:$0xff]
        %v864 = vld [vmem:[#allocation5 + $0x1048] sm:$0xff]
        %v865 = vld [vmem:[#allocation5 + $0x1050] sm:$0xff]
        %v866 = vld [vmem:[#allocation5 + $0x1058] sm:$0xff]
        %v867 = vld [vmem:[#allocation5 + $0x1060] sm:$0xff]
        %v868 = vld [vmem:[#allocation5 + $0x1068] sm:$0xff]
        %v869 = vld [vmem:[#allocation5 + $0x1070] sm:$0xff]
        %v870 = vld [vmem:[#allocation5 + $0x1078] sm:$0xff]
        %v871 = vld [vmem:[#allocation5 + $0x1080] sm:$0xff]
        %v872 = vld [vmem:[#allocation5 + $0x1088] sm:$0xff]
        %v873 = vld [vmem:[#allocation5 + $0x1090] sm:$0xff]
        %v874 = vld [vmem:[#allocation5 + $0x1098] sm:$0xff]
        %v875 = vld [vmem:[#allocation5 + $0x10a0] sm:$0xff]
        %v876 = vld [vmem:[#allocation5 + $0x10a8] sm:$0xff]
        %v877 = vld [vmem:[#allocation5 + $0x10b0] sm:$0xff]
        %v878 = vld [vmem:[#allocation5 + $0x10b8] sm:$0xff]
        %v879 = vld [vmem:[#allocation5 + $0x10c0] sm:$0xff]
        %v880 = vld [vmem:[#allocation5 + $0x10c8] sm:$0xff]
        %v881 = vld [vmem:[#allocation5 + $0x10d0] sm:$0xff]
        %v882 = vld [vmem:[#allocation5 + $0x10d8] sm:$0xff]
        %v883 = vld [vmem:[#allocation5 + $0x10e0] sm:$0xff]
        %v884 = vld [vmem:[#allocation5 + $0x10e8] sm:$0xff]
        %v885 = vld [vmem:[#allocation5 + $0x10f0] sm:$0xff]
        %v886 = vld [vmem:[#allocation5 + $0x10f8] sm:$0xff]
        %v887 = vld [vmem:[#allocation5 + $0x1100] sm:$0xff]
        %v888 = vld [vmem:[#allocation5 + $0x1108] sm:$0xff]
        %v889 = vld [vmem:[#allocation5 + $0x1110] sm:$0xff]
        %v890 = vld [vmem:[#allocation5 + $0x1118] sm:$0xff]
        %v891 = vld [vmem:[#allocation5 + $0x1120] sm:$0xff]
        %v892 = vld [vmem:[#allocation5 + $0x1128] sm:$0xff]
        %v893 = vld [vmem:[#allocation5 + $0x1130] sm:$0xff]
        %v894 = vld [vmem:[#allocation5 + $0x1138] sm:$0xff]
        %v895 = vld [vmem:[#allocation5 + $0x1140] sm:$0xff]
        %v896 = vld [vmem:[#allocation5 + $0x1148] sm:$0xff]
        %v897 = vld [vmem:[#allocation5 + $0x1150] sm:$0xff]
        %v898 = vld [vmem:[#allocation5 + $0x1158] sm:$0xff]
        %v899 = vld [vmem:[#allocation5 + $0x1160] sm:$0xff]
        %v900 = vld [vmem:[#allocation5 + $0x1168] sm:$0xff]
        %v901 = vld [vmem:[#allocation5 + $0x1170] sm:$0xff]
        %v902 = vld [vmem:[#allocation5 + $0x1178] sm:$0xff]
        %v903 = vld [vmem:[#allocation5 + $0x1180] sm:$0xff]
        %v904 = vld [vmem:[#allocation5 + $0x1188] sm:$0xff]
        %v905 = vld [vmem:[#allocation5 + $0x1190] sm:$0xff]
        %v906 = vld [vmem:[#allocation5 + $0x1198] sm:$0xff]
        %v907 = vld [vmem:[#allocation5 + $0x11a0] sm:$0xff]
        %v908 = vld [vmem:[#allocation5 + $0x11a8] sm:$0xff]
        %v909 = vld [vmem:[#allocation5 + $0x11b0] sm:$0xff]
        %v910 = vld [vmem:[#allocation5 + $0x11b8] sm:$0xff]
        %v911 = vld [vmem:[#allocation5 + $0x11c0] sm:$0xff]
        %v912 = vld [vmem:[#allocation5 + $0x11c8] sm:$0xff]
        %v913 = vld [vmem:[#allocation5 + $0x11d0] sm:$0xff]
        %v914 = vld [vmem:[#allocation5 + $0x11d8] sm:$0xff]
        %v915 = vld [vmem:[#allocation5 + $0x11e0] sm:$0xff]
        %v916 = vld [vmem:[#allocation5 + $0x11e8] sm:$0xff]
        %v917 = vld [vmem:[#allocation5 + $0x11f0] sm:$0xff]
        %v918 = vld [vmem:[#allocation5 + $0x11f8] sm:$0xff]
        %v919 = vld [vmem:[#allocation5 + $0x1200] sm:$0xff]
        %v920 = vld [vmem:[#allocation5 + $0x1208] sm:$0xff]
        %v921 = vld [vmem:[#allocation5 + $0x1210] sm:$0xff]
        %v922 = vld [vmem:[#allocation5 + $0x1218] sm:$0xff]
        %v923 = vld [vmem:[#allocation5 + $0x1220] sm:$0xff]
        %v924 = vld [vmem:[#allocation5 + $0x1228] sm:$0xff]
        %v925 = vld [vmem:[#allocation5 + $0x1230] sm:$0xff]
        %v926 = vld [vmem:[#allocation5 + $0x1238] sm:$0xff]
        %v927 = vld [vmem:[#allocation5 + $0x1240] sm:$0xff]
        %v928 = vld [vmem:[#allocation5 + $0x1248] sm:$0xff]
        %v929 = vld [vmem:[#allocation5 + $0x1250] sm:$0xff]
        %v930 = vld [vmem:[#allocation5 + $0x1258] sm:$0xff]
        %v931 = vld [vmem:[#allocation5 + $0x1260] sm:$0xff]
        %v932 = vld [vmem:[#allocation5 + $0x1268] sm:$0xff]
        %v933 = vld [vmem:[#allocation5 + $0x1270] sm:$0xff]
        %v934 = vld [vmem:[#allocation5 + $0x1278] sm:$0xff]
        %v935 = vld [vmem:[#allocation5 + $0x1280] sm:$0xff]
        %v936 = vld [vmem:[#allocation5 + $0x1288] sm:$0xff]
        %v937 = vld [vmem:[#allocation5 + $0x1290] sm:$0xff]
        %v938 = vld [vmem:[#allocation5 + $0x1298] sm:$0xff]
        %v939 = vld [vmem:[#allocation5 + $0x12a0] sm:$0xff]
        %v940 = vld [vmem:[#allocation5 + $0x12a8] sm:$0xff]
        %v941 = vld [vmem:[#allocation5 + $0x12b0] sm:$0xff]
        %v942 = vld [vmem:[#allocation5 + $0x12b8] sm:$0xff]
        %v943 = vld [vmem:[#allocation5 + $0x12c0] sm:$0xff]
        %v944 = vld [vmem:[#allocation5 + $0x12c8] sm:$0xff]
        %v945 = vld [vmem:[#allocation5 + $0x12d0] sm:$0xff]
        %v946 = vld [vmem:[#allocation5 + $0x12d8] sm:$0xff]
        %v947 = vld [vmem:[#allocation5 + $0x12e0] sm:$0xff]
        %v948 = vld [vmem:[#allocation5 + $0x12e8] sm:$0xff]
        %v949 = vld [vmem:[#allocation5 + $0x12f0] sm:$0xff]
        %v950 = vld [vmem:[#allocation5 + $0x12f8] sm:$0xff]
        %v951 = vld [vmem:[#allocation5 + $0x1300] sm:$0xff]
        %v952 = vld [vmem:[#allocation5 + $0x1308] sm:$0xff]
        %v953 = vld [vmem:[#allocation5 + $0x1310] sm:$0xff]
        %v954 = vld [vmem:[#allocation5 + $0x1318] sm:$0xff]
        %v955 = vld [vmem:[#allocation5 + $0x1320] sm:$0xff]
        %v956 = vld [vmem:[#allocation5 + $0x1328] sm:$0xff]
        %v957 = vld [vmem:[#allocation5 + $0x1330] sm:$0xff]
        %v958 = vld [vmem:[#allocation5 + $0x1338] sm:$0xff]
        %v959 = vld [vmem:[#allocation5 + $0x1340] sm:$0xff]
        %v960 = vld [vmem:[#allocation5 + $0x1348] sm:$0xff]
        %v961 = vld [vmem:[#allocation5 + $0x1350] sm:$0xff]
        %v962 = vld [vmem:[#allocation5 + $0x1358] sm:$0xff]
        %v963 = vld [vmem:[#allocation5 + $0x1360] sm:$0xff]
        %v964 = vld [vmem:[#allocation5 + $0x1368] sm:$0xff]
        %v965 = vld [vmem:[#allocation5 + $0x1370] sm:$0xff]
        %v966 = vld [vmem:[#allocation5 + $0x1378] sm:$0xff]
        %v967 = vld [vmem:[#allocation5 + $0x1380] sm:$0xff]
        %v968 = vld [vmem:[#allocation5 + $0x1388] sm:$0xff]
        %v969 = vld [vmem:[#allocation5 + $0x1390] sm:$0xff]
        %v970 = vld [vmem:[#allocation5 + $0x1398] sm:$0xff]
        %v971 = vld [vmem:[#allocation5 + $0x13a0] sm:$0xff]
        %v972 = vld [vmem:[#allocation5 + $0x13a8] sm:$0xff]
        %v973 = vld [vmem:[#allocation5 + $0x13b0] sm:$0xff]
        %v974 = vld [vmem:[#allocation5 + $0x13b8] sm:$0xff]
        %v975 = vld [vmem:[#allocation5 + $0x13c0] sm:$0xff]
        %v976 = vld [vmem:[#allocation5 + $0x13c8] sm:$0xff]
        %v977 = vld [vmem:[#allocation5 + $0x13d0] sm:$0xff]
        %v978 = vld [vmem:[#allocation5 + $0x13d8] sm:$0xff]
        %v979 = vld [vmem:[#allocation5 + $0x13e0] sm:$0xff]
        %v980 = vld [vmem:[#allocation5 + $0x13e8] sm:$0xff]
        %v981 = vld [vmem:[#allocation5 + $0x13f0] sm:$0xff]
        %v982 = vld [vmem:[#allocation5 + $0x13f8] sm:$0xff]
        %v983 = vld [vmem:[#allocation5 + $0x1400] sm:$0xff]
        %v984 = vld [vmem:[#allocation5 + $0x1408] sm:$0xff]
        %v985 = vld [vmem:[#allocation5 + $0x1410] sm:$0xff]
        %v986 = vld [vmem:[#allocation5 + $0x1418] sm:$0xff]
        %v987 = vld [vmem:[#allocation5 + $0x1420] sm:$0xff]
        %v988 = vld [vmem:[#allocation5 + $0x1428] sm:$0xff]
        %v989 = vld [vmem:[#allocation5 + $0x1430] sm:$0xff]
        %v990 = vld [vmem:[#allocation5 + $0x1438] sm:$0xff]
        %v991 = vld [vmem:[#allocation5 + $0x1440] sm:$0xff]
        %v992 = vld [vmem:[#allocation5 + $0x1448] sm:$0xff]
        %v993 = vld [vmem:[#allocation5 + $0x1450] sm:$0xff]
        %v994 = vld [vmem:[#allocation5 + $0x1458] sm:$0xff]
        %v995 = vld [vmem:[#allocation5 + $0x1460] sm:$0xff]
        %v996 = vld [vmem:[#allocation5 + $0x1468] sm:$0xff]
        %v997 = vld [vmem:[#allocation5 + $0x1470] sm:$0xff]
        %v998 = vld [vmem:[#allocation5 + $0x1478] sm:$0xff]
        %v999 = vld [vmem:[#allocation5 + $0x1480] sm:$0xff]
        %v1000 = vld [vmem:[#allocation5 + $0x1488] sm:$0xff]
        %v1001 = vld [vmem:[#allocation5 + $0x1490] sm:$0xff]
        %v1002 = vld [vmem:[#allocation5 + $0x1498] sm:$0xff]
        %v1003 = vld [vmem:[#allocation5 + $0x14a0] sm:$0xff]
        %v1004 = vld [vmem:[#allocation5 + $0x14a8] sm:$0xff]
        %v1005 = vld [vmem:[#allocation5 + $0x14b0] sm:$0xff]
        %v1006 = vld [vmem:[#allocation5 + $0x14b8] sm:$0xff]
        %v1007 = vld [vmem:[#allocation5 + $0x14c0] sm:$0xff]
        %v1008 = vld [vmem:[#allocation5 + $0x14c8] sm:$0xff]
        %v1009 = vld [vmem:[#allocation5 + $0x14d0] sm:$0xff]
        %v1010 = vld [vmem:[#allocation5 + $0x14d8] sm:$0xff]
        %v1011 = vld [vmem:[#allocation5 + $0x14e0] sm:$0xff]
        %v1012 = vld [vmem:[#allocation5 + $0x14e8] sm:$0xff]
        %v1013 = vld [vmem:[#allocation5 + $0x14f0] sm:$0xff]
        %v1014 = vld [vmem:[#allocation5 + $0x14f8] sm:$0xff]
        %v1015 = vld [vmem:[#allocation5 + $0x1500] sm:$0xff]
        %v1016 = vld [vmem:[#allocation5 + $0x1508] sm:$0xff]
        %v1017 = vld [vmem:[#allocation5 + $0x1510] sm:$0xff]
        %v1018 = vld [vmem:[#allocation5 + $0x1518] sm:$0xff]
        %v1019 = vld [vmem:[#allocation5 + $0x1520] sm:$0xff]
        %v1020 = vld [vmem:[#allocation5 + $0x1528] sm:$0xff]
        %v1021 = vld [vmem:[#allocation5 + $0x1530] sm:$0xff]
        %v1022 = vld [vmem:[#allocation5 + $0x1538] sm:$0xff]
        %v1023 = vld [vmem:[#allocation5 + $0x1540] sm:$0xff]
        %v1024 = vld [vmem:[#allocation5 + $0x1548] sm:$0xff]
        %v1025 = vld [vmem:[#allocation5 + $0x1550] sm:$0xff]
        %v1026 = vld [vmem:[#allocation5 + $0x1558] sm:$0xff]
        %v1027 = vld [vmem:[#allocation5 + $0x1560] sm:$0xff]
        %v1028 = vld [vmem:[#allocation5 + $0x1568] sm:$0xff]
        %v1029 = vld [vmem:[#allocation5 + $0x1570] sm:$0xff]
        %v1030 = vld [vmem:[#allocation5 + $0x1578] sm:$0xff]
        %v1031 = vld [vmem:[#allocation5 + $0x1580] sm:$0xff]
        %v1032 = vld [vmem:[#allocation5 + $0x1588] sm:$0xff]
        %v1033 = vld [vmem:[#allocation5 + $0x1590] sm:$0xff]
        %v1034 = vld [vmem:[#allocation5 + $0x1598] sm:$0xff]
        %v1035 = vld [vmem:[#allocation5 + $0x15a0] sm:$0xff]
        %v1036 = vld [vmem:[#allocation5 + $0x15a8] sm:$0xff]
        %v1037 = vld [vmem:[#allocation5 + $0x15b0] sm:$0xff]
        %v1038 = vld [vmem:[#allocation5 + $0x15b8] sm:$0xff]
        %v1039 = vld [vmem:[#allocation5 + $0x15c0] sm:$0xff]
        %v1040 = vld [vmem:[#allocation5 + $0x15c8] sm:$0xff]
        %v1041 = vld [vmem:[#allocation5 + $0x15d0] sm:$0xff]
        %v1042 = vld [vmem:[#allocation5 + $0x15d8] sm:$0xff]
        %v1043 = vld [vmem:[#allocation5 + $0x15e0] sm:$0xff]
        %v1044 = vld [vmem:[#allocation5 + $0x15e8] sm:$0xff]
        %v1045 = vld [vmem:[#allocation5 + $0x15f0] sm:$0xff]
        %v1046 = vld [vmem:[#allocation5 + $0x15f8] sm:$0xff]
        %v1047 = vld [vmem:[#allocation5 + $0x1600] sm:$0xff]
        %v1048 = vld [vmem:[#allocation5 + $0x1608] sm:$0xff]
        %v1049 = vld [vmem:[#allocation5 + $0x1610] sm:$0xff]
        %v1050 = vld [vmem:[#allocation5 + $0x1618] sm:$0xff]
        %v1051 = vld [vmem:[#allocation5 + $0x1620] sm:$0xff]
        %v1052 = vld [vmem:[#allocation5 + $0x1628] sm:$0xff]
        %v1053 = vld [vmem:[#allocation5 + $0x1630] sm:$0xff]
        %v1054 = vld [vmem:[#allocation5 + $0x1638] sm:$0xff]
        %v1055 = vld [vmem:[#allocation5 + $0x1640] sm:$0xff]
        %v1056 = vld [vmem:[#allocation5 + $0x1648] sm:$0xff]
        %v1057 = vld [vmem:[#allocation5 + $0x1650] sm:$0xff]
        %v1058 = vld [vmem:[#allocation5 + $0x1658] sm:$0xff]
        %v1059 = vld [vmem:[#allocation5 + $0x1660] sm:$0xff]
        %v1060 = vld [vmem:[#allocation5 + $0x1668] sm:$0xff]
        %v1061 = vld [vmem:[#allocation5 + $0x1670] sm:$0xff]
        %v1062 = vld [vmem:[#allocation5 + $0x1678] sm:$0xff]
        %v1063 = vld [vmem:[#allocation5 + $0x1680] sm:$0xff]
        %v1064 = vld [vmem:[#allocation5 + $0x1688] sm:$0xff]
        %v1065 = vld [vmem:[#allocation5 + $0x1690] sm:$0xff]
        %v1066 = vld [vmem:[#allocation5 + $0x1698] sm:$0xff]
        %v1067 = vld [vmem:[#allocation5 + $0x16a0] sm:$0xff]
        %v1068 = vld [vmem:[#allocation5 + $0x16a8] sm:$0xff]
        %v1069 = vld [vmem:[#allocation5 + $0x16b0] sm:$0xff]
        %v1070 = vld [vmem:[#allocation5 + $0x16b8] sm:$0xff]
        %v1071 = vld [vmem:[#allocation5 + $0x16c0] sm:$0xff]
        %v1072 = vld [vmem:[#allocation5 + $0x16c8] sm:$0xff]
        %v1073 = vld [vmem:[#allocation5 + $0x16d0] sm:$0xff]
        %v1074 = vld [vmem:[#allocation5 + $0x16d8] sm:$0xff]
        %v1075 = vld [vmem:[#allocation5 + $0x16e0] sm:$0xff]
        %v1076 = vld [vmem:[#allocation5 + $0x16e8] sm:$0xff]
        %v1077 = vld [vmem:[#allocation5 + $0x16f0] sm:$0xff]
        %v1078 = vld [vmem:[#allocation5 + $0x16f8] sm:$0xff]
        %v1079 = vld [vmem:[#allocation5 + $0x1700] sm:$0xff]
        %v1080 = vld [vmem:[#allocation5 + $0x1708] sm:$0xff]
        %v1081 = vld [vmem:[#allocation5 + $0x1710] sm:$0xff]
        %v1082 = vld [vmem:[#allocation5 + $0x1718] sm:$0xff]
        %v1083 = vld [vmem:[#allocation5 + $0x1720] sm:$0xff]
        %v1084 = vld [vmem:[#allocation5 + $0x1728] sm:$0xff]
        %v1085 = vld [vmem:[#allocation5 + $0x1730] sm:$0xff]
        %v1086 = vld [vmem:[#allocation5 + $0x1738] sm:$0xff]
        %v1087 = vld [vmem:[#allocation5 + $0x1740] sm:$0xff]
        %v1088 = vld [vmem:[#allocation5 + $0x1748] sm:$0xff]
        %v1089 = vld [vmem:[#allocation5 + $0x1750] sm:$0xff]
        %v1090 = vld [vmem:[#allocation5 + $0x1758] sm:$0xff]
        %v1091 = vld [vmem:[#allocation5 + $0x1760] sm:$0xff]
        %v1092 = vld [vmem:[#allocation5 + $0x1768] sm:$0xff]
        %v1093 = vld [vmem:[#allocation5 + $0x1770] sm:$0xff]
        %v1094 = vld [vmem:[#allocation5 + $0x1778] sm:$0xff]
        %v1095 = vld [vmem:[#allocation5 + $0x1780] sm:$0xff]
        %v1096 = vld [vmem:[#allocation5 + $0x1788] sm:$0xff]
        %v1097 = vld [vmem:[#allocation5 + $0x1790] sm:$0xff]
        %v1098 = vld [vmem:[#allocation5 + $0x1798] sm:$0xff]
        %v1099 = vld [vmem:[#allocation5 + $0x17a0] sm:$0xff]
        %v1100 = vld [vmem:[#allocation5 + $0x17a8] sm:$0xff]
        %v1101 = vld [vmem:[#allocation5 + $0x17b0] sm:$0xff]
        %v1102 = vld [vmem:[#allocation5 + $0x17b8] sm:$0xff]
        %v1103 = vld [vmem:[#allocation5 + $0x17c0] sm:$0xff]
        %v1104 = vld [vmem:[#allocation5 + $0x17c8] sm:$0xff]
        %v1105 = vld [vmem:[#allocation5 + $0x17d0] sm:$0xff]
        %v1106 = vld [vmem:[#allocation5 + $0x17d8] sm:$0xff]
        %v1107 = vld [vmem:[#allocation5 + $0x17e0] sm:$0xff]
        %v1108 = vld [vmem:[#allocation5 + $0x17e8] sm:$0xff]
        %v1109 = vld [vmem:[#allocation5 + $0x17f0] sm:$0xff]
        %v1110 = vld [vmem:[#allocation5 + $0x17f8] sm:$0xff]
        %v1879 = vunpack.c.l.b16 %v343
        %v1880 = vunpack.c.h.b16 %v343
        %v1881 = vunpack.c.l.b16 %v344
        %v1882 = vunpack.c.h.b16 %v344
        %v1883 = vunpack.c.l.b16 %v345
        %v1884 = vunpack.c.h.b16 %v345
        %v1885 = vunpack.c.l.b16 %v346
        %v1886 = vunpack.c.h.b16 %v346
        %v1887 = vunpack.c.l.b16 %v347
        %v1888 = vunpack.c.h.b16 %v347
        %v1889 = vunpack.c.l.b16 %v348
        %v1890 = vunpack.c.h.b16 %v348
        %v1891 = vunpack.c.l.b16 %v349
        %v1892 = vunpack.c.h.b16 %v349
        %v1893 = vunpack.c.l.b16 %v350
        %v1894 = vunpack.c.h.b16 %v350
        %v1895 = vunpack.c.l.b16 %v351
        %v1896 = vunpack.c.h.b16 %v351
        %v1897 = vunpack.c.l.b16 %v352
        %v1898 = vunpack.c.h.b16 %v352
        %v1899 = vunpack.c.l.b16 %v353
        %v1900 = vunpack.c.h.b16 %v353
        %v1901 = vunpack.c.l.b16 %v354
        %v1902 = vunpack.c.h.b16 %v354
        %v1903 = vunpack.c.l.b16 %v355
        %v1904 = vunpack.c.h.b16 %v355
        %v1905 = vunpack.c.l.b16 %v356
        %v1906 = vunpack.c.h.b16 %v356
        %v1907 = vunpack.c.l.b16 %v357
        %v1908 = vunpack.c.h.b16 %v357
        %v1909 = vunpack.c.l.b16 %v358
        %v1910 = vunpack.c.h.b16 %v358
        %v1911 = vunpack.c.l.b16 %v359
        %v1912 = vunpack.c.h.b16 %v359
        %v1913 = vunpack.c.l.b16 %v360
        %v1914 = vunpack.c.h.b16 %v360
        %v1915 = vunpack.c.l.b16 %v361
        %v1916 = vunpack.c.h.b16 %v361
        %v1917 = vunpack.c.l.b16 %v362
        %v1918 = vunpack.c.h.b16 %v362
        %v1919 = vunpack.c.l.b16 %v363
        %v1920 = vunpack.c.h.b16 %v363
        %v1921 = vunpack.c.l.b16 %v364
        %v1922 = vunpack.c.h.b16 %v364
        %v1923 = vunpack.c.l.b16 %v365
        %v1924 = vunpack.c.h.b16 %v365
        %v1925 = vunpack.c.l.b16 %v366
        %v1926 = vunpack.c.h.b16 %v366
        %v1927 = vunpack.c.l.b16 %v367
        %v1928 = vunpack.c.h.b16 %v367
        %v1929 = vunpack.c.l.b16 %v368
        %v1930 = vunpack.c.h.b16 %v368
        %v1931 = vunpack.c.l.b16 %v369
        %v1932 = vunpack.c.h.b16 %v369
        %v1933 = vunpack.c.l.b16 %v370
        %v1934 = vunpack.c.h.b16 %v370
        %v1935 = vunpack.c.l.b16 %v371
        %v1936 = vunpack.c.h.b16 %v371
        %v1937 = vunpack.c.l.b16 %v372
        %v1938 = vunpack.c.h.b16 %v372
        %v1939 = vunpack.c.l.b16 %v373
        %v1940 = vunpack.c.h.b16 %v373
        %v1941 = vunpack.c.l.b16 %v374
        %v1942 = vunpack.c.h.b16 %v374
        %v1943 = vunpack.c.l.b16 %v375
        %v1944 = vunpack.c.h.b16 %v375
        %v1945 = vunpack.c.l.b16 %v376
        %v1946 = vunpack.c.h.b16 %v376
        %v1947 = vunpack.c.l.b16 %v377
        %v1948 = vunpack.c.h.b16 %v377
        %v1949 = vunpack.c.l.b16 %v378
        %v1950 = vunpack.c.h.b16 %v378
        %v1951 = vunpack.c.l.b16 %v379
        %v1952 = vunpack.c.h.b16 %v379
        %v1953 = vunpack.c.l.b16 %v380
        %v1954 = vunpack.c.h.b16 %v380
        %v1955 = vunpack.c.l.b16 %v381
        %v1956 = vunpack.c.h.b16 %v381
        %v1957 = vunpack.c.l.b16 %v382
        %v1958 = vunpack.c.h.b16 %v382
        %v1959 = vunpack.c.l.b16 %v383
        %v1960 = vunpack.c.h.b16 %v383
        %v1961 = vunpack.c.l.b16 %v384
        %v1962 = vunpack.c.h.b16 %v384
        %v1963 = vunpack.c.l.b16 %v385
        %v1964 = vunpack.c.h.b16 %v385
        %v1965 = vunpack.c.l.b16 %v386
        %v1966 = vunpack.c.h.b16 %v386
        %v1967 = vunpack.c.l.b16 %v387
        %v1968 = vunpack.c.h.b16 %v387
        %v1969 = vunpack.c.l.b16 %v388
        %v1970 = vunpack.c.h.b16 %v388
        %v1971 = vunpack.c.l.b16 %v389
        %v1972 = vunpack.c.h.b16 %v389
        %v1973 = vunpack.c.l.b16 %v390
        %v1974 = vunpack.c.h.b16 %v390
        %v1975 = vunpack.c.l.b16 %v391
        %v1976 = vunpack.c.h.b16 %v391
        %v1977 = vunpack.c.l.b16 %v392
        %v1978 = vunpack.c.h.b16 %v392
        %v1979 = vunpack.c.l.b16 %v393
        %v1980 = vunpack.c.h.b16 %v393
        %v1981 = vunpack.c.l.b16 %v394
        %v1982 = vunpack.c.h.b16 %v394
        %v1983 = vunpack.c.l.b16 %v395
        %v1984 = vunpack.c.h.b16 %v395
        %v1985 = vunpack.c.l.b16 %v396
        %v1986 = vunpack.c.h.b16 %v396
        %v1987 = vunpack.c.l.b16 %v397
        %v1988 = vunpack.c.h.b16 %v397
        %v1989 = vunpack.c.l.b16 %v398
        %v1990 = vunpack.c.h.b16 %v398
        %v1991 = vunpack.c.l.b16 %v399
        %v1992 = vunpack.c.h.b16 %v399
        %v1993 = vunpack.c.l.b16 %v400
        %v1994 = vunpack.c.h.b16 %v400
        %v1995 = vunpack.c.l.b16 %v401
        %v1996 = vunpack.c.h.b16 %v401
        %v1997 = vunpack.c.l.b16 %v402
        %v1998 = vunpack.c.h.b16 %v402
        %v1999 = vunpack.c.l.b16 %v403
        %v2000 = vunpack.c.h.b16 %v403
        %v2001 = vunpack.c.l.b16 %v404
        %v2002 = vunpack.c.h.b16 %v404
        %v2003 = vunpack.c.l.b16 %v405
        %v2004 = vunpack.c.h.b16 %v405
        %v2005 = vunpack.c.l.b16 %v406
        %v2006 = vunpack.c.h.b16 %v406
        %v2007 = vunpack.c.l.b16 %v407
        %v2008 = vunpack.c.h.b16 %v407
        %v2009 = vunpack.c.l.b16 %v408
        %v2010 = vunpack.c.h.b16 %v408
        %v2011 = vunpack.c.l.b16 %v409
        %v2012 = vunpack.c.h.b16 %v409
        %v2013 = vunpack.c.l.b16 %v410
        %v2014 = vunpack.c.h.b16 %v410
        %v2015 = vunpack.c.l.b16 %v411
        %v2016 = vunpack.c.h.b16 %v411
        %v2017 = vunpack.c.l.b16 %v412
        %v2018 = vunpack.c.h.b16 %v412
        %v2019 = vunpack.c.l.b16 %v413
        %v2020 = vunpack.c.h.b16 %v413
        %v2021 = vunpack.c.l.b16 %v414
        %v2022 = vunpack.c.h.b16 %v414
        %v2023 = vunpack.c.l.b16 %v415
        %v2024 = vunpack.c.h.b16 %v415
        %v2025 = vunpack.c.l.b16 %v416
        %v2026 = vunpack.c.h.b16 %v416
        %v2027 = vunpack.c.l.b16 %v417
        %v2028 = vunpack.c.h.b16 %v417
        %v2029 = vunpack.c.l.b16 %v418
        %v2030 = vunpack.c.h.b16 %v418
        %v2031 = vunpack.c.l.b16 %v419
        %v2032 = vunpack.c.h.b16 %v419
        %v2033 = vunpack.c.l.b16 %v420
        %v2034 = vunpack.c.h.b16 %v420
        %v2035 = vunpack.c.l.b16 %v421
        %v2036 = vunpack.c.h.b16 %v421
        %v2037 = vunpack.c.l.b16 %v422
        %v2038 = vunpack.c.h.b16 %v422
        %v2039 = vunpack.c.l.b16 %v423
        %v2040 = vunpack.c.h.b16 %v423
        %v2041 = vunpack.c.l.b16 %v424
        %v2042 = vunpack.c.h.b16 %v424
        %v2043 = vunpack.c.l.b16 %v425
        %v2044 = vunpack.c.h.b16 %v425
        %v2045 = vunpack.c.l.b16 %v426
        %v2046 = vunpack.c.h.b16 %v426
        %v2047 = vunpack.c.l.b16 %v427
        %v2048 = vunpack.c.h.b16 %v427
        %v2049 = vunpack.c.l.b16 %v428
        %v2050 = vunpack.c.h.b16 %v428
        %v2051 = vunpack.c.l.b16 %v429
        %v2052 = vunpack.c.h.b16 %v429
        %v2053 = vunpack.c.l.b16 %v430
        %v2054 = vunpack.c.h.b16 %v430
        %v2055 = vunpack.c.l.b16 %v431
        %v2056 = vunpack.c.h.b16 %v431
        %v2057 = vunpack.c.l.b16 %v432
        %v2058 = vunpack.c.h.b16 %v432
        %v2059 = vunpack.c.l.b16 %v433
        %v2060 = vunpack.c.h.b16 %v433
        %v2061 = vunpack.c.l.b16 %v434
        %v2062 = vunpack.c.h.b16 %v434
        %v2063 = vunpack.c.l.b16 %v435
        %v2064 = vunpack.c.h.b16 %v435
        %v2065 = vunpack.c.l.b16 %v436
        %v2066 = vunpack.c.h.b16 %v436
        %v2067 = vunpack.c.l.b16 %v437
        %v2068 = vunpack.c.h.b16 %v437
        %v2069 = vunpack.c.l.b16 %v438
        %v2070 = vunpack.c.h.b16 %v438
        %v2071 = vunpack.c.l.b16 %v439
        %v2072 = vunpack.c.h.b16 %v439
        %v2073 = vunpack.c.l.b16 %v440
        %v2074 = vunpack.c.h.b16 %v440
        %v2075 = vunpack.c.l.b16 %v441
        %v2076 = vunpack.c.h.b16 %v441
        %v2077 = vunpack.c.l.b16 %v442
        %v2078 = vunpack.c.h.b16 %v442
        %v2079 = vunpack.c.l.b16 %v443
        %v2080 = vunpack.c.h.b16 %v443
        %v2081 = vunpack.c.l.b16 %v444
        %v2082 = vunpack.c.h.b16 %v444
        %v2083 = vunpack.c.l.b16 %v445
        %v2084 = vunpack.c.h.b16 %v445
        %v2085 = vunpack.c.l.b16 %v446
        %v2086 = vunpack.c.h.b16 %v446
        %v2087 = vunpack.c.l.b16 %v447
        %v2088 = vunpack.c.h.b16 %v447
        %v2089 = vunpack.c.l.b16 %v448
        %v2090 = vunpack.c.h.b16 %v448
        %v2091 = vunpack.c.l.b16 %v449
        %v2092 = vunpack.c.h.b16 %v449
        %v2093 = vunpack.c.l.b16 %v450
        %v2094 = vunpack.c.h.b16 %v450
        %v2095 = vunpack.c.l.b16 %v451
        %v2096 = vunpack.c.h.b16 %v451
        %v2097 = vunpack.c.l.b16 %v452
        %v2098 = vunpack.c.h.b16 %v452
        %v2099 = vunpack.c.l.b16 %v453
        %v2100 = vunpack.c.h.b16 %v453
        %v2101 = vunpack.c.l.b16 %v454
        %v2102 = vunpack.c.h.b16 %v454
        %v2103 = vunpack.c.l.b16 %v455
        %v2104 = vunpack.c.h.b16 %v455
        %v2105 = vunpack.c.l.b16 %v456
        %v2106 = vunpack.c.h.b16 %v456
        %v2107 = vunpack.c.l.b16 %v457
        %v2108 = vunpack.c.h.b16 %v457
        %v2109 = vunpack.c.l.b16 %v458
        %v2110 = vunpack.c.h.b16 %v458
        %v2111 = vunpack.c.l.b16 %v459
        %v2112 = vunpack.c.h.b16 %v459
        %v2113 = vunpack.c.l.b16 %v460
        %v2114 = vunpack.c.h.b16 %v460
        %v2115 = vunpack.c.l.b16 %v461
        %v2116 = vunpack.c.h.b16 %v461
        %v2117 = vunpack.c.l.b16 %v462
        %v2118 = vunpack.c.h.b16 %v462
        %v2119 = vunpack.c.l.b16 %v463
        %v2120 = vunpack.c.h.b16 %v463
        %v2121 = vunpack.c.l.b16 %v464
        %v2122 = vunpack.c.h.b16 %v464
        %v2123 = vunpack.c.l.b16 %v465
        %v2124 = vunpack.c.h.b16 %v465
        %v2125 = vunpack.c.l.b16 %v466
        %v2126 = vunpack.c.h.b16 %v466
        %v2127 = vunpack.c.l.b16 %v467
        %v2128 = vunpack.c.h.b16 %v467
        %v2129 = vunpack.c.l.b16 %v468
        %v2130 = vunpack.c.h.b16 %v468
        %v2131 = vunpack.c.l.b16 %v469
        %v2132 = vunpack.c.h.b16 %v469
        %v2133 = vunpack.c.l.b16 %v470
        %v2134 = vunpack.c.h.b16 %v470
        %v2135 = vunpack.c.l.b16 %v471
        %v2136 = vunpack.c.h.b16 %v471
        %v2137 = vunpack.c.l.b16 %v472
        %v2138 = vunpack.c.h.b16 %v472
        %v2139 = vunpack.c.l.b16 %v473
        %v2140 = vunpack.c.h.b16 %v473
        %v2141 = vunpack.c.l.b16 %v474
        %v2142 = vunpack.c.h.b16 %v474
        %v2143 = vunpack.c.l.b16 %v475
        %v2144 = vunpack.c.h.b16 %v475
        %v2145 = vunpack.c.l.b16 %v476
        %v2146 = vunpack.c.h.b16 %v476
        %v2147 = vunpack.c.l.b16 %v477
        %v2148 = vunpack.c.h.b16 %v477
        %v2149 = vunpack.c.l.b16 %v478
        %v2150 = vunpack.c.h.b16 %v478
        %v2151 = vunpack.c.l.b16 %v479
        %v2152 = vunpack.c.h.b16 %v479
        %v2153 = vunpack.c.l.b16 %v480
        %v2154 = vunpack.c.h.b16 %v480
        %v2155 = vunpack.c.l.b16 %v481
        %v2156 = vunpack.c.h.b16 %v481
        %v2157 = vunpack.c.l.b16 %v482
        %v2158 = vunpack.c.h.b16 %v482
        %v2159 = vunpack.c.l.b16 %v483
        %v2160 = vunpack.c.h.b16 %v483
        %v2161 = vunpack.c.l.b16 %v484
        %v2162 = vunpack.c.h.b16 %v484
        %v2163 = vunpack.c.l.b16 %v485
        %v2164 = vunpack.c.h.b16 %v485
        %v2165 = vunpack.c.l.b16 %v486
        %v2166 = vunpack.c.h.b16 %v486
        %v2167 = vunpack.c.l.b16 %v487
        %v2168 = vunpack.c.h.b16 %v487
        %v2169 = vunpack.c.l.b16 %v488
        %v2170 = vunpack.c.h.b16 %v488
        %v2171 = vunpack.c.l.b16 %v489
        %v2172 = vunpack.c.h.b16 %v489
        %v2173 = vunpack.c.l.b16 %v490
        %v2174 = vunpack.c.h.b16 %v490
        %v2175 = vunpack.c.l.b16 %v491
        %v2176 = vunpack.c.h.b16 %v491
        %v2177 = vunpack.c.l.b16 %v492
        %v2178 = vunpack.c.h.b16 %v492
        %v2179 = vunpack.c.l.b16 %v493
        %v2180 = vunpack.c.h.b16 %v493
        %v2181 = vunpack.c.l.b16 %v494
        %v2182 = vunpack.c.h.b16 %v494
        %v2183 = vunpack.c.l.b16 %v495
        %v2184 = vunpack.c.h.b16 %v495
        %v2185 = vunpack.c.l.b16 %v496
        %v2186 = vunpack.c.h.b16 %v496
        %v2187 = vunpack.c.l.b16 %v497
        %v2188 = vunpack.c.h.b16 %v497
        %v2189 = vunpack.c.l.b16 %v498
        %v2190 = vunpack.c.h.b16 %v498
        %v2191 = vunpack.c.l.b16 %v499
        %v2192 = vunpack.c.h.b16 %v499
        %v2193 = vunpack.c.l.b16 %v500
        %v2194 = vunpack.c.h.b16 %v500
        %v2195 = vunpack.c.l.b16 %v501
        %v2196 = vunpack.c.h.b16 %v501
        %v2197 = vunpack.c.l.b16 %v502
        %v2198 = vunpack.c.h.b16 %v502
        %v2199 = vunpack.c.l.b16 %v503
        %v2200 = vunpack.c.h.b16 %v503
        %v2201 = vunpack.c.l.b16 %v504
        %v2202 = vunpack.c.h.b16 %v504
        %v2203 = vunpack.c.l.b16 %v505
        %v2204 = vunpack.c.h.b16 %v505
        %v2205 = vunpack.c.l.b16 %v506
        %v2206 = vunpack.c.h.b16 %v506
        %v2207 = vunpack.c.l.b16 %v507
        %v2208 = vunpack.c.h.b16 %v507
        %v2209 = vunpack.c.l.b16 %v508
        %v2210 = vunpack.c.h.b16 %v508
        %v2211 = vunpack.c.l.b16 %v509
        %v2212 = vunpack.c.h.b16 %v509
        %v2213 = vunpack.c.l.b16 %v510
        %v2214 = vunpack.c.h.b16 %v510
        %v2215 = vunpack.c.l.b16 %v511
        %v2216 = vunpack.c.h.b16 %v511
        %v2217 = vunpack.c.l.b16 %v512
        %v2218 = vunpack.c.h.b16 %v512
        %v2219 = vunpack.c.l.b16 %v513
        %v2220 = vunpack.c.h.b16 %v513
        %v2221 = vunpack.c.l.b16 %v514
        %v2222 = vunpack.c.h.b16 %v514
        %v2223 = vunpack.c.l.b16 %v515
        %v2224 = vunpack.c.h.b16 %v515
        %v2225 = vunpack.c.l.b16 %v516
        %v2226 = vunpack.c.h.b16 %v516
        %v2227 = vunpack.c.l.b16 %v517
        %v2228 = vunpack.c.h.b16 %v517
        %v2229 = vunpack.c.l.b16 %v518
        %v2230 = vunpack.c.h.b16 %v518
        %v2231 = vunpack.c.l.b16 %v519
        %v2232 = vunpack.c.h.b16 %v519
        %v2233 = vunpack.c.l.b16 %v520
        %v2234 = vunpack.c.h.b16 %v520
        %v2235 = vunpack.c.l.b16 %v521
        %v2236 = vunpack.c.h.b16 %v521
        %v2237 = vunpack.c.l.b16 %v522
        %v2238 = vunpack.c.h.b16 %v522
        %v2239 = vunpack.c.l.b16 %v523
        %v2240 = vunpack.c.h.b16 %v523
        %v2241 = vunpack.c.l.b16 %v524
        %v2242 = vunpack.c.h.b16 %v524
        %v2243 = vunpack.c.l.b16 %v525
        %v2244 = vunpack.c.h.b16 %v525
        %v2245 = vunpack.c.l.b16 %v526
        %v2246 = vunpack.c.h.b16 %v526
        %v2247 = vunpack.c.l.b16 %v527
        %v2248 = vunpack.c.h.b16 %v527
        %v2249 = vunpack.c.l.b16 %v528
        %v2250 = vunpack.c.h.b16 %v528
        %v2251 = vunpack.c.l.b16 %v529
        %v2252 = vunpack.c.h.b16 %v529
        %v2253 = vunpack.c.l.b16 %v530
        %v2254 = vunpack.c.h.b16 %v530
        %v2255 = vunpack.c.l.b16 %v531
        %v2256 = vunpack.c.h.b16 %v531
        %v2257 = vunpack.c.l.b16 %v532
        %v2258 = vunpack.c.h.b16 %v532
        %v2259 = vunpack.c.l.b16 %v533
        %v2260 = vunpack.c.h.b16 %v533
        %v2261 = vunpack.c.l.b16 %v534
        %v2262 = vunpack.c.h.b16 %v534
        %v2263 = vunpack.c.l.b16 %v535
        %v2264 = vunpack.c.h.b16 %v535
        %v2265 = vunpack.c.l.b16 %v536
        %v2266 = vunpack.c.h.b16 %v536
        %v2267 = vunpack.c.l.b16 %v537
        %v2268 = vunpack.c.h.b16 %v537
        %v2269 = vunpack.c.l.b16 %v538
        %v2270 = vunpack.c.h.b16 %v538
        %v2271 = vunpack.c.l.b16 %v539
        %v2272 = vunpack.c.h.b16 %v539
        %v2273 = vunpack.c.l.b16 %v540
        %v2274 = vunpack.c.h.b16 %v540
        %v2275 = vunpack.c.l.b16 %v541
        %v2276 = vunpack.c.h.b16 %v541
        %v2277 = vunpack.c.l.b16 %v542
        %v2278 = vunpack.c.h.b16 %v542
        %v2279 = vunpack.c.l.b16 %v543
        %v2280 = vunpack.c.h.b16 %v543
        %v2281 = vunpack.c.l.b16 %v544
        %v2282 = vunpack.c.h.b16 %v544
        %v2283 = vunpack.c.l.b16 %v545
        %v2284 = vunpack.c.h.b16 %v545
        %v2285 = vunpack.c.l.b16 %v546
        %v2286 = vunpack.c.h.b16 %v546
        %v2287 = vunpack.c.l.b16 %v547
        %v2288 = vunpack.c.h.b16 %v547
        %v2289 = vunpack.c.l.b16 %v548
        %v2290 = vunpack.c.h.b16 %v548
        %v2291 = vunpack.c.l.b16 %v549
        %v2292 = vunpack.c.h.b16 %v549
        %v2293 = vunpack.c.l.b16 %v550
        %v2294 = vunpack.c.h.b16 %v550
        %v2295 = vunpack.c.l.b16 %v551
        %v2296 = vunpack.c.h.b16 %v551
        %v2297 = vunpack.c.l.b16 %v552
        %v2298 = vunpack.c.h.b16 %v552
        %v2299 = vunpack.c.l.b16 %v553
        %v2300 = vunpack.c.h.b16 %v553
        %v2301 = vunpack.c.l.b16 %v554
        %v2302 = vunpack.c.h.b16 %v554
        %v2303 = vunpack.c.l.b16 %v555
        %v2304 = vunpack.c.h.b16 %v555
        %v2305 = vunpack.c.l.b16 %v556
        %v2306 = vunpack.c.h.b16 %v556
        %v2307 = vunpack.c.l.b16 %v557
        %v2308 = vunpack.c.h.b16 %v557
        %v2309 = vunpack.c.l.b16 %v558
        %v2310 = vunpack.c.h.b16 %v558
        %v2311 = vunpack.c.l.b16 %v559
        %v2312 = vunpack.c.h.b16 %v559
        %v2313 = vunpack.c.l.b16 %v560
        %v2314 = vunpack.c.h.b16 %v560
        %v2315 = vunpack.c.l.b16 %v561
        %v2316 = vunpack.c.h.b16 %v561
        %v2317 = vunpack.c.l.b16 %v562
        %v2318 = vunpack.c.h.b16 %v562
        %v2319 = vunpack.c.l.b16 %v563
        %v2320 = vunpack.c.h.b16 %v563
        %v2321 = vunpack.c.l.b16 %v564
        %v2322 = vunpack.c.h.b16 %v564
        %v2323 = vunpack.c.l.b16 %v565
        %v2324 = vunpack.c.h.b16 %v565
        %v2325 = vunpack.c.l.b16 %v566
        %v2326 = vunpack.c.h.b16 %v566
        %v2327 = vunpack.c.l.b16 %v567
        %v2328 = vunpack.c.h.b16 %v567
        %v2329 = vunpack.c.l.b16 %v568
        %v2330 = vunpack.c.h.b16 %v568
        %v2331 = vunpack.c.l.b16 %v569
        %v2332 = vunpack.c.h.b16 %v569
        %v2333 = vunpack.c.l.b16 %v570
        %v2334 = vunpack.c.h.b16 %v570
        %v2335 = vunpack.c.l.b16 %v571
        %v2336 = vunpack.c.h.b16 %v571
        %v2337 = vunpack.c.l.b16 %v572
        %v2338 = vunpack.c.h.b16 %v572
        %v2339 = vunpack.c.l.b16 %v573
        %v2340 = vunpack.c.h.b16 %v573
        %v2341 = vunpack.c.l.b16 %v574
        %v2342 = vunpack.c.h.b16 %v574
        %v2343 = vunpack.c.l.b16 %v575
        %v2344 = vunpack.c.h.b16 %v575
        %v2345 = vunpack.c.l.b16 %v576
        %v2346 = vunpack.c.h.b16 %v576
        %v2347 = vunpack.c.l.b16 %v577
        %v2348 = vunpack.c.h.b16 %v577
        %v2349 = vunpack.c.l.b16 %v578
        %v2350 = vunpack.c.h.b16 %v578
        %v2351 = vunpack.c.l.b16 %v579
        %v2352 = vunpack.c.h.b16 %v579
        %v2353 = vunpack.c.l.b16 %v580
        %v2354 = vunpack.c.h.b16 %v580
        %v2355 = vunpack.c.l.b16 %v581
        %v2356 = vunpack.c.h.b16 %v581
        %v2357 = vunpack.c.l.b16 %v582
        %v2358 = vunpack.c.h.b16 %v582
        %v2359 = vunpack.c.l.b16 %v583
        %v2360 = vunpack.c.h.b16 %v583
        %v2361 = vunpack.c.l.b16 %v584
        %v2362 = vunpack.c.h.b16 %v584
        %v2363 = vunpack.c.l.b16 %v585
        %v2364 = vunpack.c.h.b16 %v585
        %v2365 = vunpack.c.l.b16 %v586
        %v2366 = vunpack.c.h.b16 %v586
        %v2367 = vunpack.c.l.b16 %v587
        %v2368 = vunpack.c.h.b16 %v587
        %v2369 = vunpack.c.l.b16 %v588
        %v2370 = vunpack.c.h.b16 %v588
        %v2371 = vunpack.c.l.b16 %v589
        %v2372 = vunpack.c.h.b16 %v589
        %v2373 = vunpack.c.l.b16 %v590
        %v2374 = vunpack.c.h.b16 %v590
        %v2375 = vunpack.c.l.b16 %v591
        %v2376 = vunpack.c.h.b16 %v591
        %v2377 = vunpack.c.l.b16 %v592
        %v2378 = vunpack.c.h.b16 %v592
        %v2379 = vunpack.c.l.b16 %v593
        %v2380 = vunpack.c.h.b16 %v593
        %v2381 = vunpack.c.l.b16 %v594
        %v2382 = vunpack.c.h.b16 %v594
        %v2383 = vunpack.c.l.b16 %v595
        %v2384 = vunpack.c.h.b16 %v595
        %v2385 = vunpack.c.l.b16 %v596
        %v2386 = vunpack.c.h.b16 %v596
        %v2387 = vunpack.c.l.b16 %v597
        %v2388 = vunpack.c.h.b16 %v597
        %v2389 = vunpack.c.l.b16 %v598
        %v2390 = vunpack.c.h.b16 %v598
        %v2391 = vunpack.c.l.b16 %v599
        %v2392 = vunpack.c.h.b16 %v599
        %v2393 = vunpack.c.l.b16 %v600
        %v2394 = vunpack.c.h.b16 %v600
        %v2395 = vunpack.c.l.b16 %v601
        %v2396 = vunpack.c.h.b16 %v601
        %v2397 = vunpack.c.l.b16 %v602
        %v2398 = vunpack.c.h.b16 %v602
        %v2399 = vunpack.c.l.b16 %v603
        %v2400 = vunpack.c.h.b16 %v603
        %v2401 = vunpack.c.l.b16 %v604
        %v2402 = vunpack.c.h.b16 %v604
        %v2403 = vunpack.c.l.b16 %v605
        %v2404 = vunpack.c.h.b16 %v605
        %v2405 = vunpack.c.l.b16 %v606
        %v2406 = vunpack.c.h.b16 %v606
        %v2407 = vunpack.c.l.b16 %v607
        %v2408 = vunpack.c.h.b16 %v607
        %v2409 = vunpack.c.l.b16 %v608
        %v2410 = vunpack.c.h.b16 %v608
        %v2411 = vunpack.c.l.b16 %v609
        %v2412 = vunpack.c.h.b16 %v609
        %v2413 = vunpack.c.l.b16 %v610
        %v2414 = vunpack.c.h.b16 %v610
        %v2415 = vunpack.c.l.b16 %v611
        %v2416 = vunpack.c.h.b16 %v611
        %v2417 = vunpack.c.l.b16 %v612
        %v2418 = vunpack.c.h.b16 %v612
        %v2419 = vunpack.c.l.b16 %v613
        %v2420 = vunpack.c.h.b16 %v613
        %v2421 = vunpack.c.l.b16 %v614
        %v2422 = vunpack.c.h.b16 %v614
        %v2423 = vunpack.c.l.b16 %v615
        %v2424 = vunpack.c.h.b16 %v615
        %v2425 = vunpack.c.l.b16 %v616
        %v2426 = vunpack.c.h.b16 %v616
        %v2427 = vunpack.c.l.b16 %v617
        %v2428 = vunpack.c.h.b16 %v617
        %v2429 = vunpack.c.l.b16 %v618
        %v2430 = vunpack.c.h.b16 %v618
        %v2431 = vunpack.c.l.b16 %v619
        %v2432 = vunpack.c.h.b16 %v619
        %v2433 = vunpack.c.l.b16 %v620
        %v2434 = vunpack.c.h.b16 %v620
        %v2435 = vunpack.c.l.b16 %v621
        %v2436 = vunpack.c.h.b16 %v621
        %v2437 = vunpack.c.l.b16 %v622
        %v2438 = vunpack.c.h.b16 %v622
        %v2439 = vunpack.c.l.b16 %v623
        %v2440 = vunpack.c.h.b16 %v623
        %v2441 = vunpack.c.l.b16 %v624
        %v2442 = vunpack.c.h.b16 %v624
        %v2443 = vunpack.c.l.b16 %v625
        %v2444 = vunpack.c.h.b16 %v625
        %v2445 = vunpack.c.l.b16 %v626
        %v2446 = vunpack.c.h.b16 %v626
        %v2447 = vunpack.c.l.b16 %v627
        %v2448 = vunpack.c.h.b16 %v627
        %v2449 = vunpack.c.l.b16 %v628
        %v2450 = vunpack.c.h.b16 %v628
        %v2451 = vunpack.c.l.b16 %v629
        %v2452 = vunpack.c.h.b16 %v629
        %v2453 = vunpack.c.l.b16 %v630
        %v2454 = vunpack.c.h.b16 %v630
        %v2455 = vunpack.c.l.b16 %v631
        %v2456 = vunpack.c.h.b16 %v631
        %v2457 = vunpack.c.l.b16 %v632
        %v2458 = vunpack.c.h.b16 %v632
        %v2459 = vunpack.c.l.b16 %v633
        %v2460 = vunpack.c.h.b16 %v633
        %v2461 = vunpack.c.l.b16 %v634
        %v2462 = vunpack.c.h.b16 %v634
        %v2463 = vunpack.c.l.b16 %v635
        %v2464 = vunpack.c.h.b16 %v635
        %v2465 = vunpack.c.l.b16 %v636
        %v2466 = vunpack.c.h.b16 %v636
        %v2467 = vunpack.c.l.b16 %v637
        %v2468 = vunpack.c.h.b16 %v637
        %v2469 = vunpack.c.l.b16 %v638
        %v2470 = vunpack.c.h.b16 %v638
        %v2471 = vunpack.c.l.b16 %v639
        %v2472 = vunpack.c.h.b16 %v639
        %v2473 = vunpack.c.l.b16 %v640
        %v2474 = vunpack.c.h.b16 %v640
        %v2475 = vunpack.c.l.b16 %v641
        %v2476 = vunpack.c.h.b16 %v641
        %v2477 = vunpack.c.l.b16 %v642
        %v2478 = vunpack.c.h.b16 %v642
        %v2479 = vunpack.c.l.b16 %v643
        %v2480 = vunpack.c.h.b16 %v643
        %v2481 = vunpack.c.l.b16 %v644
        %v2482 = vunpack.c.h.b16 %v644
        %v2483 = vunpack.c.l.b16 %v645
        %v2484 = vunpack.c.h.b16 %v645
        %v2485 = vunpack.c.l.b16 %v646
        %v2486 = vunpack.c.h.b16 %v646
        %v2487 = vunpack.c.l.b16 %v647
        %v2488 = vunpack.c.h.b16 %v647
        %v2489 = vunpack.c.l.b16 %v648
        %v2490 = vunpack.c.h.b16 %v648
        %v2491 = vunpack.c.l.b16 %v649
        %v2492 = vunpack.c.h.b16 %v649
        %v2493 = vunpack.c.l.b16 %v650
        %v2494 = vunpack.c.h.b16 %v650
        %v2495 = vunpack.c.l.b16 %v651
        %v2496 = vunpack.c.h.b16 %v651
        %v2497 = vunpack.c.l.b16 %v652
        %v2498 = vunpack.c.h.b16 %v652
        %v2499 = vunpack.c.l.b16 %v653
        %v2500 = vunpack.c.h.b16 %v653
        %v2501 = vunpack.c.l.b16 %v654
        %v2502 = vunpack.c.h.b16 %v654
        %v2503 = vunpack.c.l.b16 %v655
        %v2504 = vunpack.c.h.b16 %v655
        %v2505 = vunpack.c.l.b16 %v656
        %v2506 = vunpack.c.h.b16 %v656
        %v2507 = vunpack.c.l.b16 %v657
        %v2508 = vunpack.c.h.b16 %v657
        %v2509 = vunpack.c.l.b16 %v658
        %v2510 = vunpack.c.h.b16 %v658
        %v2511 = vunpack.c.l.b16 %v659
        %v2512 = vunpack.c.h.b16 %v659
        %v2513 = vunpack.c.l.b16 %v660
        %v2514 = vunpack.c.h.b16 %v660
        %v2515 = vunpack.c.l.b16 %v661
        %v2516 = vunpack.c.h.b16 %v661
        %v2517 = vunpack.c.l.b16 %v662
        %v2518 = vunpack.c.h.b16 %v662
        %v2519 = vunpack.c.l.b16 %v663
        %v2520 = vunpack.c.h.b16 %v663
        %v2521 = vunpack.c.l.b16 %v664
        %v2522 = vunpack.c.h.b16 %v664
        %v2523 = vunpack.c.l.b16 %v665
        %v2524 = vunpack.c.h.b16 %v665
        %v2525 = vunpack.c.l.b16 %v666
        %v2526 = vunpack.c.h.b16 %v666
        %v2527 = vunpack.c.l.b16 %v667
        %v2528 = vunpack.c.h.b16 %v667
        %v2529 = vunpack.c.l.b16 %v668
        %v2530 = vunpack.c.h.b16 %v668
        %v2531 = vunpack.c.l.b16 %v669
        %v2532 = vunpack.c.h.b16 %v669
        %v2533 = vunpack.c.l.b16 %v670
        %v2534 = vunpack.c.h.b16 %v670
        %v2535 = vunpack.c.l.b16 %v671
        %v2536 = vunpack.c.h.b16 %v671
        %v2537 = vunpack.c.l.b16 %v672
        %v2538 = vunpack.c.h.b16 %v672
        %v2539 = vunpack.c.l.b16 %v673
        %v2540 = vunpack.c.h.b16 %v673
        %v2541 = vunpack.c.l.b16 %v674
        %v2542 = vunpack.c.h.b16 %v674
        %v2543 = vunpack.c.l.b16 %v675
        %v2544 = vunpack.c.h.b16 %v675
        %v2545 = vunpack.c.l.b16 %v676
        %v2546 = vunpack.c.h.b16 %v676
        %v2547 = vunpack.c.l.b16 %v677
        %v2548 = vunpack.c.h.b16 %v677
        %v2549 = vunpack.c.l.b16 %v678
        %v2550 = vunpack.c.h.b16 %v678
        %v2551 = vunpack.c.l.b16 %v679
        %v2552 = vunpack.c.h.b16 %v679
        %v2553 = vunpack.c.l.b16 %v680
        %v2554 = vunpack.c.h.b16 %v680
        %v2555 = vunpack.c.l.b16 %v681
        %v2556 = vunpack.c.h.b16 %v681
        %v2557 = vunpack.c.l.b16 %v682
        %v2558 = vunpack.c.h.b16 %v682
        %v2559 = vunpack.c.l.b16 %v683
        %v2560 = vunpack.c.h.b16 %v683
        %v2561 = vunpack.c.l.b16 %v684
        %v2562 = vunpack.c.h.b16 %v684
        %v2563 = vunpack.c.l.b16 %v685
        %v2564 = vunpack.c.h.b16 %v685
        %v2565 = vunpack.c.l.b16 %v686
        %v2566 = vunpack.c.h.b16 %v686
        %v2567 = vunpack.c.l.b16 %v687
        %v2568 = vunpack.c.h.b16 %v687
        %v2569 = vunpack.c.l.b16 %v688
        %v2570 = vunpack.c.h.b16 %v688
        %v2571 = vunpack.c.l.b16 %v689
        %v2572 = vunpack.c.h.b16 %v689
        %v2573 = vunpack.c.l.b16 %v690
        %v2574 = vunpack.c.h.b16 %v690
        %v2575 = vunpack.c.l.b16 %v691
        %v2576 = vunpack.c.h.b16 %v691
        %v2577 = vunpack.c.l.b16 %v692
        %v2578 = vunpack.c.h.b16 %v692
        %v2579 = vunpack.c.l.b16 %v693
        %v2580 = vunpack.c.h.b16 %v693
        %v2581 = vunpack.c.l.b16 %v694
        %v2582 = vunpack.c.h.b16 %v694
        %v2583 = vunpack.c.l.b16 %v695
        %v2584 = vunpack.c.h.b16 %v695
        %v2585 = vunpack.c.l.b16 %v696
        %v2586 = vunpack.c.h.b16 %v696
        %v2587 = vunpack.c.l.b16 %v697
        %v2588 = vunpack.c.h.b16 %v697
        %v2589 = vunpack.c.l.b16 %v698
        %v2590 = vunpack.c.h.b16 %v698
        %v2591 = vunpack.c.l.b16 %v699
        %v2592 = vunpack.c.h.b16 %v699
        %v2593 = vunpack.c.l.b16 %v700
        %v2594 = vunpack.c.h.b16 %v700
        %v2595 = vunpack.c.l.b16 %v701
        %v2596 = vunpack.c.h.b16 %v701
        %v2597 = vunpack.c.l.b16 %v702
        %v2598 = vunpack.c.h.b16 %v702
        %v2599 = vunpack.c.l.b16 %v703
        %v2600 = vunpack.c.h.b16 %v703
        %v2601 = vunpack.c.l.b16 %v704
        %v2602 = vunpack.c.h.b16 %v704
        %v2603 = vunpack.c.l.b16 %v705
        %v2604 = vunpack.c.h.b16 %v705
        %v2605 = vunpack.c.l.b16 %v706
        %v2606 = vunpack.c.h.b16 %v706
        %v2607 = vunpack.c.l.b16 %v707
        %v2608 = vunpack.c.h.b16 %v707
        %v2609 = vunpack.c.l.b16 %v708
        %v2610 = vunpack.c.h.b16 %v708
        %v2611 = vunpack.c.l.b16 %v709
        %v2612 = vunpack.c.h.b16 %v709
        %v2613 = vunpack.c.l.b16 %v710
        %v2614 = vunpack.c.h.b16 %v710
        %v2615 = vunpack.c.l.b16 %v711
        %v2616 = vunpack.c.h.b16 %v711
        %v2617 = vunpack.c.l.b16 %v712
        %v2618 = vunpack.c.h.b16 %v712
        %v2619 = vunpack.c.l.b16 %v713
        %v2620 = vunpack.c.h.b16 %v713
        %v2621 = vunpack.c.l.b16 %v714
        %v2622 = vunpack.c.h.b16 %v714
        %v2623 = vunpack.c.l.b16 %v715
        %v2624 = vunpack.c.h.b16 %v715
        %v2625 = vunpack.c.l.b16 %v716
        %v2626 = vunpack.c.h.b16 %v716
        %v2627 = vunpack.c.l.b16 %v717
        %v2628 = vunpack.c.h.b16 %v717
        %v2629 = vunpack.c.l.b16 %v718
        %v2630 = vunpack.c.h.b16 %v718
        %v2631 = vunpack.c.l.b16 %v719
        %v2632 = vunpack.c.h.b16 %v719
        %v2633 = vunpack.c.l.b16 %v720
        %v2634 = vunpack.c.h.b16 %v720
        %v2635 = vunpack.c.l.b16 %v721
        %v2636 = vunpack.c.h.b16 %v721
        %v2637 = vunpack.c.l.b16 %v722
        %v2638 = vunpack.c.h.b16 %v722
        %v2639 = vunpack.c.l.b16 %v723
        %v2640 = vunpack.c.h.b16 %v723
        %v2641 = vunpack.c.l.b16 %v724
        %v2642 = vunpack.c.h.b16 %v724
        %v2643 = vunpack.c.l.b16 %v725
        %v2644 = vunpack.c.h.b16 %v725
        %v2645 = vunpack.c.l.b16 %v726
        %v2646 = vunpack.c.h.b16 %v726
        %v2647 = vunpack.c.l.b16 %v727
        %v2648 = vunpack.c.h.b16 %v727
        %v2649 = vunpack.c.l.b16 %v728
        %v2650 = vunpack.c.h.b16 %v728
        %v2651 = vunpack.c.l.b16 %v729
        %v2652 = vunpack.c.h.b16 %v729
        %v2653 = vunpack.c.l.b16 %v730
        %v2654 = vunpack.c.h.b16 %v730
        %v2655 = vunpack.c.l.b16 %v731
        %v2656 = vunpack.c.h.b16 %v731
        %v2657 = vunpack.c.l.b16 %v732
        %v2658 = vunpack.c.h.b16 %v732
        %v2659 = vunpack.c.l.b16 %v733
        %v2660 = vunpack.c.h.b16 %v733
        %v2661 = vunpack.c.l.b16 %v734
        %v2662 = vunpack.c.h.b16 %v734
        %v2663 = vunpack.c.l.b16 %v735
        %v2664 = vunpack.c.h.b16 %v735
        %v2665 = vunpack.c.l.b16 %v736
        %v2666 = vunpack.c.h.b16 %v736
        %v2667 = vunpack.c.l.b16 %v737
        %v2668 = vunpack.c.h.b16 %v737
        %v2669 = vunpack.c.l.b16 %v738
        %v2670 = vunpack.c.h.b16 %v738
        %v2671 = vunpack.c.l.b16 %v739
        %v2672 = vunpack.c.h.b16 %v739
        %v2673 = vunpack.c.l.b16 %v740
        %v2674 = vunpack.c.h.b16 %v740
        %v2675 = vunpack.c.l.b16 %v741
        %v2676 = vunpack.c.h.b16 %v741
        %v2677 = vunpack.c.l.b16 %v742
        %v2678 = vunpack.c.h.b16 %v742
        %v2679 = vunpack.c.l.b16 %v743
        %v2680 = vunpack.c.h.b16 %v743
        %v2681 = vunpack.c.l.b16 %v744
        %v2682 = vunpack.c.h.b16 %v744
        %v2683 = vunpack.c.l.b16 %v745
        %v2684 = vunpack.c.h.b16 %v745
        %v2685 = vunpack.c.l.b16 %v746
        %v2686 = vunpack.c.h.b16 %v746
        %v2687 = vunpack.c.l.b16 %v747
        %v2688 = vunpack.c.h.b16 %v747
        %v2689 = vunpack.c.l.b16 %v748
        %v2690 = vunpack.c.h.b16 %v748
        %v2691 = vunpack.c.l.b16 %v749
        %v2692 = vunpack.c.h.b16 %v749
        %v2693 = vunpack.c.l.b16 %v750
        %v2694 = vunpack.c.h.b16 %v750
        %v2695 = vunpack.c.l.b16 %v751
        %v2696 = vunpack.c.h.b16 %v751
        %v2697 = vunpack.c.l.b16 %v752
        %v2698 = vunpack.c.h.b16 %v752
        %v2699 = vunpack.c.l.b16 %v753
        %v2700 = vunpack.c.h.b16 %v753
        %v2701 = vunpack.c.l.b16 %v754
        %v2702 = vunpack.c.h.b16 %v754
        %v2703 = vunpack.c.l.b16 %v755
        %v2704 = vunpack.c.h.b16 %v755
        %v2705 = vunpack.c.l.b16 %v756
        %v2706 = vunpack.c.h.b16 %v756
        %v2707 = vunpack.c.l.b16 %v757
        %v2708 = vunpack.c.h.b16 %v757
        %v2709 = vunpack.c.l.b16 %v758
        %v2710 = vunpack.c.h.b16 %v758
        %v2711 = vunpack.c.l.b16 %v759
        %v2712 = vunpack.c.h.b16 %v759
        %v2713 = vunpack.c.l.b16 %v760
        %v2714 = vunpack.c.h.b16 %v760
        %v2715 = vunpack.c.l.b16 %v761
        %v2716 = vunpack.c.h.b16 %v761
        %v2717 = vunpack.c.l.b16 %v762
        %v2718 = vunpack.c.h.b16 %v762
        %v2719 = vunpack.c.l.b16 %v763
        %v2720 = vunpack.c.h.b16 %v763
        %v2721 = vunpack.c.l.b16 %v764
        %v2722 = vunpack.c.h.b16 %v764
        %v2723 = vunpack.c.l.b16 %v765
        %v2724 = vunpack.c.h.b16 %v765
        %v2725 = vunpack.c.l.b16 %v766
        %v2726 = vunpack.c.h.b16 %v766
        %v2727 = vunpack.c.l.b16 %v767
        %v2728 = vunpack.c.h.b16 %v767
        %v2729 = vunpack.c.l.b16 %v768
        %v2730 = vunpack.c.h.b16 %v768
        %v2731 = vunpack.c.l.b16 %v769
        %v2732 = vunpack.c.h.b16 %v769
        %v2733 = vunpack.c.l.b16 %v770
        %v2734 = vunpack.c.h.b16 %v770
        %v2735 = vunpack.c.l.b16 %v771
        %v2736 = vunpack.c.h.b16 %v771
        %v2737 = vunpack.c.l.b16 %v772
        %v2738 = vunpack.c.h.b16 %v772
        %v2739 = vunpack.c.l.b16 %v773
        %v2740 = vunpack.c.h.b16 %v773
        %v2741 = vunpack.c.l.b16 %v774
        %v2742 = vunpack.c.h.b16 %v774
        %v2743 = vunpack.c.l.b16 %v775
        %v2744 = vunpack.c.h.b16 %v775
        %v2745 = vunpack.c.l.b16 %v776
        %v2746 = vunpack.c.h.b16 %v776
        %v2747 = vunpack.c.l.b16 %v777
        %v2748 = vunpack.c.h.b16 %v777
        %v2749 = vunpack.c.l.b16 %v778
        %v2750 = vunpack.c.h.b16 %v778
        %v2751 = vunpack.c.l.b16 %v779
        %v2752 = vunpack.c.h.b16 %v779
        %v2753 = vunpack.c.l.b16 %v780
        %v2754 = vunpack.c.h.b16 %v780
        %v2755 = vunpack.c.l.b16 %v781
        %v2756 = vunpack.c.h.b16 %v781
        %v2757 = vunpack.c.l.b16 %v782
        %v2758 = vunpack.c.h.b16 %v782
        %v2759 = vunpack.c.l.b16 %v783
        %v2760 = vunpack.c.h.b16 %v783
        %v2761 = vunpack.c.l.b16 %v784
        %v2762 = vunpack.c.h.b16 %v784
        %v2763 = vunpack.c.l.b16 %v785
        %v2764 = vunpack.c.h.b16 %v785
        %v2765 = vunpack.c.l.b16 %v786
        %v2766 = vunpack.c.h.b16 %v786
        %v2767 = vunpack.c.l.b16 %v787
        %v2768 = vunpack.c.h.b16 %v787
        %v2769 = vunpack.c.l.b16 %v788
        %v2770 = vunpack.c.h.b16 %v788
        %v2771 = vunpack.c.l.b16 %v789
        %v2772 = vunpack.c.h.b16 %v789
        %v2773 = vunpack.c.l.b16 %v790
        %v2774 = vunpack.c.h.b16 %v790
        %v2775 = vunpack.c.l.b16 %v791
        %v2776 = vunpack.c.h.b16 %v791
        %v2777 = vunpack.c.l.b16 %v792
        %v2778 = vunpack.c.h.b16 %v792
        %v2779 = vunpack.c.l.b16 %v793
        %v2780 = vunpack.c.h.b16 %v793
        %v2781 = vunpack.c.l.b16 %v794
        %v2782 = vunpack.c.h.b16 %v794
        %v2783 = vunpack.c.l.b16 %v795
        %v2784 = vunpack.c.h.b16 %v795
        %v2785 = vunpack.c.l.b16 %v796
        %v2786 = vunpack.c.h.b16 %v796
        %v2787 = vunpack.c.l.b16 %v797
        %v2788 = vunpack.c.h.b16 %v797
        %v2789 = vunpack.c.l.b16 %v798
        %v2790 = vunpack.c.h.b16 %v798
        %v2791 = vunpack.c.l.b16 %v799
        %v2792 = vunpack.c.h.b16 %v799
        %v2793 = vunpack.c.l.b16 %v800
        %v2794 = vunpack.c.h.b16 %v800
        %v2795 = vunpack.c.l.b16 %v801
        %v2796 = vunpack.c.h.b16 %v801
        %v2797 = vunpack.c.l.b16 %v802
        %v2798 = vunpack.c.h.b16 %v802
        %v2799 = vunpack.c.l.b16 %v803
        %v2800 = vunpack.c.h.b16 %v803
        %v2801 = vunpack.c.l.b16 %v804
        %v2802 = vunpack.c.h.b16 %v804
        %v2803 = vunpack.c.l.b16 %v805
        %v2804 = vunpack.c.h.b16 %v805
        %v2805 = vunpack.c.l.b16 %v806
        %v2806 = vunpack.c.h.b16 %v806
        %v2807 = vunpack.c.l.b16 %v807
        %v2808 = vunpack.c.h.b16 %v807
        %v2809 = vunpack.c.l.b16 %v808
        %v2810 = vunpack.c.h.b16 %v808
        %v2811 = vunpack.c.l.b16 %v809
        %v2812 = vunpack.c.h.b16 %v809
        %v2813 = vunpack.c.l.b16 %v810
        %v2814 = vunpack.c.h.b16 %v810
        %v2815 = vunpack.c.l.b16 %v811
        %v2816 = vunpack.c.h.b16 %v811
        %v2817 = vunpack.c.l.b16 %v812
        %v2818 = vunpack.c.h.b16 %v812
        %v2819 = vunpack.c.l.b16 %v813
        %v2820 = vunpack.c.h.b16 %v813
        %v2821 = vunpack.c.l.b16 %v814
        %v2822 = vunpack.c.h.b16 %v814
        %v2823 = vunpack.c.l.b16 %v815
        %v2824 = vunpack.c.h.b16 %v815
        %v2825 = vunpack.c.l.b16 %v816
        %v2826 = vunpack.c.h.b16 %v816
        %v2827 = vunpack.c.l.b16 %v817
        %v2828 = vunpack.c.h.b16 %v817
        %v2829 = vunpack.c.l.b16 %v818
        %v2830 = vunpack.c.h.b16 %v818
        %v2831 = vunpack.c.l.b16 %v819
        %v2832 = vunpack.c.h.b16 %v819
        %v2833 = vunpack.c.l.b16 %v820
        %v2834 = vunpack.c.h.b16 %v820
        %v2835 = vunpack.c.l.b16 %v821
        %v2836 = vunpack.c.h.b16 %v821
        %v2837 = vunpack.c.l.b16 %v822
        %v2838 = vunpack.c.h.b16 %v822
        %v2839 = vunpack.c.l.b16 %v823
        %v2840 = vunpack.c.h.b16 %v823
        %v2841 = vunpack.c.l.b16 %v824
        %v2842 = vunpack.c.h.b16 %v824
        %v2843 = vunpack.c.l.b16 %v825
        %v2844 = vunpack.c.h.b16 %v825
        %v2845 = vunpack.c.l.b16 %v826
        %v2846 = vunpack.c.h.b16 %v826
        %v2847 = vunpack.c.l.b16 %v827
        %v2848 = vunpack.c.h.b16 %v827
        %v2849 = vunpack.c.l.b16 %v828
        %v2850 = vunpack.c.h.b16 %v828
        %v2851 = vunpack.c.l.b16 %v829
        %v2852 = vunpack.c.h.b16 %v829
        %v2853 = vunpack.c.l.b16 %v830
        %v2854 = vunpack.c.h.b16 %v830
        %v2855 = vunpack.c.l.b16 %v831
        %v2856 = vunpack.c.h.b16 %v831
        %v2857 = vunpack.c.l.b16 %v832
        %v2858 = vunpack.c.h.b16 %v832
        %v2859 = vunpack.c.l.b16 %v833
        %v2860 = vunpack.c.h.b16 %v833
        %v2861 = vunpack.c.l.b16 %v834
        %v2862 = vunpack.c.h.b16 %v834
        %v2863 = vunpack.c.l.b16 %v835
        %v2864 = vunpack.c.h.b16 %v835
        %v2865 = vunpack.c.l.b16 %v836
        %v2866 = vunpack.c.h.b16 %v836
        %v2867 = vunpack.c.l.b16 %v837
        %v2868 = vunpack.c.h.b16 %v837
        %v2869 = vunpack.c.l.b16 %v838
        %v2870 = vunpack.c.h.b16 %v838
        %v2871 = vunpack.c.l.b16 %v839
        %v2872 = vunpack.c.h.b16 %v839
        %v2873 = vunpack.c.l.b16 %v840
        %v2874 = vunpack.c.h.b16 %v840
        %v2875 = vunpack.c.l.b16 %v841
        %v2876 = vunpack.c.h.b16 %v841
        %v2877 = vunpack.c.l.b16 %v842
        %v2878 = vunpack.c.h.b16 %v842
        %v2879 = vunpack.c.l.b16 %v843
        %v2880 = vunpack.c.h.b16 %v843
        %v2881 = vunpack.c.l.b16 %v844
        %v2882 = vunpack.c.h.b16 %v844
        %v2883 = vunpack.c.l.b16 %v845
        %v2884 = vunpack.c.h.b16 %v845
        %v2885 = vunpack.c.l.b16 %v846
        %v2886 = vunpack.c.h.b16 %v846
        %v2887 = vunpack.c.l.b16 %v847
        %v2888 = vunpack.c.h.b16 %v847
        %v2889 = vunpack.c.l.b16 %v848
        %v2890 = vunpack.c.h.b16 %v848
        %v2891 = vunpack.c.l.b16 %v849
        %v2892 = vunpack.c.h.b16 %v849
        %v2893 = vunpack.c.l.b16 %v850
        %v2894 = vunpack.c.h.b16 %v850
        %v2895 = vunpack.c.l.b16 %v851
        %v2896 = vunpack.c.h.b16 %v851
        %v2897 = vunpack.c.l.b16 %v852
        %v2898 = vunpack.c.h.b16 %v852
        %v2899 = vunpack.c.l.b16 %v853
        %v2900 = vunpack.c.h.b16 %v853
        %v2901 = vunpack.c.l.b16 %v854
        %v2902 = vunpack.c.h.b16 %v854
        %v2903 = vunpack.c.l.b16 %v855
        %v2904 = vunpack.c.h.b16 %v855
        %v2905 = vunpack.c.l.b16 %v856
        %v2906 = vunpack.c.h.b16 %v856
        %v2907 = vunpack.c.l.b16 %v857
        %v2908 = vunpack.c.h.b16 %v857
        %v2909 = vunpack.c.l.b16 %v858
        %v2910 = vunpack.c.h.b16 %v858
        %v2911 = vunpack.c.l.b16 %v859
        %v2912 = vunpack.c.h.b16 %v859
        %v2913 = vunpack.c.l.b16 %v860
        %v2914 = vunpack.c.h.b16 %v860
        %v2915 = vunpack.c.l.b16 %v861
        %v2916 = vunpack.c.h.b16 %v861
        %v2917 = vunpack.c.l.b16 %v862
        %v2918 = vunpack.c.h.b16 %v862
        %v2919 = vunpack.c.l.b16 %v863
        %v2920 = vunpack.c.h.b16 %v863
        %v2921 = vunpack.c.l.b16 %v864
        %v2922 = vunpack.c.h.b16 %v864
        %v2923 = vunpack.c.l.b16 %v865
        %v2924 = vunpack.c.h.b16 %v865
        %v2925 = vunpack.c.l.b16 %v866
        %v2926 = vunpack.c.h.b16 %v866
        %v2927 = vunpack.c.l.b16 %v867
        %v2928 = vunpack.c.h.b16 %v867
        %v2929 = vunpack.c.l.b16 %v868
        %v2930 = vunpack.c.h.b16 %v868
        %v2931 = vunpack.c.l.b16 %v869
        %v2932 = vunpack.c.h.b16 %v869
        %v2933 = vunpack.c.l.b16 %v870
        %v2934 = vunpack.c.h.b16 %v870
        %v2935 = vunpack.c.l.b16 %v871
        %v2936 = vunpack.c.h.b16 %v871
        %v2937 = vunpack.c.l.b16 %v872
        %v2938 = vunpack.c.h.b16 %v872
        %v2939 = vunpack.c.l.b16 %v873
        %v2940 = vunpack.c.h.b16 %v873
        %v2941 = vunpack.c.l.b16 %v874
        %v2942 = vunpack.c.h.b16 %v874
        %v2943 = vunpack.c.l.b16 %v875
        %v2944 = vunpack.c.h.b16 %v875
        %v2945 = vunpack.c.l.b16 %v876
        %v2946 = vunpack.c.h.b16 %v876
        %v2947 = vunpack.c.l.b16 %v877
        %v2948 = vunpack.c.h.b16 %v877
        %v2949 = vunpack.c.l.b16 %v878
        %v2950 = vunpack.c.h.b16 %v878
        %v2951 = vunpack.c.l.b16 %v879
        %v2952 = vunpack.c.h.b16 %v879
        %v2953 = vunpack.c.l.b16 %v880
        %v2954 = vunpack.c.h.b16 %v880
        %v2955 = vunpack.c.l.b16 %v881
        %v2956 = vunpack.c.h.b16 %v881
        %v2957 = vunpack.c.l.b16 %v882
        %v2958 = vunpack.c.h.b16 %v882
        %v2959 = vunpack.c.l.b16 %v883
        %v2960 = vunpack.c.h.b16 %v883
        %v2961 = vunpack.c.l.b16 %v884
        %v2962 = vunpack.c.h.b16 %v884
        %v2963 = vunpack.c.l.b16 %v885
        %v2964 = vunpack.c.h.b16 %v885
        %v2965 = vunpack.c.l.b16 %v886
        %v2966 = vunpack.c.h.b16 %v886
        %v2967 = vunpack.c.l.b16 %v887
        %v2968 = vunpack.c.h.b16 %v887
        %v2969 = vunpack.c.l.b16 %v888
        %v2970 = vunpack.c.h.b16 %v888
        %v2971 = vunpack.c.l.b16 %v889
        %v2972 = vunpack.c.h.b16 %v889
        %v2973 = vunpack.c.l.b16 %v890
        %v2974 = vunpack.c.h.b16 %v890
        %v2975 = vunpack.c.l.b16 %v891
        %v2976 = vunpack.c.h.b16 %v891
        %v2977 = vunpack.c.l.b16 %v892
        %v2978 = vunpack.c.h.b16 %v892
        %v2979 = vunpack.c.l.b16 %v893
        %v2980 = vunpack.c.h.b16 %v893
        %v2981 = vunpack.c.l.b16 %v894
        %v2982 = vunpack.c.h.b16 %v894
        %v2983 = vunpack.c.l.b16 %v895
        %v2984 = vunpack.c.h.b16 %v895
        %v2985 = vunpack.c.l.b16 %v896
        %v2986 = vunpack.c.h.b16 %v896
        %v2987 = vunpack.c.l.b16 %v897
        %v2988 = vunpack.c.h.b16 %v897
        %v2989 = vunpack.c.l.b16 %v898
        %v2990 = vunpack.c.h.b16 %v898
        %v2991 = vunpack.c.l.b16 %v899
        %v2992 = vunpack.c.h.b16 %v899
        %v2993 = vunpack.c.l.b16 %v900
        %v2994 = vunpack.c.h.b16 %v900
        %v2995 = vunpack.c.l.b16 %v901
        %v2996 = vunpack.c.h.b16 %v901
        %v2997 = vunpack.c.l.b16 %v902
        %v2998 = vunpack.c.h.b16 %v902
        %v2999 = vunpack.c.l.b16 %v903
        %v3000 = vunpack.c.h.b16 %v903
        %v3001 = vunpack.c.l.b16 %v904
        %v3002 = vunpack.c.h.b16 %v904
        %v3003 = vunpack.c.l.b16 %v905
        %v3004 = vunpack.c.h.b16 %v905
        %v3005 = vunpack.c.l.b16 %v906
        %v3006 = vunpack.c.h.b16 %v906
        %v3007 = vunpack.c.l.b16 %v907
        %v3008 = vunpack.c.h.b16 %v907
        %v3009 = vunpack.c.l.b16 %v908
        %v3010 = vunpack.c.h.b16 %v908
        %v3011 = vunpack.c.l.b16 %v909
        %v3012 = vunpack.c.h.b16 %v909
        %v3013 = vunpack.c.l.b16 %v910
        %v3014 = vunpack.c.h.b16 %v910
        %v3015 = vunpack.c.l.b16 %v911
        %v3016 = vunpack.c.h.b16 %v911
        %v3017 = vunpack.c.l.b16 %v912
        %v3018 = vunpack.c.h.b16 %v912
        %v3019 = vunpack.c.l.b16 %v913
        %v3020 = vunpack.c.h.b16 %v913
        %v3021 = vunpack.c.l.b16 %v914
        %v3022 = vunpack.c.h.b16 %v914
        %v3023 = vunpack.c.l.b16 %v915
        %v3024 = vunpack.c.h.b16 %v915
        %v3025 = vunpack.c.l.b16 %v916
        %v3026 = vunpack.c.h.b16 %v916
        %v3027 = vunpack.c.l.b16 %v917
        %v3028 = vunpack.c.h.b16 %v917
        %v3029 = vunpack.c.l.b16 %v918
        %v3030 = vunpack.c.h.b16 %v918
        %v3031 = vunpack.c.l.b16 %v919
        %v3032 = vunpack.c.h.b16 %v919
        %v3033 = vunpack.c.l.b16 %v920
        %v3034 = vunpack.c.h.b16 %v920
        %v3035 = vunpack.c.l.b16 %v921
        %v3036 = vunpack.c.h.b16 %v921
        %v3037 = vunpack.c.l.b16 %v922
        %v3038 = vunpack.c.h.b16 %v922
        %v3039 = vunpack.c.l.b16 %v923
        %v3040 = vunpack.c.h.b16 %v923
        %v3041 = vunpack.c.l.b16 %v924
        %v3042 = vunpack.c.h.b16 %v924
        %v3043 = vunpack.c.l.b16 %v925
        %v3044 = vunpack.c.h.b16 %v925
        %v3045 = vunpack.c.l.b16 %v926
        %v3046 = vunpack.c.h.b16 %v926
        %v3047 = vunpack.c.l.b16 %v927
        %v3048 = vunpack.c.h.b16 %v927
        %v3049 = vunpack.c.l.b16 %v928
        %v3050 = vunpack.c.h.b16 %v928
        %v3051 = vunpack.c.l.b16 %v929
        %v3052 = vunpack.c.h.b16 %v929
        %v3053 = vunpack.c.l.b16 %v930
        %v3054 = vunpack.c.h.b16 %v930
        %v3055 = vunpack.c.l.b16 %v931
        %v3056 = vunpack.c.h.b16 %v931
        %v3057 = vunpack.c.l.b16 %v932
        %v3058 = vunpack.c.h.b16 %v932
        %v3059 = vunpack.c.l.b16 %v933
        %v3060 = vunpack.c.h.b16 %v933
        %v3061 = vunpack.c.l.b16 %v934
        %v3062 = vunpack.c.h.b16 %v934
        %v3063 = vunpack.c.l.b16 %v935
        %v3064 = vunpack.c.h.b16 %v935
        %v3065 = vunpack.c.l.b16 %v936
        %v3066 = vunpack.c.h.b16 %v936
        %v3067 = vunpack.c.l.b16 %v937
        %v3068 = vunpack.c.h.b16 %v937
        %v3069 = vunpack.c.l.b16 %v938
        %v3070 = vunpack.c.h.b16 %v938
        %v3071 = vunpack.c.l.b16 %v939
        %v3072 = vunpack.c.h.b16 %v939
        %v3073 = vunpack.c.l.b16 %v940
        %v3074 = vunpack.c.h.b16 %v940
        %v3075 = vunpack.c.l.b16 %v941
        %v3076 = vunpack.c.h.b16 %v941
        %v3077 = vunpack.c.l.b16 %v942
        %v3078 = vunpack.c.h.b16 %v942
        %v3079 = vunpack.c.l.b16 %v943
        %v3080 = vunpack.c.h.b16 %v943
        %v3081 = vunpack.c.l.b16 %v944
        %v3082 = vunpack.c.h.b16 %v944
        %v3083 = vunpack.c.l.b16 %v945
        %v3084 = vunpack.c.h.b16 %v945
        %v3085 = vunpack.c.l.b16 %v946
        %v3086 = vunpack.c.h.b16 %v946
        %v3087 = vunpack.c.l.b16 %v947
        %v3088 = vunpack.c.h.b16 %v947
        %v3089 = vunpack.c.l.b16 %v948
        %v3090 = vunpack.c.h.b16 %v948
        %v3091 = vunpack.c.l.b16 %v949
        %v3092 = vunpack.c.h.b16 %v949
        %v3093 = vunpack.c.l.b16 %v950
        %v3094 = vunpack.c.h.b16 %v950
        %v3095 = vunpack.c.l.b16 %v951
        %v3096 = vunpack.c.h.b16 %v951
        %v3097 = vunpack.c.l.b16 %v952
        %v3098 = vunpack.c.h.b16 %v952
        %v3099 = vunpack.c.l.b16 %v953
        %v3100 = vunpack.c.h.b16 %v953
        %v3101 = vunpack.c.l.b16 %v954
        %v3102 = vunpack.c.h.b16 %v954
        %v3103 = vunpack.c.l.b16 %v955
        %v3104 = vunpack.c.h.b16 %v955
        %v3105 = vunpack.c.l.b16 %v956
        %v3106 = vunpack.c.h.b16 %v956
        %v3107 = vunpack.c.l.b16 %v957
        %v3108 = vunpack.c.h.b16 %v957
        %v3109 = vunpack.c.l.b16 %v958
        %v3110 = vunpack.c.h.b16 %v958
        %v3111 = vunpack.c.l.b16 %v959
        %v3112 = vunpack.c.h.b16 %v959
        %v3113 = vunpack.c.l.b16 %v960
        %v3114 = vunpack.c.h.b16 %v960
        %v3115 = vunpack.c.l.b16 %v961
        %v3116 = vunpack.c.h.b16 %v961
        %v3117 = vunpack.c.l.b16 %v962
        %v3118 = vunpack.c.h.b16 %v962
        %v3119 = vunpack.c.l.b16 %v963
        %v3120 = vunpack.c.h.b16 %v963
        %v3121 = vunpack.c.l.b16 %v964
        %v3122 = vunpack.c.h.b16 %v964
        %v3123 = vunpack.c.l.b16 %v965
        %v3124 = vunpack.c.h.b16 %v965
        %v3125 = vunpack.c.l.b16 %v966
        %v3126 = vunpack.c.h.b16 %v966
        %v3127 = vunpack.c.l.b16 %v967
        %v3128 = vunpack.c.h.b16 %v967
        %v3129 = vunpack.c.l.b16 %v968
        %v3130 = vunpack.c.h.b16 %v968
        %v3131 = vunpack.c.l.b16 %v969
        %v3132 = vunpack.c.h.b16 %v969
        %v3133 = vunpack.c.l.b16 %v970
        %v3134 = vunpack.c.h.b16 %v970
        %v3135 = vunpack.c.l.b16 %v971
        %v3136 = vunpack.c.h.b16 %v971
        %v3137 = vunpack.c.l.b16 %v972
        %v3138 = vunpack.c.h.b16 %v972
        %v3139 = vunpack.c.l.b16 %v973
        %v3140 = vunpack.c.h.b16 %v973
        %v3141 = vunpack.c.l.b16 %v974
        %v3142 = vunpack.c.h.b16 %v974
        %v3143 = vunpack.c.l.b16 %v975
        %v3144 = vunpack.c.h.b16 %v975
        %v3145 = vunpack.c.l.b16 %v976
        %v3146 = vunpack.c.h.b16 %v976
        %v3147 = vunpack.c.l.b16 %v977
        %v3148 = vunpack.c.h.b16 %v977
        %v3149 = vunpack.c.l.b16 %v978
        %v3150 = vunpack.c.h.b16 %v978
        %v3151 = vunpack.c.l.b16 %v979
        %v3152 = vunpack.c.h.b16 %v979
        %v3153 = vunpack.c.l.b16 %v980
        %v3154 = vunpack.c.h.b16 %v980
        %v3155 = vunpack.c.l.b16 %v981
        %v3156 = vunpack.c.h.b16 %v981
        %v3157 = vunpack.c.l.b16 %v982
        %v3158 = vunpack.c.h.b16 %v982
        %v3159 = vunpack.c.l.b16 %v983
        %v3160 = vunpack.c.h.b16 %v983
        %v3161 = vunpack.c.l.b16 %v984
        %v3162 = vunpack.c.h.b16 %v984
        %v3163 = vunpack.c.l.b16 %v985
        %v3164 = vunpack.c.h.b16 %v985
        %v3165 = vunpack.c.l.b16 %v986
        %v3166 = vunpack.c.h.b16 %v986
        %v3167 = vunpack.c.l.b16 %v987
        %v3168 = vunpack.c.h.b16 %v987
        %v3169 = vunpack.c.l.b16 %v988
        %v3170 = vunpack.c.h.b16 %v988
        %v3171 = vunpack.c.l.b16 %v989
        %v3172 = vunpack.c.h.b16 %v989
        %v3173 = vunpack.c.l.b16 %v990
        %v3174 = vunpack.c.h.b16 %v990
        %v3175 = vunpack.c.l.b16 %v991
        %v3176 = vunpack.c.h.b16 %v991
        %v3177 = vunpack.c.l.b16 %v992
        %v3178 = vunpack.c.h.b16 %v992
        %v3179 = vunpack.c.l.b16 %v993
        %v3180 = vunpack.c.h.b16 %v993
        %v3181 = vunpack.c.l.b16 %v994
        %v3182 = vunpack.c.h.b16 %v994
        %v3183 = vunpack.c.l.b16 %v995
        %v3184 = vunpack.c.h.b16 %v995
        %v3185 = vunpack.c.l.b16 %v996
        %v3186 = vunpack.c.h.b16 %v996
        %v3187 = vunpack.c.l.b16 %v997
        %v3188 = vunpack.c.h.b16 %v997
        %v3189 = vunpack.c.l.b16 %v998
        %v3190 = vunpack.c.h.b16 %v998
        %v3191 = vunpack.c.l.b16 %v999
        %v3192 = vunpack.c.h.b16 %v999
        %v3193 = vunpack.c.l.b16 %v1000
        %v3194 = vunpack.c.h.b16 %v1000
        %v3195 = vunpack.c.l.b16 %v1001
        %v3196 = vunpack.c.h.b16 %v1001
        %v3197 = vunpack.c.l.b16 %v1002
        %v3198 = vunpack.c.h.b16 %v1002
        %v3199 = vunpack.c.l.b16 %v1003
        %v3200 = vunpack.c.h.b16 %v1003
        %v3201 = vunpack.c.l.b16 %v1004
        %v3202 = vunpack.c.h.b16 %v1004
        %v3203 = vunpack.c.l.b16 %v1005
        %v3204 = vunpack.c.h.b16 %v1005
        %v3205 = vunpack.c.l.b16 %v1006
        %v3206 = vunpack.c.h.b16 %v1006
        %v3207 = vunpack.c.l.b16 %v1007
        %v3208 = vunpack.c.h.b16 %v1007
        %v3209 = vunpack.c.l.b16 %v1008
        %v3210 = vunpack.c.h.b16 %v1008
        %v3211 = vunpack.c.l.b16 %v1009
        %v3212 = vunpack.c.h.b16 %v1009
        %v3213 = vunpack.c.l.b16 %v1010
        %v3214 = vunpack.c.h.b16 %v1010
        %v3215 = vunpack.c.l.b16 %v1011
        %v3216 = vunpack.c.h.b16 %v1011
        %v3217 = vunpack.c.l.b16 %v1012
        %v3218 = vunpack.c.h.b16 %v1012
        %v3219 = vunpack.c.l.b16 %v1013
        %v3220 = vunpack.c.h.b16 %v1013
        %v3221 = vunpack.c.l.b16 %v1014
        %v3222 = vunpack.c.h.b16 %v1014
        %v3223 = vunpack.c.l.b16 %v1015
        %v3224 = vunpack.c.h.b16 %v1015
        %v3225 = vunpack.c.l.b16 %v1016
        %v3226 = vunpack.c.h.b16 %v1016
        %v3227 = vunpack.c.l.b16 %v1017
        %v3228 = vunpack.c.h.b16 %v1017
        %v3229 = vunpack.c.l.b16 %v1018
        %v3230 = vunpack.c.h.b16 %v1018
        %v3231 = vunpack.c.l.b16 %v1019
        %v3232 = vunpack.c.h.b16 %v1019
        %v3233 = vunpack.c.l.b16 %v1020
        %v3234 = vunpack.c.h.b16 %v1020
        %v3235 = vunpack.c.l.b16 %v1021
        %v3236 = vunpack.c.h.b16 %v1021
        %v3237 = vunpack.c.l.b16 %v1022
        %v3238 = vunpack.c.h.b16 %v1022
        %v3239 = vunpack.c.l.b16 %v1023
        %v3240 = vunpack.c.h.b16 %v1023
        %v3241 = vunpack.c.l.b16 %v1024
        %v3242 = vunpack.c.h.b16 %v1024
        %v3243 = vunpack.c.l.b16 %v1025
        %v3244 = vunpack.c.h.b16 %v1025
        %v3245 = vunpack.c.l.b16 %v1026
        %v3246 = vunpack.c.h.b16 %v1026
        %v3247 = vunpack.c.l.b16 %v1027
        %v3248 = vunpack.c.h.b16 %v1027
        %v3249 = vunpack.c.l.b16 %v1028
        %v3250 = vunpack.c.h.b16 %v1028
        %v3251 = vunpack.c.l.b16 %v1029
        %v3252 = vunpack.c.h.b16 %v1029
        %v3253 = vunpack.c.l.b16 %v1030
        %v3254 = vunpack.c.h.b16 %v1030
        %v3255 = vunpack.c.l.b16 %v1031
        %v3256 = vunpack.c.h.b16 %v1031
        %v3257 = vunpack.c.l.b16 %v1032
        %v3258 = vunpack.c.h.b16 %v1032
        %v3259 = vunpack.c.l.b16 %v1033
        %v3260 = vunpack.c.h.b16 %v1033
        %v3261 = vunpack.c.l.b16 %v1034
        %v3262 = vunpack.c.h.b16 %v1034
        %v3263 = vunpack.c.l.b16 %v1035
        %v3264 = vunpack.c.h.b16 %v1035
        %v3265 = vunpack.c.l.b16 %v1036
        %v3266 = vunpack.c.h.b16 %v1036
        %v3267 = vunpack.c.l.b16 %v1037
        %v3268 = vunpack.c.h.b16 %v1037
        %v3269 = vunpack.c.l.b16 %v1038
        %v3270 = vunpack.c.h.b16 %v1038
        %v3271 = vunpack.c.l.b16 %v1039
        %v3272 = vunpack.c.h.b16 %v1039
        %v3273 = vunpack.c.l.b16 %v1040
        %v3274 = vunpack.c.h.b16 %v1040
        %v3275 = vunpack.c.l.b16 %v1041
        %v3276 = vunpack.c.h.b16 %v1041
        %v3277 = vunpack.c.l.b16 %v1042
        %v3278 = vunpack.c.h.b16 %v1042
        %v3279 = vunpack.c.l.b16 %v1043
        %v3280 = vunpack.c.h.b16 %v1043
        %v3281 = vunpack.c.l.b16 %v1044
        %v3282 = vunpack.c.h.b16 %v1044
        %v3283 = vunpack.c.l.b16 %v1045
        %v3284 = vunpack.c.h.b16 %v1045
        %v3285 = vunpack.c.l.b16 %v1046
        %v3286 = vunpack.c.h.b16 %v1046
        %v3287 = vunpack.c.l.b16 %v1047
        %v3288 = vunpack.c.h.b16 %v1047
        %v3289 = vunpack.c.l.b16 %v1048
        %v3290 = vunpack.c.h.b16 %v1048
        %v3291 = vunpack.c.l.b16 %v1049
        %v3292 = vunpack.c.h.b16 %v1049
        %v3293 = vunpack.c.l.b16 %v1050
        %v3294 = vunpack.c.h.b16 %v1050
        %v3295 = vunpack.c.l.b16 %v1051
        %v3296 = vunpack.c.h.b16 %v1051
        %v3297 = vunpack.c.l.b16 %v1052
        %v3298 = vunpack.c.h.b16 %v1052
        %v3299 = vunpack.c.l.b16 %v1053
        %v3300 = vunpack.c.h.b16 %v1053
        %v3301 = vunpack.c.l.b16 %v1054
        %v3302 = vunpack.c.h.b16 %v1054
        %v3303 = vunpack.c.l.b16 %v1055
        %v3304 = vunpack.c.h.b16 %v1055
        %v3305 = vunpack.c.l.b16 %v1056
        %v3306 = vunpack.c.h.b16 %v1056
        %v3307 = vunpack.c.l.b16 %v1057
        %v3308 = vunpack.c.h.b16 %v1057
        %v3309 = vunpack.c.l.b16 %v1058
        %v3310 = vunpack.c.h.b16 %v1058
        %v3311 = vunpack.c.l.b16 %v1059
        %v3312 = vunpack.c.h.b16 %v1059
        %v3313 = vunpack.c.l.b16 %v1060
        %v3314 = vunpack.c.h.b16 %v1060
        %v3315 = vunpack.c.l.b16 %v1061
        %v3316 = vunpack.c.h.b16 %v1061
        %v3317 = vunpack.c.l.b16 %v1062
        %v3318 = vunpack.c.h.b16 %v1062
        %v3319 = vunpack.c.l.b16 %v1063
        %v3320 = vunpack.c.h.b16 %v1063
        %v3321 = vunpack.c.l.b16 %v1064
        %v3322 = vunpack.c.h.b16 %v1064
        %v3323 = vunpack.c.l.b16 %v1065
        %v3324 = vunpack.c.h.b16 %v1065
        %v3325 = vunpack.c.l.b16 %v1066
        %v3326 = vunpack.c.h.b16 %v1066
        %v3327 = vunpack.c.l.b16 %v1067
        %v3328 = vunpack.c.h.b16 %v1067
        %v3329 = vunpack.c.l.b16 %v1068
        %v3330 = vunpack.c.h.b16 %v1068
        %v3331 = vunpack.c.l.b16 %v1069
        %v3332 = vunpack.c.h.b16 %v1069
        %v3333 = vunpack.c.l.b16 %v1070
        %v3334 = vunpack.c.h.b16 %v1070
        %v3335 = vunpack.c.l.b16 %v1071
        %v3336 = vunpack.c.h.b16 %v1071
        %v3337 = vunpack.c.l.b16 %v1072
        %v3338 = vunpack.c.h.b16 %v1072
        %v3339 = vunpack.c.l.b16 %v1073
        %v3340 = vunpack.c.h.b16 %v1073
        %v3341 = vunpack.c.l.b16 %v1074
        %v3342 = vunpack.c.h.b16 %v1074
        %v3343 = vunpack.c.l.b16 %v1075
        %v3344 = vunpack.c.h.b16 %v1075
        %v3345 = vunpack.c.l.b16 %v1076
        %v3346 = vunpack.c.h.b16 %v1076
        %v3347 = vunpack.c.l.b16 %v1077
        %v3348 = vunpack.c.h.b16 %v1077
        %v3349 = vunpack.c.l.b16 %v1078
        %v3350 = vunpack.c.h.b16 %v1078
        %v3351 = vunpack.c.l.b16 %v1079
        %v3352 = vunpack.c.h.b16 %v1079
        %v3353 = vunpack.c.l.b16 %v1080
        %v3354 = vunpack.c.h.b16 %v1080
        %v3355 = vunpack.c.l.b16 %v1081
        %v3356 = vunpack.c.h.b16 %v1081
        %v3357 = vunpack.c.l.b16 %v1082
        %v3358 = vunpack.c.h.b16 %v1082
        %v3359 = vunpack.c.l.b16 %v1083
        %v3360 = vunpack.c.h.b16 %v1083
        %v3361 = vunpack.c.l.b16 %v1084
        %v3362 = vunpack.c.h.b16 %v1084
        %v3363 = vunpack.c.l.b16 %v1085
        %v3364 = vunpack.c.h.b16 %v1085
        %v3365 = vunpack.c.l.b16 %v1086
        %v3366 = vunpack.c.h.b16 %v1086
        %v3367 = vunpack.c.l.b16 %v1087
        %v3368 = vunpack.c.h.b16 %v1087
        %v3369 = vunpack.c.l.b16 %v1088
        %v3370 = vunpack.c.h.b16 %v1088
        %v3371 = vunpack.c.l.b16 %v1089
        %v3372 = vunpack.c.h.b16 %v1089
        %v3373 = vunpack.c.l.b16 %v1090
        %v3374 = vunpack.c.h.b16 %v1090
        %v3375 = vunpack.c.l.b16 %v1091
        %v3376 = vunpack.c.h.b16 %v1091
        %v3377 = vunpack.c.l.b16 %v1092
        %v3378 = vunpack.c.h.b16 %v1092
        %v3379 = vunpack.c.l.b16 %v1093
        %v3380 = vunpack.c.h.b16 %v1093
        %v3381 = vunpack.c.l.b16 %v1094
        %v3382 = vunpack.c.h.b16 %v1094
        %v3383 = vunpack.c.l.b16 %v1095
        %v3384 = vunpack.c.h.b16 %v1095
        %v3385 = vunpack.c.l.b16 %v1096
        %v3386 = vunpack.c.h.b16 %v1096
        %v3387 = vunpack.c.l.b16 %v1097
        %v3388 = vunpack.c.h.b16 %v1097
        %v3389 = vunpack.c.l.b16 %v1098
        %v3390 = vunpack.c.h.b16 %v1098
        %v3391 = vunpack.c.l.b16 %v1099
        %v3392 = vunpack.c.h.b16 %v1099
        %v3393 = vunpack.c.l.b16 %v1100
        %v3394 = vunpack.c.h.b16 %v1100
        %v3395 = vunpack.c.l.b16 %v1101
        %v3396 = vunpack.c.h.b16 %v1101
        %v3397 = vunpack.c.l.b16 %v1102
        %v3398 = vunpack.c.h.b16 %v1102
        %v3399 = vunpack.c.l.b16 %v1103
        %v3400 = vunpack.c.h.b16 %v1103
        %v3401 = vunpack.c.l.b16 %v1104
        %v3402 = vunpack.c.h.b16 %v1104
        %v3403 = vunpack.c.l.b16 %v1105
        %v3404 = vunpack.c.h.b16 %v1105
        %v3405 = vunpack.c.l.b16 %v1106
        %v3406 = vunpack.c.h.b16 %v1106
        %v3407 = vunpack.c.l.b16 %v1107
        %v3408 = vunpack.c.h.b16 %v1107
        %v3409 = vunpack.c.l.b16 %v1108
        %v3410 = vunpack.c.h.b16 %v1108
        %v3411 = vunpack.c.l.b16 %v1109
        %v3412 = vunpack.c.h.b16 %v1109
        %v3413 = vunpack.c.l.b16 %v1110
        %v3414 = vunpack.c.h.b16 %v1110
        %v3415 = vpack.c.b16 %v1883, %v1879
        %v3416 = vpack.c.b16 %v1884, %v1880
        %v3417 = vpack.c.b16 %v1885, %v1881
        %v3418 = vpack.c.b16 %v1886, %v1882
        %v3419 = vpack.c.b16 %v1891, %v1887
        %v3420 = vpack.c.b16 %v1892, %v1888
        %v3421 = vpack.c.b16 %v1893, %v1889
        %v3422 = vpack.c.b16 %v1894, %v1890
        %v3423 = vpack.c.b16 %v1899, %v1895
        %v3424 = vpack.c.b16 %v1900, %v1896
        %v3425 = vpack.c.b16 %v1901, %v1897
        %v3426 = vpack.c.b16 %v1902, %v1898
        %v3427 = vpack.c.b16 %v1907, %v1903
        %v3428 = vpack.c.b16 %v1908, %v1904
        %v3429 = vpack.c.b16 %v1909, %v1905
        %v3430 = vpack.c.b16 %v1910, %v1906
        %v3431 = vpack.c.b16 %v1915, %v1911
        %v3432 = vpack.c.b16 %v1916, %v1912
        %v3433 = vpack.c.b16 %v1917, %v1913
        %v3434 = vpack.c.b16 %v1918, %v1914
        %v3435 = vpack.c.b16 %v1923, %v1919
        %v3436 = vpack.c.b16 %v1924, %v1920
        %v3437 = vpack.c.b16 %v1925, %v1921
        %v3438 = vpack.c.b16 %v1926, %v1922
        %v3439 = vpack.c.b16 %v1931, %v1927
        %v3440 = vpack.c.b16 %v1932, %v1928
        %v3441 = vpack.c.b16 %v1933, %v1929
        %v3442 = vpack.c.b16 %v1934, %v1930
        %v3443 = vpack.c.b16 %v1939, %v1935
        %v3444 = vpack.c.b16 %v1940, %v1936
        %v3445 = vpack.c.b16 %v1941, %v1937
        %v3446 = vpack.c.b16 %v1942, %v1938
        %v3447 = vpack.c.b16 %v1947, %v1943
        %v3448 = vpack.c.b16 %v1948, %v1944
        %v3449 = vpack.c.b16 %v1949, %v1945
        %v3450 = vpack.c.b16 %v1950, %v1946
        %v3451 = vpack.c.b16 %v1955, %v1951
        %v3452 = vpack.c.b16 %v1956, %v1952
        %v3453 = vpack.c.b16 %v1957, %v1953
        %v3454 = vpack.c.b16 %v1958, %v1954
        %v3455 = vpack.c.b16 %v1963, %v1959
        %v3456 = vpack.c.b16 %v1964, %v1960
        %v3457 = vpack.c.b16 %v1965, %v1961
        %v3458 = vpack.c.b16 %v1966, %v1962
        %v3459 = vpack.c.b16 %v1971, %v1967
        %v3460 = vpack.c.b16 %v1972, %v1968
        %v3461 = vpack.c.b16 %v1973, %v1969
        %v3462 = vpack.c.b16 %v1974, %v1970
        %v3463 = vpack.c.b16 %v1979, %v1975
        %v3464 = vpack.c.b16 %v1980, %v1976
        %v3465 = vpack.c.b16 %v1981, %v1977
        %v3466 = vpack.c.b16 %v1982, %v1978
        %v3467 = vpack.c.b16 %v1987, %v1983
        %v3468 = vpack.c.b16 %v1988, %v1984
        %v3469 = vpack.c.b16 %v1989, %v1985
        %v3470 = vpack.c.b16 %v1990, %v1986
        %v3471 = vpack.c.b16 %v1995, %v1991
        %v3472 = vpack.c.b16 %v1996, %v1992
        %v3473 = vpack.c.b16 %v1997, %v1993
        %v3474 = vpack.c.b16 %v1998, %v1994
        %v3475 = vpack.c.b16 %v2003, %v1999
        %v3476 = vpack.c.b16 %v2004, %v2000
        %v3477 = vpack.c.b16 %v2005, %v2001
        %v3478 = vpack.c.b16 %v2006, %v2002
        %v3479 = vpack.c.b16 %v2011, %v2007
        %v3480 = vpack.c.b16 %v2012, %v2008
        %v3481 = vpack.c.b16 %v2013, %v2009
        %v3482 = vpack.c.b16 %v2014, %v2010
        %v3483 = vpack.c.b16 %v2019, %v2015
        %v3484 = vpack.c.b16 %v2020, %v2016
        %v3485 = vpack.c.b16 %v2021, %v2017
        %v3486 = vpack.c.b16 %v2022, %v2018
        %v3487 = vpack.c.b16 %v2027, %v2023
        %v3488 = vpack.c.b16 %v2028, %v2024
        %v3489 = vpack.c.b16 %v2029, %v2025
        %v3490 = vpack.c.b16 %v2030, %v2026
        %v3491 = vpack.c.b16 %v2035, %v2031
        %v3492 = vpack.c.b16 %v2036, %v2032
        %v3493 = vpack.c.b16 %v2037, %v2033
        %v3494 = vpack.c.b16 %v2038, %v2034
        %v3495 = vpack.c.b16 %v2043, %v2039
        %v3496 = vpack.c.b16 %v2044, %v2040
        %v3497 = vpack.c.b16 %v2045, %v2041
        %v3498 = vpack.c.b16 %v2046, %v2042
        %v3499 = vpack.c.b16 %v2051, %v2047
        %v3500 = vpack.c.b16 %v2052, %v2048
        %v3501 = vpack.c.b16 %v2053, %v2049
        %v3502 = vpack.c.b16 %v2054, %v2050
        %v3503 = vpack.c.b16 %v2059, %v2055
        %v3504 = vpack.c.b16 %v2060, %v2056
        %v3505 = vpack.c.b16 %v2061, %v2057
        %v3506 = vpack.c.b16 %v2062, %v2058
        %v3507 = vpack.c.b16 %v2067, %v2063
        %v3508 = vpack.c.b16 %v2068, %v2064
        %v3509 = vpack.c.b16 %v2069, %v2065
        %v3510 = vpack.c.b16 %v2070, %v2066
        %v3511 = vpack.c.b16 %v2075, %v2071
        %v3512 = vpack.c.b16 %v2076, %v2072
        %v3513 = vpack.c.b16 %v2077, %v2073
        %v3514 = vpack.c.b16 %v2078, %v2074
        %v3515 = vpack.c.b16 %v2083, %v2079
        %v3516 = vpack.c.b16 %v2084, %v2080
        %v3517 = vpack.c.b16 %v2085, %v2081
        %v3518 = vpack.c.b16 %v2086, %v2082
        %v3519 = vpack.c.b16 %v2091, %v2087
        %v3520 = vpack.c.b16 %v2092, %v2088
        %v3521 = vpack.c.b16 %v2093, %v2089
        %v3522 = vpack.c.b16 %v2094, %v2090
        %v3523 = vpack.c.b16 %v2099, %v2095
        %v3524 = vpack.c.b16 %v2100, %v2096
        %v3525 = vpack.c.b16 %v2101, %v2097
        %v3526 = vpack.c.b16 %v2102, %v2098
        %v3527 = vpack.c.b16 %v2107, %v2103
        %v3528 = vpack.c.b16 %v2108, %v2104
        %v3529 = vpack.c.b16 %v2109, %v2105
        %v3530 = vpack.c.b16 %v2110, %v2106
        %v3531 = vpack.c.b16 %v2115, %v2111
        %v3532 = vpack.c.b16 %v2116, %v2112
        %v3533 = vpack.c.b16 %v2117, %v2113
        %v3534 = vpack.c.b16 %v2118, %v2114
        %v3535 = vpack.c.b16 %v2123, %v2119
        %v3536 = vpack.c.b16 %v2124, %v2120
        %v3537 = vpack.c.b16 %v2125, %v2121
        %v3538 = vpack.c.b16 %v2126, %v2122
        %v3539 = vpack.c.b16 %v2131, %v2127
        %v3540 = vpack.c.b16 %v2132, %v2128
        %v3541 = vpack.c.b16 %v2133, %v2129
        %v3542 = vpack.c.b16 %v2134, %v2130
        %v3543 = vpack.c.b16 %v2139, %v2135
        %v3544 = vpack.c.b16 %v2140, %v2136
        %v3545 = vpack.c.b16 %v2141, %v2137
        %v3546 = vpack.c.b16 %v2142, %v2138
        %v3547 = vpack.c.b16 %v2147, %v2143
        %v3548 = vpack.c.b16 %v2148, %v2144
        %v3549 = vpack.c.b16 %v2149, %v2145
        %v3550 = vpack.c.b16 %v2150, %v2146
        %v3551 = vpack.c.b16 %v2155, %v2151
        %v3552 = vpack.c.b16 %v2156, %v2152
        %v3553 = vpack.c.b16 %v2157, %v2153
        %v3554 = vpack.c.b16 %v2158, %v2154
        %v3555 = vpack.c.b16 %v2163, %v2159
        %v3556 = vpack.c.b16 %v2164, %v2160
        %v3557 = vpack.c.b16 %v2165, %v2161
        %v3558 = vpack.c.b16 %v2166, %v2162
        %v3559 = vpack.c.b16 %v2171, %v2167
        %v3560 = vpack.c.b16 %v2172, %v2168
        %v3561 = vpack.c.b16 %v2173, %v2169
        %v3562 = vpack.c.b16 %v2174, %v2170
        %v3563 = vpack.c.b16 %v2179, %v2175
        %v3564 = vpack.c.b16 %v2180, %v2176
        %v3565 = vpack.c.b16 %v2181, %v2177
        %v3566 = vpack.c.b16 %v2182, %v2178
        %v3567 = vpack.c.b16 %v2187, %v2183
        %v3568 = vpack.c.b16 %v2188, %v2184
        %v3569 = vpack.c.b16 %v2189, %v2185
        %v3570 = vpack.c.b16 %v2190, %v2186
        %v3571 = vpack.c.b16 %v2195, %v2191
        %v3572 = vpack.c.b16 %v2196, %v2192
        %v3573 = vpack.c.b16 %v2197, %v2193
        %v3574 = vpack.c.b16 %v2198, %v2194
        %v3575 = vpack.c.b16 %v2203, %v2199
        %v3576 = vpack.c.b16 %v2204, %v2200
        %v3577 = vpack.c.b16 %v2205, %v2201
        %v3578 = vpack.c.b16 %v2206, %v2202
        %v3579 = vpack.c.b16 %v2211, %v2207
        %v3580 = vpack.c.b16 %v2212, %v2208
        %v3581 = vpack.c.b16 %v2213, %v2209
        %v3582 = vpack.c.b16 %v2214, %v2210
        %v3583 = vpack.c.b16 %v2219, %v2215
        %v3584 = vpack.c.b16 %v2220, %v2216
        %v3585 = vpack.c.b16 %v2221, %v2217
        %v3586 = vpack.c.b16 %v2222, %v2218
        %v3587 = vpack.c.b16 %v2227, %v2223
        %v3588 = vpack.c.b16 %v2228, %v2224
        %v3589 = vpack.c.b16 %v2229, %v2225
        %v3590 = vpack.c.b16 %v2230, %v2226
        %v3591 = vpack.c.b16 %v2235, %v2231
        %v3592 = vpack.c.b16 %v2236, %v2232
        %v3593 = vpack.c.b16 %v2237, %v2233
        %v3594 = vpack.c.b16 %v2238, %v2234
        %v3595 = vpack.c.b16 %v2243, %v2239
        %v3596 = vpack.c.b16 %v2244, %v2240
        %v3597 = vpack.c.b16 %v2245, %v2241
        %v3598 = vpack.c.b16 %v2246, %v2242
        %v3599 = vpack.c.b16 %v2251, %v2247
        %v3600 = vpack.c.b16 %v2252, %v2248
        %v3601 = vpack.c.b16 %v2253, %v2249
        %v3602 = vpack.c.b16 %v2254, %v2250
        %v3603 = vpack.c.b16 %v2259, %v2255
        %v3604 = vpack.c.b16 %v2260, %v2256
        %v3605 = vpack.c.b16 %v2261, %v2257
        %v3606 = vpack.c.b16 %v2262, %v2258
        %v3607 = vpack.c.b16 %v2267, %v2263
        %v3608 = vpack.c.b16 %v2268, %v2264
        %v3609 = vpack.c.b16 %v2269, %v2265
        %v3610 = vpack.c.b16 %v2270, %v2266
        %v3611 = vpack.c.b16 %v2275, %v2271
        %v3612 = vpack.c.b16 %v2276, %v2272
        %v3613 = vpack.c.b16 %v2277, %v2273
        %v3614 = vpack.c.b16 %v2278, %v2274
        %v3615 = vpack.c.b16 %v2283, %v2279
        %v3616 = vpack.c.b16 %v2284, %v2280
        %v3617 = vpack.c.b16 %v2285, %v2281
        %v3618 = vpack.c.b16 %v2286, %v2282
        %v3619 = vpack.c.b16 %v2291, %v2287
        %v3620 = vpack.c.b16 %v2292, %v2288
        %v3621 = vpack.c.b16 %v2293, %v2289
        %v3622 = vpack.c.b16 %v2294, %v2290
        %v3623 = vpack.c.b16 %v2299, %v2295
        %v3624 = vpack.c.b16 %v2300, %v2296
        %v3625 = vpack.c.b16 %v2301, %v2297
        %v3626 = vpack.c.b16 %v2302, %v2298
        %v3627 = vpack.c.b16 %v2307, %v2303
        %v3628 = vpack.c.b16 %v2308, %v2304
        %v3629 = vpack.c.b16 %v2309, %v2305
        %v3630 = vpack.c.b16 %v2310, %v2306
        %v3631 = vpack.c.b16 %v2315, %v2311
        %v3632 = vpack.c.b16 %v2316, %v2312
        %v3633 = vpack.c.b16 %v2317, %v2313
        %v3634 = vpack.c.b16 %v2318, %v2314
        %v3635 = vpack.c.b16 %v2323, %v2319
        %v3636 = vpack.c.b16 %v2324, %v2320
        %v3637 = vpack.c.b16 %v2325, %v2321
        %v3638 = vpack.c.b16 %v2326, %v2322
        %v3639 = vpack.c.b16 %v2331, %v2327
        %v3640 = vpack.c.b16 %v2332, %v2328
        %v3641 = vpack.c.b16 %v2333, %v2329
        %v3642 = vpack.c.b16 %v2334, %v2330
        %v3643 = vpack.c.b16 %v2339, %v2335
        %v3644 = vpack.c.b16 %v2340, %v2336
        %v3645 = vpack.c.b16 %v2341, %v2337
        %v3646 = vpack.c.b16 %v2342, %v2338
        %v3647 = vpack.c.b16 %v2347, %v2343
        %v3648 = vpack.c.b16 %v2348, %v2344
        %v3649 = vpack.c.b16 %v2349, %v2345
        %v3650 = vpack.c.b16 %v2350, %v2346
        %v3651 = vpack.c.b16 %v2355, %v2351
        %v3652 = vpack.c.b16 %v2356, %v2352
        %v3653 = vpack.c.b16 %v2357, %v2353
        %v3654 = vpack.c.b16 %v2358, %v2354
        %v3655 = vpack.c.b16 %v2363, %v2359
        %v3656 = vpack.c.b16 %v2364, %v2360
        %v3657 = vpack.c.b16 %v2365, %v2361
        %v3658 = vpack.c.b16 %v2366, %v2362
        %v3659 = vpack.c.b16 %v2371, %v2367
        %v3660 = vpack.c.b16 %v2372, %v2368
        %v3661 = vpack.c.b16 %v2373, %v2369
        %v3662 = vpack.c.b16 %v2374, %v2370
        %v3663 = vpack.c.b16 %v2379, %v2375
        %v3664 = vpack.c.b16 %v2380, %v2376
        %v3665 = vpack.c.b16 %v2381, %v2377
        %v3666 = vpack.c.b16 %v2382, %v2378
        %v3667 = vpack.c.b16 %v2387, %v2383
        %v3668 = vpack.c.b16 %v2388, %v2384
        %v3669 = vpack.c.b16 %v2389, %v2385
        %v3670 = vpack.c.b16 %v2390, %v2386
        %v3671 = vpack.c.b16 %v2395, %v2391
        %v3672 = vpack.c.b16 %v2396, %v2392
        %v3673 = vpack.c.b16 %v2397, %v2393
        %v3674 = vpack.c.b16 %v2398, %v2394
        %v3675 = vpack.c.b16 %v2403, %v2399
        %v3676 = vpack.c.b16 %v2404, %v2400
        %v3677 = vpack.c.b16 %v2405, %v2401
        %v3678 = vpack.c.b16 %v2406, %v2402
        %v3679 = vpack.c.b16 %v2411, %v2407
        %v3680 = vpack.c.b16 %v2412, %v2408
        %v3681 = vpack.c.b16 %v2413, %v2409
        %v3682 = vpack.c.b16 %v2414, %v2410
        %v3683 = vpack.c.b16 %v2419, %v2415
        %v3684 = vpack.c.b16 %v2420, %v2416
        %v3685 = vpack.c.b16 %v2421, %v2417
        %v3686 = vpack.c.b16 %v2422, %v2418
        %v3687 = vpack.c.b16 %v2427, %v2423
        %v3688 = vpack.c.b16 %v2428, %v2424
        %v3689 = vpack.c.b16 %v2429, %v2425
        %v3690 = vpack.c.b16 %v2430, %v2426
        %v3691 = vpack.c.b16 %v2435, %v2431
        %v3692 = vpack.c.b16 %v2436, %v2432
        %v3693 = vpack.c.b16 %v2437, %v2433
        %v3694 = vpack.c.b16 %v2438, %v2434
        %v3695 = vpack.c.b16 %v2443, %v2439
        %v3696 = vpack.c.b16 %v2444, %v2440
        %v3697 = vpack.c.b16 %v2445, %v2441
        %v3698 = vpack.c.b16 %v2446, %v2442
        %v3699 = vpack.c.b16 %v2451, %v2447
        %v3700 = vpack.c.b16 %v2452, %v2448
        %v3701 = vpack.c.b16 %v2453, %v2449
        %v3702 = vpack.c.b16 %v2454, %v2450
        %v3703 = vpack.c.b16 %v2459, %v2455
        %v3704 = vpack.c.b16 %v2460, %v2456
        %v3705 = vpack.c.b16 %v2461, %v2457
        %v3706 = vpack.c.b16 %v2462, %v2458
        %v3707 = vpack.c.b16 %v2467, %v2463
        %v3708 = vpack.c.b16 %v2468, %v2464
        %v3709 = vpack.c.b16 %v2469, %v2465
        %v3710 = vpack.c.b16 %v2470, %v2466
        %v3711 = vpack.c.b16 %v2475, %v2471
        %v3712 = vpack.c.b16 %v2476, %v2472
        %v3713 = vpack.c.b16 %v2477, %v2473
        %v3714 = vpack.c.b16 %v2478, %v2474
        %v3715 = vpack.c.b16 %v2483, %v2479
        %v3716 = vpack.c.b16 %v2484, %v2480
        %v3717 = vpack.c.b16 %v2485, %v2481
        %v3718 = vpack.c.b16 %v2486, %v2482
        %v3719 = vpack.c.b16 %v2491, %v2487
        %v3720 = vpack.c.b16 %v2492, %v2488
        %v3721 = vpack.c.b16 %v2493, %v2489
        %v3722 = vpack.c.b16 %v2494, %v2490
        %v3723 = vpack.c.b16 %v2499, %v2495
        %v3724 = vpack.c.b16 %v2500, %v2496
        %v3725 = vpack.c.b16 %v2501, %v2497
        %v3726 = vpack.c.b16 %v2502, %v2498
        %v3727 = vpack.c.b16 %v2507, %v2503
        %v3728 = vpack.c.b16 %v2508, %v2504
        %v3729 = vpack.c.b16 %v2509, %v2505
        %v3730 = vpack.c.b16 %v2510, %v2506
        %v3731 = vpack.c.b16 %v2515, %v2511
        %v3732 = vpack.c.b16 %v2516, %v2512
        %v3733 = vpack.c.b16 %v2517, %v2513
        %v3734 = vpack.c.b16 %v2518, %v2514
        %v3735 = vpack.c.b16 %v2523, %v2519
        %v3736 = vpack.c.b16 %v2524, %v2520
        %v3737 = vpack.c.b16 %v2525, %v2521
        %v3738 = vpack.c.b16 %v2526, %v2522
        %v3739 = vpack.c.b16 %v2531, %v2527
        %v3740 = vpack.c.b16 %v2532, %v2528
        %v3741 = vpack.c.b16 %v2533, %v2529
        %v3742 = vpack.c.b16 %v2534, %v2530
        %v3743 = vpack.c.b16 %v2539, %v2535
        %v3744 = vpack.c.b16 %v2540, %v2536
        %v3745 = vpack.c.b16 %v2541, %v2537
        %v3746 = vpack.c.b16 %v2542, %v2538
        %v3747 = vpack.c.b16 %v2547, %v2543
        %v3748 = vpack.c.b16 %v2548, %v2544
        %v3749 = vpack.c.b16 %v2549, %v2545
        %v3750 = vpack.c.b16 %v2550, %v2546
        %v3751 = vpack.c.b16 %v2555, %v2551
        %v3752 = vpack.c.b16 %v2556, %v2552
        %v3753 = vpack.c.b16 %v2557, %v2553
        %v3754 = vpack.c.b16 %v2558, %v2554
        %v3755 = vpack.c.b16 %v2563, %v2559
        %v3756 = vpack.c.b16 %v2564, %v2560
        %v3757 = vpack.c.b16 %v2565, %v2561
        %v3758 = vpack.c.b16 %v2566, %v2562
        %v3759 = vpack.c.b16 %v2571, %v2567
        %v3760 = vpack.c.b16 %v2572, %v2568
        %v3761 = vpack.c.b16 %v2573, %v2569
        %v3762 = vpack.c.b16 %v2574, %v2570
        %v3763 = vpack.c.b16 %v2579, %v2575
        %v3764 = vpack.c.b16 %v2580, %v2576
        %v3765 = vpack.c.b16 %v2581, %v2577
        %v3766 = vpack.c.b16 %v2582, %v2578
        %v3767 = vpack.c.b16 %v2587, %v2583
        %v3768 = vpack.c.b16 %v2588, %v2584
        %v3769 = vpack.c.b16 %v2589, %v2585
        %v3770 = vpack.c.b16 %v2590, %v2586
        %v3771 = vpack.c.b16 %v2595, %v2591
        %v3772 = vpack.c.b16 %v2596, %v2592
        %v3773 = vpack.c.b16 %v2597, %v2593
        %v3774 = vpack.c.b16 %v2598, %v2594
        %v3775 = vpack.c.b16 %v2603, %v2599
        %v3776 = vpack.c.b16 %v2604, %v2600
        %v3777 = vpack.c.b16 %v2605, %v2601
        %v3778 = vpack.c.b16 %v2606, %v2602
        %v3779 = vpack.c.b16 %v2611, %v2607
        %v3780 = vpack.c.b16 %v2612, %v2608
        %v3781 = vpack.c.b16 %v2613, %v2609
        %v3782 = vpack.c.b16 %v2614, %v2610
        %v3783 = vpack.c.b16 %v2619, %v2615
        %v3784 = vpack.c.b16 %v2620, %v2616
        %v3785 = vpack.c.b16 %v2621, %v2617
        %v3786 = vpack.c.b16 %v2622, %v2618
        %v3787 = vpack.c.b16 %v2627, %v2623
        %v3788 = vpack.c.b16 %v2628, %v2624
        %v3789 = vpack.c.b16 %v2629, %v2625
        %v3790 = vpack.c.b16 %v2630, %v2626
        %v3791 = vpack.c.b16 %v2635, %v2631
        %v3792 = vpack.c.b16 %v2636, %v2632
        %v3793 = vpack.c.b16 %v2637, %v2633
        %v3794 = vpack.c.b16 %v2638, %v2634
        %v3795 = vpack.c.b16 %v2643, %v2639
        %v3796 = vpack.c.b16 %v2644, %v2640
        %v3797 = vpack.c.b16 %v2645, %v2641
        %v3798 = vpack.c.b16 %v2646, %v2642
        %v3799 = vpack.c.b16 %v2651, %v2647
        %v3800 = vpack.c.b16 %v2652, %v2648
        %v3801 = vpack.c.b16 %v2653, %v2649
        %v3802 = vpack.c.b16 %v2654, %v2650
        %v3803 = vpack.c.b16 %v2659, %v2655
        %v3804 = vpack.c.b16 %v2660, %v2656
        %v3805 = vpack.c.b16 %v2661, %v2657
        %v3806 = vpack.c.b16 %v2662, %v2658
        %v3807 = vpack.c.b16 %v2667, %v2663
        %v3808 = vpack.c.b16 %v2668, %v2664
        %v3809 = vpack.c.b16 %v2669, %v2665
        %v3810 = vpack.c.b16 %v2670, %v2666
        %v3811 = vpack.c.b16 %v2675, %v2671
        %v3812 = vpack.c.b16 %v2676, %v2672
        %v3813 = vpack.c.b16 %v2677, %v2673
        %v3814 = vpack.c.b16 %v2678, %v2674
        %v3815 = vpack.c.b16 %v2683, %v2679
        %v3816 = vpack.c.b16 %v2684, %v2680
        %v3817 = vpack.c.b16 %v2685, %v2681
        %v3818 = vpack.c.b16 %v2686, %v2682
        %v3819 = vpack.c.b16 %v2691, %v2687
        %v3820 = vpack.c.b16 %v2692, %v2688
        %v3821 = vpack.c.b16 %v2693, %v2689
        %v3822 = vpack.c.b16 %v2694, %v2690
        %v3823 = vpack.c.b16 %v2699, %v2695
        %v3824 = vpack.c.b16 %v2700, %v2696
        %v3825 = vpack.c.b16 %v2701, %v2697
        %v3826 = vpack.c.b16 %v2702, %v2698
        %v3827 = vpack.c.b16 %v2707, %v2703
        %v3828 = vpack.c.b16 %v2708, %v2704
        %v3829 = vpack.c.b16 %v2709, %v2705
        %v3830 = vpack.c.b16 %v2710, %v2706
        %v3831 = vpack.c.b16 %v2715, %v2711
        %v3832 = vpack.c.b16 %v2716, %v2712
        %v3833 = vpack.c.b16 %v2717, %v2713
        %v3834 = vpack.c.b16 %v2718, %v2714
        %v3835 = vpack.c.b16 %v2723, %v2719
        %v3836 = vpack.c.b16 %v2724, %v2720
        %v3837 = vpack.c.b16 %v2725, %v2721
        %v3838 = vpack.c.b16 %v2726, %v2722
        %v3839 = vpack.c.b16 %v2731, %v2727
        %v3840 = vpack.c.b16 %v2732, %v2728
        %v3841 = vpack.c.b16 %v2733, %v2729
        %v3842 = vpack.c.b16 %v2734, %v2730
        %v3843 = vpack.c.b16 %v2739, %v2735
        %v3844 = vpack.c.b16 %v2740, %v2736
        %v3845 = vpack.c.b16 %v2741, %v2737
        %v3846 = vpack.c.b16 %v2742, %v2738
        %v3847 = vpack.c.b16 %v2747, %v2743
        %v3848 = vpack.c.b16 %v2748, %v2744
        %v3849 = vpack.c.b16 %v2749, %v2745
        %v3850 = vpack.c.b16 %v2750, %v2746
        %v3851 = vpack.c.b16 %v2755, %v2751
        %v3852 = vpack.c.b16 %v2756, %v2752
        %v3853 = vpack.c.b16 %v2757, %v2753
        %v3854 = vpack.c.b16 %v2758, %v2754
        %v3855 = vpack.c.b16 %v2763, %v2759
        %v3856 = vpack.c.b16 %v2764, %v2760
        %v3857 = vpack.c.b16 %v2765, %v2761
        %v3858 = vpack.c.b16 %v2766, %v2762
        %v3859 = vpack.c.b16 %v2771, %v2767
        %v3860 = vpack.c.b16 %v2772, %v2768
        %v3861 = vpack.c.b16 %v2773, %v2769
        %v3862 = vpack.c.b16 %v2774, %v2770
        %v3863 = vpack.c.b16 %v2779, %v2775
        %v3864 = vpack.c.b16 %v2780, %v2776
        %v3865 = vpack.c.b16 %v2781, %v2777
        %v3866 = vpack.c.b16 %v2782, %v2778
        %v3867 = vpack.c.b16 %v2787, %v2783
        %v3868 = vpack.c.b16 %v2788, %v2784
        %v3869 = vpack.c.b16 %v2789, %v2785
        %v3870 = vpack.c.b16 %v2790, %v2786
        %v3871 = vpack.c.b16 %v2795, %v2791
        %v3872 = vpack.c.b16 %v2796, %v2792
        %v3873 = vpack.c.b16 %v2797, %v2793
        %v3874 = vpack.c.b16 %v2798, %v2794
        %v3875 = vpack.c.b16 %v2803, %v2799
        %v3876 = vpack.c.b16 %v2804, %v2800
        %v3877 = vpack.c.b16 %v2805, %v2801
        %v3878 = vpack.c.b16 %v2806, %v2802
        %v3879 = vpack.c.b16 %v2811, %v2807
        %v3880 = vpack.c.b16 %v2812, %v2808
        %v3881 = vpack.c.b16 %v2813, %v2809
        %v3882 = vpack.c.b16 %v2814, %v2810
        %v3883 = vpack.c.b16 %v2819, %v2815
        %v3884 = vpack.c.b16 %v2820, %v2816
        %v3885 = vpack.c.b16 %v2821, %v2817
        %v3886 = vpack.c.b16 %v2822, %v2818
        %v3887 = vpack.c.b16 %v2827, %v2823
        %v3888 = vpack.c.b16 %v2828, %v2824
        %v3889 = vpack.c.b16 %v2829, %v2825
        %v3890 = vpack.c.b16 %v2830, %v2826
        %v3891 = vpack.c.b16 %v2835, %v2831
        %v3892 = vpack.c.b16 %v2836, %v2832
        %v3893 = vpack.c.b16 %v2837, %v2833
        %v3894 = vpack.c.b16 %v2838, %v2834
        %v3895 = vpack.c.b16 %v2843, %v2839
        %v3896 = vpack.c.b16 %v2844, %v2840
        %v3897 = vpack.c.b16 %v2845, %v2841
        %v3898 = vpack.c.b16 %v2846, %v2842
        %v3899 = vpack.c.b16 %v2851, %v2847
        %v3900 = vpack.c.b16 %v2852, %v2848
        %v3901 = vpack.c.b16 %v2853, %v2849
        %v3902 = vpack.c.b16 %v2854, %v2850
        %v3903 = vpack.c.b16 %v2859, %v2855
        %v3904 = vpack.c.b16 %v2860, %v2856
        %v3905 = vpack.c.b16 %v2861, %v2857
        %v3906 = vpack.c.b16 %v2862, %v2858
        %v3907 = vpack.c.b16 %v2867, %v2863
        %v3908 = vpack.c.b16 %v2868, %v2864
        %v3909 = vpack.c.b16 %v2869, %v2865
        %v3910 = vpack.c.b16 %v2870, %v2866
        %v3911 = vpack.c.b16 %v2875, %v2871
        %v3912 = vpack.c.b16 %v2876, %v2872
        %v3913 = vpack.c.b16 %v2877, %v2873
        %v3914 = vpack.c.b16 %v2878, %v2874
        %v3915 = vpack.c.b16 %v2883, %v2879
        %v3916 = vpack.c.b16 %v2884, %v2880
        %v3917 = vpack.c.b16 %v2885, %v2881
        %v3918 = vpack.c.b16 %v2886, %v2882
        %v3919 = vpack.c.b16 %v2891, %v2887
        %v3920 = vpack.c.b16 %v2892, %v2888
        %v3921 = vpack.c.b16 %v2893, %v2889
        %v3922 = vpack.c.b16 %v2894, %v2890
        %v3923 = vpack.c.b16 %v2899, %v2895
        %v3924 = vpack.c.b16 %v2900, %v2896
        %v3925 = vpack.c.b16 %v2901, %v2897
        %v3926 = vpack.c.b16 %v2902, %v2898
        %v3927 = vpack.c.b16 %v2907, %v2903
        %v3928 = vpack.c.b16 %v2908, %v2904
        %v3929 = vpack.c.b16 %v2909, %v2905
        %v3930 = vpack.c.b16 %v2910, %v2906
        %v3931 = vpack.c.b16 %v2915, %v2911
        %v3932 = vpack.c.b16 %v2916, %v2912
        %v3933 = vpack.c.b16 %v2917, %v2913
        %v3934 = vpack.c.b16 %v2918, %v2914
        %v3935 = vpack.c.b16 %v2923, %v2919
        %v3936 = vpack.c.b16 %v2924, %v2920
        %v3937 = vpack.c.b16 %v2925, %v2921
        %v3938 = vpack.c.b16 %v2926, %v2922
        %v3939 = vpack.c.b16 %v2931, %v2927
        %v3940 = vpack.c.b16 %v2932, %v2928
        %v3941 = vpack.c.b16 %v2933, %v2929
        %v3942 = vpack.c.b16 %v2934, %v2930
        %v3943 = vpack.c.b16 %v2939, %v2935
        %v3944 = vpack.c.b16 %v2940, %v2936
        %v3945 = vpack.c.b16 %v2941, %v2937
        %v3946 = vpack.c.b16 %v2942, %v2938
        %v3947 = vpack.c.b16 %v2947, %v2943
        %v3948 = vpack.c.b16 %v2948, %v2944
        %v3949 = vpack.c.b16 %v2949, %v2945
        %v3950 = vpack.c.b16 %v2950, %v2946
        %v3951 = vpack.c.b16 %v2955, %v2951
        %v3952 = vpack.c.b16 %v2956, %v2952
        %v3953 = vpack.c.b16 %v2957, %v2953
        %v3954 = vpack.c.b16 %v2958, %v2954
        %v3955 = vpack.c.b16 %v2963, %v2959
        %v3956 = vpack.c.b16 %v2964, %v2960
        %v3957 = vpack.c.b16 %v2965, %v2961
        %v3958 = vpack.c.b16 %v2966, %v2962
        %v3959 = vpack.c.b16 %v2971, %v2967
        %v3960 = vpack.c.b16 %v2972, %v2968
        %v3961 = vpack.c.b16 %v2973, %v2969
        %v3962 = vpack.c.b16 %v2974, %v2970
        %v3963 = vpack.c.b16 %v2979, %v2975
        %v3964 = vpack.c.b16 %v2980, %v2976
        %v3965 = vpack.c.b16 %v2981, %v2977
        %v3966 = vpack.c.b16 %v2982, %v2978
        %v3967 = vpack.c.b16 %v2987, %v2983
        %v3968 = vpack.c.b16 %v2988, %v2984
        %v3969 = vpack.c.b16 %v2989, %v2985
        %v3970 = vpack.c.b16 %v2990, %v2986
        %v3971 = vpack.c.b16 %v2995, %v2991
        %v3972 = vpack.c.b16 %v2996, %v2992
        %v3973 = vpack.c.b16 %v2997, %v2993
        %v3974 = vpack.c.b16 %v2998, %v2994
        %v3975 = vpack.c.b16 %v3003, %v2999
        %v3976 = vpack.c.b16 %v3004, %v3000
        %v3977 = vpack.c.b16 %v3005, %v3001
        %v3978 = vpack.c.b16 %v3006, %v3002
        %v3979 = vpack.c.b16 %v3011, %v3007
        %v3980 = vpack.c.b16 %v3012, %v3008
        %v3981 = vpack.c.b16 %v3013, %v3009
        %v3982 = vpack.c.b16 %v3014, %v3010
        %v3983 = vpack.c.b16 %v3019, %v3015
        %v3984 = vpack.c.b16 %v3020, %v3016
        %v3985 = vpack.c.b16 %v3021, %v3017
        %v3986 = vpack.c.b16 %v3022, %v3018
        %v3987 = vpack.c.b16 %v3027, %v3023
        %v3988 = vpack.c.b16 %v3028, %v3024
        %v3989 = vpack.c.b16 %v3029, %v3025
        %v3990 = vpack.c.b16 %v3030, %v3026
        %v3991 = vpack.c.b16 %v3035, %v3031
        %v3992 = vpack.c.b16 %v3036, %v3032
        %v3993 = vpack.c.b16 %v3037, %v3033
        %v3994 = vpack.c.b16 %v3038, %v3034
        %v3995 = vpack.c.b16 %v3043, %v3039
        %v3996 = vpack.c.b16 %v3044, %v3040
        %v3997 = vpack.c.b16 %v3045, %v3041
        %v3998 = vpack.c.b16 %v3046, %v3042
        %v3999 = vpack.c.b16 %v3051, %v3047
        %v4000 = vpack.c.b16 %v3052, %v3048
        %v4001 = vpack.c.b16 %v3053, %v3049
        %v4002 = vpack.c.b16 %v3054, %v3050
        %v4003 = vpack.c.b16 %v3059, %v3055
        %v4004 = vpack.c.b16 %v3060, %v3056
        %v4005 = vpack.c.b16 %v3061, %v3057
        %v4006 = vpack.c.b16 %v3062, %v3058
        %v4007 = vpack.c.b16 %v3067, %v3063
        %v4008 = vpack.c.b16 %v3068, %v3064
        %v4009 = vpack.c.b16 %v3069, %v3065
        %v4010 = vpack.c.b16 %v3070, %v3066
        %v4011 = vpack.c.b16 %v3075, %v3071
        %v4012 = vpack.c.b16 %v3076, %v3072
        %v4013 = vpack.c.b16 %v3077, %v3073
        %v4014 = vpack.c.b16 %v3078, %v3074
        %v4015 = vpack.c.b16 %v3083, %v3079
        %v4016 = vpack.c.b16 %v3084, %v3080
        %v4017 = vpack.c.b16 %v3085, %v3081
        %v4018 = vpack.c.b16 %v3086, %v3082
        %v4019 = vpack.c.b16 %v3091, %v3087
        %v4020 = vpack.c.b16 %v3092, %v3088
        %v4021 = vpack.c.b16 %v3093, %v3089
        %v4022 = vpack.c.b16 %v3094, %v3090
        %v4023 = vpack.c.b16 %v3099, %v3095
        %v4024 = vpack.c.b16 %v3100, %v3096
        %v4025 = vpack.c.b16 %v3101, %v3097
        %v4026 = vpack.c.b16 %v3102, %v3098
        %v4027 = vpack.c.b16 %v3107, %v3103
        %v4028 = vpack.c.b16 %v3108, %v3104
        %v4029 = vpack.c.b16 %v3109, %v3105
        %v4030 = vpack.c.b16 %v3110, %v3106
        %v4031 = vpack.c.b16 %v3115, %v3111
        %v4032 = vpack.c.b16 %v3116, %v3112
        %v4033 = vpack.c.b16 %v3117, %v3113
        %v4034 = vpack.c.b16 %v3118, %v3114
        %v4035 = vpack.c.b16 %v3123, %v3119
        %v4036 = vpack.c.b16 %v3124, %v3120
        %v4037 = vpack.c.b16 %v3125, %v3121
        %v4038 = vpack.c.b16 %v3126, %v3122
        %v4039 = vpack.c.b16 %v3131, %v3127
        %v4040 = vpack.c.b16 %v3132, %v3128
        %v4041 = vpack.c.b16 %v3133, %v3129
        %v4042 = vpack.c.b16 %v3134, %v3130
        %v4043 = vpack.c.b16 %v3139, %v3135
        %v4044 = vpack.c.b16 %v3140, %v3136
        %v4045 = vpack.c.b16 %v3141, %v3137
        %v4046 = vpack.c.b16 %v3142, %v3138
        %v4047 = vpack.c.b16 %v3147, %v3143
        %v4048 = vpack.c.b16 %v3148, %v3144
        %v4049 = vpack.c.b16 %v3149, %v3145
        %v4050 = vpack.c.b16 %v3150, %v3146
        %v4051 = vpack.c.b16 %v3155, %v3151
        %v4052 = vpack.c.b16 %v3156, %v3152
        %v4053 = vpack.c.b16 %v3157, %v3153
        %v4054 = vpack.c.b16 %v3158, %v3154
        %v4055 = vpack.c.b16 %v3163, %v3159
        %v4056 = vpack.c.b16 %v3164, %v3160
        %v4057 = vpack.c.b16 %v3165, %v3161
        %v4058 = vpack.c.b16 %v3166, %v3162
        %v4059 = vpack.c.b16 %v3171, %v3167
        %v4060 = vpack.c.b16 %v3172, %v3168
        %v4061 = vpack.c.b16 %v3173, %v3169
        %v4062 = vpack.c.b16 %v3174, %v3170
        %v4063 = vpack.c.b16 %v3179, %v3175
        %v4064 = vpack.c.b16 %v3180, %v3176
        %v4065 = vpack.c.b16 %v3181, %v3177
        %v4066 = vpack.c.b16 %v3182, %v3178
        %v4067 = vpack.c.b16 %v3187, %v3183
        %v4068 = vpack.c.b16 %v3188, %v3184
        %v4069 = vpack.c.b16 %v3189, %v3185
        %v4070 = vpack.c.b16 %v3190, %v3186
        %v4071 = vpack.c.b16 %v3195, %v3191
        %v4072 = vpack.c.b16 %v3196, %v3192
        %v4073 = vpack.c.b16 %v3197, %v3193
        %v4074 = vpack.c.b16 %v3198, %v3194
        %v4075 = vpack.c.b16 %v3203, %v3199
        %v4076 = vpack.c.b16 %v3204, %v3200
        %v4077 = vpack.c.b16 %v3205, %v3201
        %v4078 = vpack.c.b16 %v3206, %v3202
        %v4079 = vpack.c.b16 %v3211, %v3207
        %v4080 = vpack.c.b16 %v3212, %v3208
        %v4081 = vpack.c.b16 %v3213, %v3209
        %v4082 = vpack.c.b16 %v3214, %v3210
        %v4083 = vpack.c.b16 %v3219, %v3215
        %v4084 = vpack.c.b16 %v3220, %v3216
        %v4085 = vpack.c.b16 %v3221, %v3217
        %v4086 = vpack.c.b16 %v3222, %v3218
        %v4087 = vpack.c.b16 %v3227, %v3223
        %v4088 = vpack.c.b16 %v3228, %v3224
        %v4089 = vpack.c.b16 %v3229, %v3225
        %v4090 = vpack.c.b16 %v3230, %v3226
        %v4091 = vpack.c.b16 %v3235, %v3231
        %v4092 = vpack.c.b16 %v3236, %v3232
        %v4093 = vpack.c.b16 %v3237, %v3233
        %v4094 = vpack.c.b16 %v3238, %v3234
        %v4095 = vpack.c.b16 %v3243, %v3239
        %v4096 = vpack.c.b16 %v3244, %v3240
        %v4097 = vpack.c.b16 %v3245, %v3241
        %v4098 = vpack.c.b16 %v3246, %v3242
        %v4099 = vpack.c.b16 %v3251, %v3247
        %v4100 = vpack.c.b16 %v3252, %v3248
        %v4101 = vpack.c.b16 %v3253, %v3249
        %v4102 = vpack.c.b16 %v3254, %v3250
        %v4103 = vpack.c.b16 %v3259, %v3255
        %v4104 = vpack.c.b16 %v3260, %v3256
        %v4105 = vpack.c.b16 %v3261, %v3257
        %v4106 = vpack.c.b16 %v3262, %v3258
        %v4107 = vpack.c.b16 %v3267, %v3263
        %v4108 = vpack.c.b16 %v3268, %v3264
        %v4109 = vpack.c.b16 %v3269, %v3265
        %v4110 = vpack.c.b16 %v3270, %v3266
        %v4111 = vpack.c.b16 %v3275, %v3271
        %v4112 = vpack.c.b16 %v3276, %v3272
        %v4113 = vpack.c.b16 %v3277, %v3273
        %v4114 = vpack.c.b16 %v3278, %v3274
        %v4115 = vpack.c.b16 %v3283, %v3279
        %v4116 = vpack.c.b16 %v3284, %v3280
        %v4117 = vpack.c.b16 %v3285, %v3281
        %v4118 = vpack.c.b16 %v3286, %v3282
        %v4119 = vpack.c.b16 %v3291, %v3287
        %v4120 = vpack.c.b16 %v3292, %v3288
        %v4121 = vpack.c.b16 %v3293, %v3289
        %v4122 = vpack.c.b16 %v3294, %v3290
        %v4123 = vpack.c.b16 %v3299, %v3295
        %v4124 = vpack.c.b16 %v3300, %v3296
        %v4125 = vpack.c.b16 %v3301, %v3297
        %v4126 = vpack.c.b16 %v3302, %v3298
        %v4127 = vpack.c.b16 %v3307, %v3303
        %v4128 = vpack.c.b16 %v3308, %v3304
        %v4129 = vpack.c.b16 %v3309, %v3305
        %v4130 = vpack.c.b16 %v3310, %v3306
        %v4131 = vpack.c.b16 %v3315, %v3311
        %v4132 = vpack.c.b16 %v3316, %v3312
        %v4133 = vpack.c.b16 %v3317, %v3313
        %v4134 = vpack.c.b16 %v3318, %v3314
        %v4135 = vpack.c.b16 %v3323, %v3319
        %v4136 = vpack.c.b16 %v3324, %v3320
        %v4137 = vpack.c.b16 %v3325, %v3321
        %v4138 = vpack.c.b16 %v3326, %v3322
        %v4139 = vpack.c.b16 %v3331, %v3327
        %v4140 = vpack.c.b16 %v3332, %v3328
        %v4141 = vpack.c.b16 %v3333, %v3329
        %v4142 = vpack.c.b16 %v3334, %v3330
        %v4143 = vpack.c.b16 %v3339, %v3335
        %v4144 = vpack.c.b16 %v3340, %v3336
        %v4145 = vpack.c.b16 %v3341, %v3337
        %v4146 = vpack.c.b16 %v3342, %v3338
        %v4147 = vpack.c.b16 %v3347, %v3343
        %v4148 = vpack.c.b16 %v3348, %v3344
        %v4149 = vpack.c.b16 %v3349, %v3345
        %v4150 = vpack.c.b16 %v3350, %v3346
        %v4151 = vpack.c.b16 %v3355, %v3351
        %v4152 = vpack.c.b16 %v3356, %v3352
        %v4153 = vpack.c.b16 %v3357, %v3353
        %v4154 = vpack.c.b16 %v3358, %v3354
        %v4155 = vpack.c.b16 %v3363, %v3359
        %v4156 = vpack.c.b16 %v3364, %v3360
        %v4157 = vpack.c.b16 %v3365, %v3361
        %v4158 = vpack.c.b16 %v3366, %v3362
        %v4159 = vpack.c.b16 %v3371, %v3367
        %v4160 = vpack.c.b16 %v3372, %v3368
        %v4161 = vpack.c.b16 %v3373, %v3369
        %v4162 = vpack.c.b16 %v3374, %v3370
        %v4163 = vpack.c.b16 %v3379, %v3375
        %v4164 = vpack.c.b16 %v3380, %v3376
        %v4165 = vpack.c.b16 %v3381, %v3377
        %v4166 = vpack.c.b16 %v3382, %v3378
        %v4167 = vpack.c.b16 %v3387, %v3383
        %v4168 = vpack.c.b16 %v3388, %v3384
        %v4169 = vpack.c.b16 %v3389, %v3385
        %v4170 = vpack.c.b16 %v3390, %v3386
        %v4171 = vpack.c.b16 %v3395, %v3391
        %v4172 = vpack.c.b16 %v3396, %v3392
        %v4173 = vpack.c.b16 %v3397, %v3393
        %v4174 = vpack.c.b16 %v3398, %v3394
        %v4175 = vpack.c.b16 %v3403, %v3399
        %v4176 = vpack.c.b16 %v3404, %v3400
        %v4177 = vpack.c.b16 %v3405, %v3401
        %v4178 = vpack.c.b16 %v3406, %v3402
        %v4179 = vpack.c.b16 %v3411, %v3407
        %v4180 = vpack.c.b16 %v3412, %v3408
        %v4181 = vpack.c.b16 %v3413, %v3409
        %v4182 = vpack.c.b16 %v3414, %v3410
        %4951 = vmatprep.subr.bf16.mxu0 %v3416
        %4952 = vmatpush1.bf16.msra.mxu0 %v3415
        %4953 = vmatprep.subr.bf16.mxu0 %v3420
        %4954 = vmatpush1.bf16.msra.mxu0 %v3419
        %4955 = vmatprep.subr.bf16.mxu0 %v3424
        %4956 = vmatpush1.bf16.msra.mxu0 %v3423
        %4957 = vmatprep.subr.bf16.mxu0 %v3428
        %4958 = vmatpush1.bf16.msra.mxu0 %v3427
        %4959 = vmatprep.subr.bf16.mxu0 %v3432
        %4960 = vmatpush1.bf16.msra.mxu0 %v3431
        %4961 = vmatprep.subr.bf16.mxu0 %v3436
        %4962 = vmatpush1.bf16.msra.mxu0 %v3435
        %4963 = vmatprep.subr.bf16.mxu0 %v3440
        %4964 = vmatpush1.bf16.msra.mxu0 %v3439
        %4965 = vmatprep.subr.bf16.mxu0 %v3444
        %4966 = vmatpush1.bf16.msra.mxu0 %v3443
        %4967 = vmatprep.subr.bf16.mxu0 %v3448
        %4968 = vmatpush1.bf16.msra.mxu0 %v3447
        %4969 = vmatprep.subr.bf16.mxu0 %v3452
        %4970 = vmatpush1.bf16.msra.mxu0 %v3451
        %4971 = vmatprep.subr.bf16.mxu0 %v3456
        %4972 = vmatpush1.bf16.msra.mxu0 %v3455
        %4973 = vmatprep.subr.bf16.mxu0 %v3460
        %4974 = vmatpush1.bf16.msra.mxu0 %v3459
        %4975 = vmatprep.subr.bf16.mxu0 %v3464
        %4976 = vmatpush1.bf16.msra.mxu0 %v3463
        %4977 = vmatprep.subr.bf16.mxu0 %v3468
        %4978 = vmatpush1.bf16.msra.mxu0 %v3467
        %4979 = vmatprep.subr.bf16.mxu0 %v3472
        %4980 = vmatpush1.bf16.msra.mxu0 %v3471
        %4981 = vmatprep.subr.bf16.mxu0 %v3476
        %4982 = vmatpush1.bf16.msra.mxu0 %v3475
        %4983 = vmatprep.mubr.bf16.mxu0 %v320
        %4984 = vmatmul.mubr.bf16.gmra.mrb[0].mxu0 %v319
        %v4985 = vpop.f32.mrb[0].mxu0
        %v4986 = vadd.f32 0.0, %v4985
        %v4987 = vpop.f32.mrb[0].mxu0
        %v4988 = vadd.f32 0.0, %v4987
        %v4989 = vpop.f32.mrb[0].mxu0
        %v4990 = vpop.f32.mrb[0].mxu0
        %4991 = vdwg.mxu0
        %4992 = vmatprep.subr.bf16.mxu0 %v3480
        %4993 = vmatpush1.bf16.msra.mxu0 %v3479
        %4994 = vmatprep.subr.bf16.mxu0 %v3484
        %4995 = vmatpush1.bf16.msra.mxu0 %v3483
        %4996 = vmatprep.subr.bf16.mxu0 %v3488
        %4997 = vmatpush1.bf16.msra.mxu0 %v3487
        %4998 = vmatprep.subr.bf16.mxu0 %v3492
        %4999 = vmatpush1.bf16.msra.mxu0 %v3491
        %5000 = vmatprep.subr.bf16.mxu0 %v3496
        %5001 = vmatpush1.bf16.msra.mxu0 %v3495
        %5002 = vmatprep.subr.bf16.mxu0 %v3500
        %5003 = vmatpush1.bf16.msra.mxu0 %v3499
        %5004 = vmatprep.subr.bf16.mxu0 %v3504
        %5005 = vmatpush1.bf16.msra.mxu0 %v3503
        %5006 = vmatprep.subr.bf16.mxu0 %v3508
        %5007 = vmatpush1.bf16.msra.mxu0 %v3507
        %5008 = vmatprep.subr.bf16.mxu0 %v3512
        %5009 = vmatpush1.bf16.msra.mxu0 %v3511
        %5010 = vmatprep.subr.bf16.mxu0 %v3516
        %5011 = vmatpush1.bf16.msra.mxu0 %v3515
        %5012 = vmatprep.subr.bf16.mxu0 %v3520
        %5013 = vmatpush1.bf16.msra.mxu0 %v3519
        %5014 = vmatprep.subr.bf16.mxu0 %v3524
        %5015 = vmatpush1.bf16.msra.mxu0 %v3523
        %5016 = vmatprep.subr.bf16.mxu0 %v3528
        %5017 = vmatpush1.bf16.msra.mxu0 %v3527
        %5018 = vmatprep.subr.bf16.mxu0 %v3532
        %5019 = vmatpush1.bf16.msra.mxu0 %v3531
        %5020 = vmatprep.subr.bf16.mxu0 %v3536
        %5021 = vmatpush1.bf16.msra.mxu0 %v3535
        %5022 = vmatprep.subr.bf16.mxu0 %v3540
        %5023 = vmatpush1.bf16.msra.mxu0 %v3539
        %5024 = vmatprep.mubr.bf16.mxu0 %v322
        %5025 = vmatmul.mubr.bf16.gmra.mrb[0].mxu0 %v321
        %v5026 = vpop.f32.mrb[0].mxu0
        %v5027 = vadd.f32 %v4986, %v5026
        %v5028 = vpop.f32.mrb[0].mxu0
        %v5029 = vadd.f32 %v4988, %v5028
        %v5030 = vpop.f32.mrb[0].mxu0
        %v5031 = vpop.f32.mrb[0].mxu0
        %5032 = vdwg.mxu0
        %5033 = vmatprep.subr.bf16.mxu0 %v3544
        %5034 = vmatpush1.bf16.msra.mxu0 %v3543
        %5035 = vmatprep.subr.bf16.mxu0 %v3548
        %5036 = vmatpush1.bf16.msra.mxu0 %v3547
        %5037 = vmatprep.subr.bf16.mxu0 %v3552
        %5038 = vmatpush1.bf16.msra.mxu0 %v3551
        %5039 = vmatprep.subr.bf16.mxu0 %v3556
        %5040 = vmatpush1.bf16.msra.mxu0 %v3555
        %5041 = vmatprep.subr.bf16.mxu0 %v3560
        %5042 = vmatpush1.bf16.msra.mxu0 %v3559
        %5043 = vmatprep.subr.bf16.mxu0 %v3564
        %5044 = vmatpush1.bf16.msra.mxu0 %v3563
        %5045 = vmatprep.subr.bf16.mxu0 %v3568
        %5046 = vmatpush1.bf16.msra.mxu0 %v3567
        %5047 = vmatprep.subr.bf16.mxu0 %v3572
        %5048 = vmatpush1.bf16.msra.mxu0 %v3571
        %5049 = vmatprep.subr.bf16.mxu0 %v3576
        %5050 = vmatpush1.bf16.msra.mxu0 %v3575
        %5051 = vmatprep.subr.bf16.mxu0 %v3580
        %5052 = vmatpush1.bf16.msra.mxu0 %v3579
        %5053 = vmatprep.subr.bf16.mxu0 %v3584
        %5054 = vmatpush1.bf16.msra.mxu0 %v3583
        %5055 = vmatprep.subr.bf16.mxu0 %v3588
        %5056 = vmatpush1.bf16.msra.mxu0 %v3587
        %5057 = vmatprep.subr.bf16.mxu0 %v3592
        %5058 = vmatpush1.bf16.msra.mxu0 %v3591
        %5059 = vmatprep.subr.bf16.mxu0 %v3596
        %5060 = vmatpush1.bf16.msra.mxu0 %v3595
        %5061 = vmatprep.subr.bf16.mxu0 %v3600
        %5062 = vmatpush1.bf16.msra.mxu0 %v3599
        %5063 = vmatprep.subr.bf16.mxu0 %v3604
        %5064 = vmatpush1.bf16.msra.mxu0 %v3603
        %5065 = vmatprep.mubr.bf16.mxu0 %v324
        %5066 = vmatmul.mubr.bf16.gmra.mrb[0].mxu0 %v323
        %v5067 = vpop.f32.mrb[0].mxu0
        %v5068 = vadd.f32 %v5027, %v5067
        %v5069 = vpop.f32.mrb[0].mxu0
        %v5070 = vadd.f32 %v5029, %v5069
        %v5071 = vpop.f32.mrb[0].mxu0
        %v5072 = vpop.f32.mrb[0].mxu0
        %5073 = vdwg.mxu0
        %5074 = vmatprep.subr.bf16.mxu0 %v3608
        %5075 = vmatpush1.bf16.msra.mxu0 %v3607
        %5076 = vmatprep.subr.bf16.mxu0 %v3612
        %5077 = vmatpush1.bf16.msra.mxu0 %v3611
        %5078 = vmatprep.subr.bf16.mxu0 %v3616
        %5079 = vmatpush1.bf16.msra.mxu0 %v3615
        %5080 = vmatprep.subr.bf16.mxu0 %v3620
        %5081 = vmatpush1.bf16.msra.mxu0 %v3619
        %5082 = vmatprep.subr.bf16.mxu0 %v3624
        %5083 = vmatpush1.bf16.msra.mxu0 %v3623
        %5084 = vmatprep.subr.bf16.mxu0 %v3628
        %5085 = vmatpush1.bf16.msra.mxu0 %v3627
        %5086 = vmatprep.subr.bf16.mxu0 %v3632
        %5087 = vmatpush1.bf16.msra.mxu0 %v3631
        %5088 = vmatprep.subr.bf16.mxu0 %v3636
        %5089 = vmatpush1.bf16.msra.mxu0 %v3635
        %5090 = vmatprep.subr.bf16.mxu0 %v3640
        %5091 = vmatpush1.bf16.msra.mxu0 %v3639
        %5092 = vmatprep.subr.bf16.mxu0 %v3644
        %5093 = vmatpush1.bf16.msra.mxu0 %v3643
        %5094 = vmatprep.subr.bf16.mxu0 %v3648
        %5095 = vmatpush1.bf16.msra.mxu0 %v3647
        %5096 = vmatprep.subr.bf16.mxu0 %v3652
        %5097 = vmatpush1.bf16.msra.mxu0 %v3651
        %5098 = vmatprep.subr.bf16.mxu0 %v3656
        %5099 = vmatpush1.bf16.msra.mxu0 %v3655
        %5100 = vmatprep.subr.bf16.mxu0 %v3660
        %5101 = vmatpush1.bf16.msra.mxu0 %v3659
        %5102 = vmatprep.subr.bf16.mxu0 %v3664
        %5103 = vmatpush1.bf16.msra.mxu0 %v3663
        %5104 = vmatprep.subr.bf16.mxu0 %v3668
        %5105 = vmatpush1.bf16.msra.mxu0 %v3667
        %5106 = vmatprep.mubr.bf16.mxu0 %v326
        %5107 = vmatmul.mubr.bf16.gmra.mrb[0].mxu0 %v325
        %v5108 = vpop.f32.mrb[0].mxu0
        %v5109 = vadd.f32 %v5068, %v5108
        %v5110 = vpop.f32.mrb[0].mxu0
        %v5111 = vadd.f32 %v5070, %v5110
        %v5112 = vpop.f32.mrb[0].mxu0
        %v5113 = vpop.f32.mrb[0].mxu0
        %5114 = vdwg.mxu0
        %5115 = vmatprep.subr.bf16.mxu0 %v3672
        %5116 = vmatpush1.bf16.msra.mxu0 %v3671
        %5117 = vmatprep.subr.bf16.mxu0 %v3676
        %5118 = vmatpush1.bf16.msra.mxu0 %v3675
        %5119 = vmatprep.subr.bf16.mxu0 %v3680
        %5120 = vmatpush1.bf16.msra.mxu0 %v3679
        %5121 = vmatprep.subr.bf16.mxu0 %v3684
        %5122 = vmatpush1.bf16.msra.mxu0 %v3683
        %5123 = vmatprep.subr.bf16.mxu0 %v3688
        %5124 = vmatpush1.bf16.msra.mxu0 %v3687
        %5125 = vmatprep.subr.bf16.mxu0 %v3692
        %5126 = vmatpush1.bf16.msra.mxu0 %v3691
        %5127 = vmatprep.subr.bf16.mxu0 %v3696
        %5128 = vmatpush1.bf16.msra.mxu0 %v3695
        %5129 = vmatprep.subr.bf16.mxu0 %v3700
        %5130 = vmatpush1.bf16.msra.mxu0 %v3699
        %5131 = vmatprep.subr.bf16.mxu0 %v3704
        %5132 = vmatpush1.bf16.msra.mxu0 %v3703
        %5133 = vmatprep.subr.bf16.mxu0 %v3708
        %5134 = vmatpush1.bf16.msra.mxu0 %v3707
        %5135 = vmatprep.subr.bf16.mxu0 %v3712
        %5136 = vmatpush1.bf16.msra.mxu0 %v3711
        %5137 = vmatprep.subr.bf16.mxu0 %v3716
        %5138 = vmatpush1.bf16.msra.mxu0 %v3715
        %5139 = vmatprep.subr.bf16.mxu0 %v3720
        %5140 = vmatpush1.bf16.msra.mxu0 %v3719
        %5141 = vmatprep.subr.bf16.mxu0 %v3724
        %5142 = vmatpush1.bf16.msra.mxu0 %v3723
        %5143 = vmatprep.subr.bf16.mxu0 %v3728
        %5144 = vmatpush1.bf16.msra.mxu0 %v3727
        %5145 = vmatprep.subr.bf16.mxu0 %v3732
        %5146 = vmatpush1.bf16.msra.mxu0 %v3731
        %5147 = vmatprep.mubr.bf16.mxu0 %v328
        %5148 = vmatmul.mubr.bf16.gmra.mrb[0].mxu0 %v327
        %v5149 = vpop.f32.mrb[0].mxu0
        %v5150 = vadd.f32 %v5109, %v5149
        %v5151 = vpop.f32.mrb[0].mxu0
        %v5152 = vadd.f32 %v5111, %v5151
        %v5153 = vpop.f32.mrb[0].mxu0
        %v5154 = vpop.f32.mrb[0].mxu0
        %5155 = vdwg.mxu0
        %5156 = vmatprep.subr.bf16.mxu0 %v3736
        %5157 = vmatpush1.bf16.msra.mxu0 %v3735
        %5158 = vmatprep.subr.bf16.mxu0 %v3740
        %5159 = vmatpush1.bf16.msra.mxu0 %v3739
        %5160 = vmatprep.subr.bf16.mxu0 %v3744
        %5161 = vmatpush1.bf16.msra.mxu0 %v3743
        %5162 = vmatprep.subr.bf16.mxu0 %v3748
        %5163 = vmatpush1.bf16.msra.mxu0 %v3747
        %5164 = vmatprep.subr.bf16.mxu0 %v3752
        %5165 = vmatpush1.bf16.msra.mxu0 %v3751
        %5166 = vmatprep.subr.bf16.mxu0 %v3756
        %5167 = vmatpush1.bf16.msra.mxu0 %v3755
        %5168 = vmatprep.subr.bf16.mxu0 %v3760
        %5169 = vmatpush1.bf16.msra.mxu0 %v3759
        %5170 = vmatprep.subr.bf16.mxu0 %v3764
        %5171 = vmatpush1.bf16.msra.mxu0 %v3763
        %5172 = vmatprep.subr.bf16.mxu0 %v3768
        %5173 = vmatpush1.bf16.msra.mxu0 %v3767
        %5174 = vmatprep.subr.bf16.mxu0 %v3772
        %5175 = vmatpush1.bf16.msra.mxu0 %v3771
        %5176 = vmatprep.subr.bf16.mxu0 %v3776
        %5177 = vmatpush1.bf16.msra.mxu0 %v3775
        %5178 = vmatprep.subr.bf16.mxu0 %v3780
        %5179 = vmatpush1.bf16.msra.mxu0 %v3779
        %5180 = vmatprep.subr.bf16.mxu0 %v3784
        %5181 = vmatpush1.bf16.msra.mxu0 %v3783
        %5182 = vmatprep.subr.bf16.mxu0 %v3788
        %5183 = vmatpush1.bf16.msra.mxu0 %v3787
        %5184 = vmatprep.subr.bf16.mxu0 %v3792
        %5185 = vmatpush1.bf16.msra.mxu0 %v3791
        %5186 = vmatprep.subr.bf16.mxu0 %v3796
        %5187 = vmatpush1.bf16.msra.mxu0 %v3795
        %5188 = vmatprep.mubr.bf16.mxu0 %v330
        %5189 = vmatmul.mubr.bf16.gmra.mrb[0].mxu0 %v329
        %v5190 = vpop.f32.mrb[0].mxu0
        %v5191 = vadd.f32 %v5150, %v5190
        %v5192 = vpop.f32.mrb[0].mxu0
        %v5193 = vadd.f32 %v5152, %v5192
        %v5194 = vpop.f32.mrb[0].mxu0
        %v5195 = vpop.f32.mrb[0].mxu0
        %5196 = vdwg.mxu0
        %5197 = vmatprep.subr.bf16.mxu0 %v3800
        %5198 = vmatpush1.bf16.msra.mxu0 %v3799
        %5199 = vmatprep.subr.bf16.mxu0 %v3804
        %5200 = vmatpush1.bf16.msra.mxu0 %v3803
        %5201 = vmatprep.subr.bf16.mxu0 %v3808
        %5202 = vmatpush1.bf16.msra.mxu0 %v3807
        %5203 = vmatprep.subr.bf16.mxu0 %v3812
        %5204 = vmatpush1.bf16.msra.mxu0 %v3811
        %5205 = vmatprep.subr.bf16.mxu0 %v3816
        %5206 = vmatpush1.bf16.msra.mxu0 %v3815
        %5207 = vmatprep.subr.bf16.mxu0 %v3820
        %5208 = vmatpush1.bf16.msra.mxu0 %v3819
        %5209 = vmatprep.subr.bf16.mxu0 %v3824
        %5210 = vmatpush1.bf16.msra.mxu0 %v3823
        %5211 = vmatprep.subr.bf16.mxu0 %v3828
        %5212 = vmatpush1.bf16.msra.mxu0 %v3827
        %5213 = vmatprep.subr.bf16.mxu0 %v3832
        %5214 = vmatpush1.bf16.msra.mxu0 %v3831
        %5215 = vmatprep.subr.bf16.mxu0 %v3836
        %5216 = vmatpush1.bf16.msra.mxu0 %v3835
        %5217 = vmatprep.subr.bf16.mxu0 %v3840
        %5218 = vmatpush1.bf16.msra.mxu0 %v3839
        %5219 = vmatprep.subr.bf16.mxu0 %v3844
        %5220 = vmatpush1.bf16.msra.mxu0 %v3843
        %5221 = vmatprep.subr.bf16.mxu0 %v3848
        %5222 = vmatpush1.bf16.msra.mxu0 %v3847
        %5223 = vmatprep.subr.bf16.mxu0 %v3852
        %5224 = vmatpush1.bf16.msra.mxu0 %v3851
        %5225 = vmatprep.subr.bf16.mxu0 %v3856
        %5226 = vmatpush1.bf16.msra.mxu0 %v3855
        %5227 = vmatprep.subr.bf16.mxu0 %v3860
        %5228 = vmatpush1.bf16.msra.mxu0 %v3859
        %5229 = vmatprep.mubr.bf16.mxu0 %v332
        %5230 = vmatmul.mubr.bf16.gmra.mrb[0].mxu0 %v331
        %v5231 = vpop.f32.mrb[0].mxu0
        %v5232 = vadd.f32 %v5191, %v5231
        %v5233 = vpop.f32.mrb[0].mxu0
        %v5234 = vadd.f32 %v5193, %v5233
        %v5235 = vpop.f32.mrb[0].mxu0
        %v5236 = vpop.f32.mrb[0].mxu0
        %5237 = vdwg.mxu0
        %5238 = vmatprep.subr.bf16.mxu0 %v3864
        %5239 = vmatpush1.bf16.msra.mxu0 %v3863
        %5240 = vmatprep.subr.bf16.mxu0 %v3868
        %5241 = vmatpush1.bf16.msra.mxu0 %v3867
        %5242 = vmatprep.subr.bf16.mxu0 %v3872
        %5243 = vmatpush1.bf16.msra.mxu0 %v3871
        %5244 = vmatprep.subr.bf16.mxu0 %v3876
        %5245 = vmatpush1.bf16.msra.mxu0 %v3875
        %5246 = vmatprep.subr.bf16.mxu0 %v3880
        %5247 = vmatpush1.bf16.msra.mxu0 %v3879
        %5248 = vmatprep.subr.bf16.mxu0 %v3884
        %5249 = vmatpush1.bf16.msra.mxu0 %v3883
        %5250 = vmatprep.subr.bf16.mxu0 %v3888
        %5251 = vmatpush1.bf16.msra.mxu0 %v3887
        %5252 = vmatprep.subr.bf16.mxu0 %v3892
        %5253 = vmatpush1.bf16.msra.mxu0 %v3891
        %5254 = vmatprep.subr.bf16.mxu0 %v3896
        %5255 = vmatpush1.bf16.msra.mxu0 %v3895
        %5256 = vmatprep.subr.bf16.mxu0 %v3900
        %5257 = vmatpush1.bf16.msra.mxu0 %v3899
        %5258 = vmatprep.subr.bf16.mxu0 %v3904
        %5259 = vmatpush1.bf16.msra.mxu0 %v3903
        %5260 = vmatprep.subr.bf16.mxu0 %v3908
        %5261 = vmatpush1.bf16.msra.mxu0 %v3907
        %5262 = vmatprep.subr.bf16.mxu0 %v3912
        %5263 = vmatpush1.bf16.msra.mxu0 %v3911
        %5264 = vmatprep.subr.bf16.mxu0 %v3916
        %5265 = vmatpush1.bf16.msra.mxu0 %v3915
        %5266 = vmatprep.subr.bf16.mxu0 %v3920
        %5267 = vmatpush1.bf16.msra.mxu0 %v3919
        %5268 = vmatprep.subr.bf16.mxu0 %v3924
        %5269 = vmatpush1.bf16.msra.mxu0 %v3923
        %5270 = vmatprep.mubr.bf16.mxu0 %v334
        %5271 = vmatmul.mubr.bf16.gmra.mrb[0].mxu0 %v333
        %v5272 = vpop.f32.mrb[0].mxu0
        %v5273 = vadd.f32 %v5232, %v5272
        %v5274 = vpop.f32.mrb[0].mxu0
        %v5275 = vadd.f32 %v5234, %v5274
        %v5276 = vpop.f32.mrb[0].mxu0
        %v5277 = vpop.f32.mrb[0].mxu0
        %5278 = vdwg.mxu0
        %5279 = vmatprep.subr.bf16.mxu0 %v3928
        %5280 = vmatpush1.bf16.msra.mxu0 %v3927
        %5281 = vmatprep.subr.bf16.mxu0 %v3932
        %5282 = vmatpush1.bf16.msra.mxu0 %v3931
        %5283 = vmatprep.subr.bf16.mxu0 %v3936
        %5284 = vmatpush1.bf16.msra.mxu0 %v3935
        %5285 = vmatprep.subr.bf16.mxu0 %v3940
        %5286 = vmatpush1.bf16.msra.mxu0 %v3939
        %5287 = vmatprep.subr.bf16.mxu0 %v3944
        %5288 = vmatpush1.bf16.msra.mxu0 %v3943
        %5289 = vmatprep.subr.bf16.mxu0 %v3948
        %5290 = vmatpush1.bf16.msra.mxu0 %v3947
        %5291 = vmatprep.subr.bf16.mxu0 %v3952
        %5292 = vmatpush1.bf16.msra.mxu0 %v3951
        %5293 = vmatprep.subr.bf16.mxu0 %v3956
        %5294 = vmatpush1.bf16.msra.mxu0 %v3955
        %5295 = vmatprep.subr.bf16.mxu0 %v3960
        %5296 = vmatpush1.bf16.msra.mxu0 %v3959
        %5297 = vmatprep.subr.bf16.mxu0 %v3964
        %5298 = vmatpush1.bf16.msra.mxu0 %v3963
        %5299 = vmatprep.subr.bf16.mxu0 %v3968
        %5300 = vmatpush1.bf16.msra.mxu0 %v3967
        %5301 = vmatprep.subr.bf16.mxu0 %v3972
        %5302 = vmatpush1.bf16.msra.mxu0 %v3971
        %5303 = vmatprep.subr.bf16.mxu0 %v3976
        %5304 = vmatpush1.bf16.msra.mxu0 %v3975
        %5305 = vmatprep.subr.bf16.mxu0 %v3980
        %5306 = vmatpush1.bf16.msra.mxu0 %v3979
        %5307 = vmatprep.subr.bf16.mxu0 %v3984
        %5308 = vmatpush1.bf16.msra.mxu0 %v3983
        %5309 = vmatprep.subr.bf16.mxu0 %v3988
        %5310 = vmatpush1.bf16.msra.mxu0 %v3987
        %5311 = vmatprep.mubr.bf16.mxu0 %v336
        %5312 = vmatmul.mubr.bf16.gmra.mrb[0].mxu0 %v335
        %v5313 = vpop.f32.mrb[0].mxu0
        %v5314 = vadd.f32 %v5273, %v5313
        %v5315 = vpop.f32.mrb[0].mxu0
        %v5316 = vadd.f32 %v5275, %v5315
        %v5317 = vpop.f32.mrb[0].mxu0
        %v5318 = vpop.f32.mrb[0].mxu0
        %5319 = vdwg.mxu0
        %5320 = vmatprep.subr.bf16.mxu0 %v3992
        %5321 = vmatpush1.bf16.msra.mxu0 %v3991
        %5322 = vmatprep.subr.bf16.mxu0 %v3996
        %5323 = vmatpush1.bf16.msra.mxu0 %v3995
        %5324 = vmatprep.subr.bf16.mxu0 %v4000
        %5325 = vmatpush1.bf16.msra.mxu0 %v3999
        %5326 = vmatprep.subr.bf16.mxu0 %v4004
        %5327 = vmatpush1.bf16.msra.mxu0 %v4003
        %5328 = vmatprep.subr.bf16.mxu0 %v4008
        %5329 = vmatpush1.bf16.msra.mxu0 %v4007
        %5330 = vmatprep.subr.bf16.mxu0 %v4012
        %5331 = vmatpush1.bf16.msra.mxu0 %v4011
        %5332 = vmatprep.subr.bf16.mxu0 %v4016
        %5333 = vmatpush1.bf16.msra.mxu0 %v4015
        %5334 = vmatprep.subr.bf16.mxu0 %v4020
        %5335 = vmatpush1.bf16.msra.mxu0 %v4019
        %5336 = vmatprep.subr.bf16.mxu0 %v4024
        %5337 = vmatpush1.bf16.msra.mxu0 %v4023
        %5338 = vmatprep.subr.bf16.mxu0 %v4028
        %5339 = vmatpush1.bf16.msra.mxu0 %v4027
        %5340 = vmatprep.subr.bf16.mxu0 %v4032
        %5341 = vmatpush1.bf16.msra.mxu0 %v4031
        %5342 = vmatprep.subr.bf16.mxu0 %v4036
        %5343 = vmatpush1.bf16.msra.mxu0 %v4035
        %5344 = vmatprep.subr.bf16.mxu0 %v4040
        %5345 = vmatpush1.bf16.msra.mxu0 %v4039
        %5346 = vmatprep.subr.bf16.mxu0 %v4044
        %5347 = vmatpush1.bf16.msra.mxu0 %v4043
        %5348 = vmatprep.subr.bf16.mxu0 %v4048
        %5349 = vmatpush1.bf16.msra.mxu0 %v4047
        %5350 = vmatprep.subr.bf16.mxu0 %v4052
        %5351 = vmatpush1.bf16.msra.mxu0 %v4051
        %5352 = vmatprep.mubr.bf16.mxu0 %v338
        %5353 = vmatmul.mubr.bf16.gmra.mrb[0].mxu0 %v337
        %v5354 = vpop.f32.mrb[0].mxu0
        %v5355 = vadd.f32 %v5314, %v5354
        %v5356 = vpop.f32.mrb[0].mxu0
        %v5357 = vadd.f32 %v5316, %v5356
        %v5358 = vpop.f32.mrb[0].mxu0
        %v5359 = vpop.f32.mrb[0].mxu0
        %5360 = vdwg.mxu0
        %5361 = vmatprep.subr.bf16.mxu0 %v4056
        %5362 = vmatpush1.bf16.msra.mxu0 %v4055
        %5363 = vmatprep.subr.bf16.mxu0 %v4060
        %5364 = vmatpush1.bf16.msra.mxu0 %v4059
        %5365 = vmatprep.subr.bf16.mxu0 %v4064
        %5366 = vmatpush1.bf16.msra.mxu0 %v4063
        %5367 = vmatprep.subr.bf16.mxu0 %v4068
        %5368 = vmatpush1.bf16.msra.mxu0 %v4067
        %5369 = vmatprep.subr.bf16.mxu0 %v4072
        %5370 = vmatpush1.bf16.msra.mxu0 %v4071
        %5371 = vmatprep.subr.bf16.mxu0 %v4076
        %5372 = vmatpush1.bf16.msra.mxu0 %v4075
        %5373 = vmatprep.subr.bf16.mxu0 %v4080
        %5374 = vmatpush1.bf16.msra.mxu0 %v4079
        %5375 = vmatprep.subr.bf16.mxu0 %v4084
        %5376 = vmatpush1.bf16.msra.mxu0 %v4083
        %5377 = vmatprep.subr.bf16.mxu0 %v4088
        %5378 = vmatpush1.bf16.msra.mxu0 %v4087
        %5379 = vmatprep.subr.bf16.mxu0 %v4092
        %5380 = vmatpush1.bf16.msra.mxu0 %v4091
        %5381 = vmatprep.subr.bf16.mxu0 %v4096
        %5382 = vmatpush1.bf16.msra.mxu0 %v4095
        %5383 = vmatprep.subr.bf16.mxu0 %v4100
        %5384 = vmatpush1.bf16.msra.mxu0 %v4099
        %5385 = vmatprep.subr.bf16.mxu0 %v4104
        %5386 = vmatpush1.bf16.msra.mxu0 %v4103
        %5387 = vmatprep.subr.bf16.mxu0 %v4108
        %5388 = vmatpush1.bf16.msra.mxu0 %v4107
        %5389 = vmatprep.subr.bf16.mxu0 %v4112
        %5390 = vmatpush1.bf16.msra.mxu0 %v4111
        %5391 = vmatprep.subr.bf16.mxu0 %v4116
        %5392 = vmatpush1.bf16.msra.mxu0 %v4115
        %5393 = vmatprep.mubr.bf16.mxu0 %v340
        %5394 = vmatmul.mubr.bf16.gmra.mrb[0].mxu0 %v339
        %v5395 = vpop.f32.mrb[0].mxu0
        %v5396 = vadd.f32 %v5355, %v5395
        %v5397 = vpop.f32.mrb[0].mxu0
        %v5398 = vadd.f32 %v5357, %v5397
        %v5399 = vpop.f32.mrb[0].mxu0
        %v5400 = vpop.f32.mrb[0].mxu0
        %5401 = vdwg.mxu0
        %5402 = vmatprep.subr.bf16.mxu0 %v4120
        %5403 = vmatpush1.bf16.msra.mxu0 %v4119
        %5404 = vmatprep.subr.bf16.mxu0 %v4124
        %5405 = vmatpush1.bf16.msra.mxu0 %v4123
        %5406 = vmatprep.subr.bf16.mxu0 %v4128
        %5407 = vmatpush1.bf16.msra.mxu0 %v4127
        %5408 = vmatprep.subr.bf16.mxu0 %v4132
        %5409 = vmatpush1.bf16.msra.mxu0 %v4131
        %5410 = vmatprep.subr.bf16.mxu0 %v4136
        %5411 = vmatpush1.bf16.msra.mxu0 %v4135
        %5412 = vmatprep.subr.bf16.mxu0 %v4140
        %5413 = vmatpush1.bf16.msra.mxu0 %v4139
        %5414 = vmatprep.subr.bf16.mxu0 %v4144
        %5415 = vmatpush1.bf16.msra.mxu0 %v4143
        %5416 = vmatprep.subr.bf16.mxu0 %v4148
        %5417 = vmatpush1.bf16.msra.mxu0 %v4147
        %5418 = vmatprep.subr.bf16.mxu0 %v4152
        %5419 = vmatpush1.bf16.msra.mxu0 %v4151
        %5420 = vmatprep.subr.bf16.mxu0 %v4156
        %5421 = vmatpush1.bf16.msra.mxu0 %v4155
        %5422 = vmatprep.subr.bf16.mxu0 %v4160
        %5423 = vmatpush1.bf16.msra.mxu0 %v4159
        %5424 = vmatprep.subr.bf16.mxu0 %v4164
        %5425 = vmatpush1.bf16.msra.mxu0 %v4163
        %5426 = vmatprep.subr.bf16.mxu0 %v4168
        %5427 = vmatpush1.bf16.msra.mxu0 %v4167
        %5428 = vmatprep.subr.bf16.mxu0 %v4172
        %5429 = vmatpush1.bf16.msra.mxu0 %v4171
        %5430 = vmatprep.subr.bf16.mxu0 %v4176
        %5431 = vmatpush1.bf16.msra.mxu0 %v4175
        %5432 = vmatprep.subr.bf16.mxu0 %v4180
        %5433 = vmatpush1.bf16.msra.mxu0 %v4179
        %5434 = vmatprep.mubr.bf16.mxu0 %v342
        %5435 = vmatmul.mubr.bf16.gmra.mrb[0].mxu0 %v341
        %v5436 = vpop.f32.mrb[0].mxu0
        %v5437 = vadd.f32 %v5396, %v5436
        %v5438 = vpop.f32.mrb[0].mxu0
        %v5439 = vadd.f32 %v5398, %v5438
        %v5440 = vpop.f32.mrb[0].mxu0
        %v5441 = vpop.f32.mrb[0].mxu0
        %5442 = vdwg.mxu0
        %5443 = vmatprep.subr.bf16.mxu0 %v3418
        %5444 = vmatpush1.bf16.msra.mxu0 %v3417
        %5445 = vmatprep.subr.bf16.mxu0 %v3422
        %5446 = vmatpush1.bf16.msra.mxu0 %v3421
        %5447 = vmatprep.subr.bf16.mxu0 %v3426
        %5448 = vmatpush1.bf16.msra.mxu0 %v3425
        %5449 = vmatprep.subr.bf16.mxu0 %v3430
        %5450 = vmatpush1.bf16.msra.mxu0 %v3429
        %5451 = vmatprep.subr.bf16.mxu0 %v3434
        %5452 = vmatpush1.bf16.msra.mxu0 %v3433
        %5453 = vmatprep.subr.bf16.mxu0 %v3438
        %5454 = vmatpush1.bf16.msra.mxu0 %v3437
        %5455 = vmatprep.subr.bf16.mxu0 %v3442
        %5456 = vmatpush1.bf16.msra.mxu0 %v3441
        %5457 = vmatprep.subr.bf16.mxu0 %v3446
        %5458 = vmatpush1.bf16.msra.mxu0 %v3445
        %5459 = vmatprep.subr.bf16.mxu0 %v3450
        %5460 = vmatpush1.bf16.msra.mxu0 %v3449
        %5461 = vmatprep.subr.bf16.mxu0 %v3454
        %5462 = vmatpush1.bf16.msra.mxu0 %v3453
        %5463 = vmatprep.subr.bf16.mxu0 %v3458
        %5464 = vmatpush1.bf16.msra.mxu0 %v3457
        %5465 = vmatprep.subr.bf16.mxu0 %v3462
        %5466 = vmatpush1.bf16.msra.mxu0 %v3461
        %5467 = vmatprep.subr.bf16.mxu0 %v3466
        %5468 = vmatpush1.bf16.msra.mxu0 %v3465
        %5469 = vmatprep.subr.bf16.mxu0 %v3470
        %5470 = vmatpush1.bf16.msra.mxu0 %v3469
        %5471 = vmatprep.subr.bf16.mxu0 %v3474
        %5472 = vmatpush1.bf16.msra.mxu0 %v3473
        %5473 = vmatprep.subr.bf16.mxu0 %v3478
        %5474 = vmatpush1.bf16.msra.mxu0 %v3477
        %5475 = vmatprep.mubr.bf16.mxu0 %v320
        %5476 = vmatmul.mubr.bf16.gmra.mrb[0].mxu0 %v319
        %v5477 = vpop.f32.mrb[0].mxu0
        %v5478 = vadd.f32 0.0, %v5477
        %v5479 = vpop.f32.mrb[0].mxu0
        %v5480 = vadd.f32 0.0, %v5479
        %v5481 = vpop.f32.mrb[0].mxu0
        %v5482 = vpop.f32.mrb[0].mxu0
        %5483 = vdwg.mxu0
        %5484 = vmatprep.subr.bf16.mxu0 %v3482
        %5485 = vmatpush1.bf16.msra.mxu0 %v3481
        %5486 = vmatprep.subr.bf16.mxu0 %v3486
        %5487 = vmatpush1.bf16.msra.mxu0 %v3485
        %5488 = vmatprep.subr.bf16.mxu0 %v3490
        %5489 = vmatpush1.bf16.msra.mxu0 %v3489
        %5490 = vmatprep.subr.bf16.mxu0 %v3494
        %5491 = vmatpush1.bf16.msra.mxu0 %v3493
        %5492 = vmatprep.subr.bf16.mxu0 %v3498
        %5493 = vmatpush1.bf16.msra.mxu0 %v3497
        %5494 = vmatprep.subr.bf16.mxu0 %v3502
        %5495 = vmatpush1.bf16.msra.mxu0 %v3501
        %5496 = vmatprep.subr.bf16.mxu0 %v3506
        %5497 = vmatpush1.bf16.msra.mxu0 %v3505
        %5498 = vmatprep.subr.bf16.mxu0 %v3510
        %5499 = vmatpush1.bf16.msra.mxu0 %v3509
        %5500 = vmatprep.subr.bf16.mxu0 %v3514
        %5501 = vmatpush1.bf16.msra.mxu0 %v3513
        %5502 = vmatprep.subr.bf16.mxu0 %v3518
        %5503 = vmatpush1.bf16.msra.mxu0 %v3517
        %5504 = vmatprep.subr.bf16.mxu0 %v3522
        %5505 = vmatpush1.bf16.msra.mxu0 %v3521
        %5506 = vmatprep.subr.bf16.mxu0 %v3526
        %5507 = vmatpush1.bf16.msra.mxu0 %v3525
        %5508 = vmatprep.subr.bf16.mxu0 %v3530
        %5509 = vmatpush1.bf16.msra.mxu0 %v3529
        %5510 = vmatprep.subr.bf16.mxu0 %v3534
        %5511 = vmatpush1.bf16.msra.mxu0 %v3533
        %5512 = vmatprep.subr.bf16.mxu0 %v3538
        %5513 = vmatpush1.bf16.msra.mxu0 %v3537
        %5514 = vmatprep.subr.bf16.mxu0 %v3542
        %5515 = vmatpush1.bf16.msra.mxu0 %v3541
        %5516 = vmatprep.mubr.bf16.mxu0 %v322
        %5517 = vmatmul.mubr.bf16.gmra.mrb[0].mxu0 %v321
        %v5518 = vpop.f32.mrb[0].mxu0
        %v5519 = vadd.f32 %v5478, %v5518
        %v5520 = vpop.f32.mrb[0].mxu0
        %v5521 = vadd.f32 %v5480, %v5520
        %v5522 = vpop.f32.mrb[0].mxu0
        %v5523 = vpop.f32.mrb[0].mxu0
        %5524 = vdwg.mxu0
        %5525 = vmatprep.subr.bf16.mxu0 %v3546
        %5526 = vmatpush1.bf16.msra.mxu0 %v3545
        %5527 = vmatprep.subr.bf16.mxu0 %v3550
        %5528 = vmatpush1.bf16.msra.mxu0 %v3549
        %5529 = vmatprep.subr.bf16.mxu0 %v3554
        %5530 = vmatpush1.bf16.msra.mxu0 %v3553
        %5531 = vmatprep.subr.bf16.mxu0 %v3558
        %5532 = vmatpush1.bf16.msra.mxu0 %v3557
        %5533 = vmatprep.subr.bf16.mxu0 %v3562
        %5534 = vmatpush1.bf16.msra.mxu0 %v3561
        %5535 = vmatprep.subr.bf16.mxu0 %v3566
        %5536 = vmatpush1.bf16.msra.mxu0 %v3565
        %5537 = vmatprep.subr.bf16.mxu0 %v3570
        %5538 = vmatpush1.bf16.msra.mxu0 %v3569
        %5539 = vmatprep.subr.bf16.mxu0 %v3574
        %5540 = vmatpush1.bf16.msra.mxu0 %v3573
        %5541 = vmatprep.subr.bf16.mxu0 %v3578
        %5542 = vmatpush1.bf16.msra.mxu0 %v3577
        %5543 = vmatprep.subr.bf16.mxu0 %v3582
        %5544 = vmatpush1.bf16.msra.mxu0 %v3581
        %5545 = vmatprep.subr.bf16.mxu0 %v3586
        %5546 = vmatpush1.bf16.msra.mxu0 %v3585
        %5547 = vmatprep.subr.bf16.mxu0 %v3590
        %5548 = vmatpush1.bf16.msra.mxu0 %v3589
        %5549 = vmatprep.subr.bf16.mxu0 %v3594
        %5550 = vmatpush1.bf16.msra.mxu0 %v3593
        %5551 = vmatprep.subr.bf16.mxu0 %v3598
        %5552 = vmatpush1.bf16.msra.mxu0 %v3597
        %5553 = vmatprep.subr.bf16.mxu0 %v3602
        %5554 = vmatpush1.bf16.msra.mxu0 %v3601
        %5555 = vmatprep.subr.bf16.mxu0 %v3606
        %5556 = vmatpush1.bf16.msra.mxu0 %v3605
        %5557 = vmatprep.mubr.bf16.mxu0 %v324
        %5558 = vmatmul.mubr.bf16.gmra.mrb[0].mxu0 %v323
        %v5559 = vpop.f32.mrb[0].mxu0
        %v5560 = vadd.f32 %v5519, %v5559
        %v5561 = vpop.f32.mrb[0].mxu0
        %v5562 = vadd.f32 %v5521, %v5561
        %v5563 = vpop.f32.mrb[0].mxu0
        %v5564 = vpop.f32.mrb[0].mxu0
        %5565 = vdwg.mxu0
        %5566 = vmatprep.subr.bf16.mxu0 %v3610
        %5567 = vmatpush1.bf16.msra.mxu0 %v3609
        %5568 = vmatprep.subr.bf16.mxu0 %v3614
        %5569 = vmatpush1.bf16.msra.mxu0 %v3613
        %5570 = vmatprep.subr.bf16.mxu0 %v3618
        %5571 = vmatpush1.bf16.msra.mxu0 %v3617
        %5572 = vmatprep.subr.bf16.mxu0 %v3622
        %5573 = vmatpush1.bf16.msra.mxu0 %v3621
        %5574 = vmatprep.subr.bf16.mxu0 %v3626
        %5575 = vmatpush1.bf16.msra.mxu0 %v3625
        %5576 = vmatprep.subr.bf16.mxu0 %v3630
        %5577 = vmatpush1.bf16.msra.mxu0 %v3629
        %5578 = vmatprep.subr.bf16.mxu0 %v3634
        %5579 = vmatpush1.bf16.msra.mxu0 %v3633
        %5580 = vmatprep.subr.bf16.mxu0 %v3638
        %5581 = vmatpush1.bf16.msra.mxu0 %v3637
        %5582 = vmatprep.subr.bf16.mxu0 %v3642
        %5583 = vmatpush1.bf16.msra.mxu0 %v3641
        %5584 = vmatprep.subr.bf16.mxu0 %v3646
        %5585 = vmatpush1.bf16.msra.mxu0 %v3645
        %5586 = vmatprep.subr.bf16.mxu0 %v3650
        %5587 = vmatpush1.bf16.msra.mxu0 %v3649
        %5588 = vmatprep.subr.bf16.mxu0 %v3654
        %5589 = vmatpush1.bf16.msra.mxu0 %v3653
        %5590 = vmatprep.subr.bf16.mxu0 %v3658
        %5591 = vmatpush1.bf16.msra.mxu0 %v3657
        %5592 = vmatprep.subr.bf16.mxu0 %v3662
        %5593 = vmatpush1.bf16.msra.mxu0 %v3661
        %5594 = vmatprep.subr.bf16.mxu0 %v3666
        %5595 = vmatpush1.bf16.msra.mxu0 %v3665
        %5596 = vmatprep.subr.bf16.mxu0 %v3670
        %5597 = vmatpush1.bf16.msra.mxu0 %v3669
        %5598 = vmatprep.mubr.bf16.mxu0 %v326
        %5599 = vmatmul.mubr.bf16.gmra.mrb[0].mxu0 %v325
        %v5600 = vpop.f32.mrb[0].mxu0
        %v5601 = vadd.f32 %v5560, %v5600
        %v5602 = vpop.f32.mrb[0].mxu0
        %v5603 = vadd.f32 %v5562, %v5602
        %v5604 = vpop.f32.mrb[0].mxu0
        %v5605 = vpop.f32.mrb[0].mxu0
        %5606 = vdwg.mxu0
        %5607 = vmatprep.subr.bf16.mxu0 %v3674
        %5608 = vmatpush1.bf16.msra.mxu0 %v3673
        %5609 = vmatprep.subr.bf16.mxu0 %v3678
        %5610 = vmatpush1.bf16.msra.mxu0 %v3677
        %5611 = vmatprep.subr.bf16.mxu0 %v3682
        %5612 = vmatpush1.bf16.msra.mxu0 %v3681
        %5613 = vmatprep.subr.bf16.mxu0 %v3686
        %5614 = vmatpush1.bf16.msra.mxu0 %v3685
        %5615 = vmatprep.subr.bf16.mxu0 %v3690
        %5616 = vmatpush1.bf16.msra.mxu0 %v3689
        %5617 = vmatprep.subr.bf16.mxu0 %v3694
        %5618 = vmatpush1.bf16.msra.mxu0 %v3693
        %5619 = vmatprep.subr.bf16.mxu0 %v3698
        %5620 = vmatpush1.bf16.msra.mxu0 %v3697
        %5621 = vmatprep.subr.bf16.mxu0 %v3702
        %5622 = vmatpush1.bf16.msra.mxu0 %v3701
        %5623 = vmatprep.subr.bf16.mxu0 %v3706
        %5624 = vmatpush1.bf16.msra.mxu0 %v3705
        %5625 = vmatprep.subr.bf16.mxu0 %v3710
        %5626 = vmatpush1.bf16.msra.mxu0 %v3709
        %5627 = vmatprep.subr.bf16.mxu0 %v3714
        %5628 = vmatpush1.bf16.msra.mxu0 %v3713
        %5629 = vmatprep.subr.bf16.mxu0 %v3718
        %5630 = vmatpush1.bf16.msra.mxu0 %v3717
        %5631 = vmatprep.subr.bf16.mxu0 %v3722
        %5632 = vmatpush1.bf16.msra.mxu0 %v3721
        %5633 = vmatprep.subr.bf16.mxu0 %v3726
        %5634 = vmatpush1.bf16.msra.mxu0 %v3725
        %5635 = vmatprep.subr.bf16.mxu0 %v3730
        %5636 = vmatpush1.bf16.msra.mxu0 %v3729
        %5637 = vmatprep.subr.bf16.mxu0 %v3734
        %5638 = vmatpush1.bf16.msra.mxu0 %v3733
        %5639 = vmatprep.mubr.bf16.mxu0 %v328
        %5640 = vmatmul.mubr.bf16.gmra.mrb[0].mxu0 %v327
        %v5641 = vpop.f32.mrb[0].mxu0
        %v5642 = vadd.f32 %v5601, %v5641
        %v5643 = vpop.f32.mrb[0].mxu0
        %v5644 = vadd.f32 %v5603, %v5643
        %v5645 = vpop.f32.mrb[0].mxu0
        %v5646 = vpop.f32.mrb[0].mxu0
        %5647 = vdwg.mxu0
        %5648 = vmatprep.subr.bf16.mxu0 %v3738
        %5649 = vmatpush1.bf16.msra.mxu0 %v3737
        %5650 = vmatprep.subr.bf16.mxu0 %v3742
        %5651 = vmatpush1.bf16.msra.mxu0 %v3741
        %5652 = vmatprep.subr.bf16.mxu0 %v3746
        %5653 = vmatpush1.bf16.msra.mxu0 %v3745
        %5654 = vmatprep.subr.bf16.mxu0 %v3750
        %5655 = vmatpush1.bf16.msra.mxu0 %v3749
        %5656 = vmatprep.subr.bf16.mxu0 %v3754
        %5657 = vmatpush1.bf16.msra.mxu0 %v3753
        %5658 = vmatprep.subr.bf16.mxu0 %v3758
        %5659 = vmatpush1.bf16.msra.mxu0 %v3757
        %5660 = vmatprep.subr.bf16.mxu0 %v3762
        %5661 = vmatpush1.bf16.msra.mxu0 %v3761
        %5662 = vmatprep.subr.bf16.mxu0 %v3766
        %5663 = vmatpush1.bf16.msra.mxu0 %v3765
        %5664 = vmatprep.subr.bf16.mxu0 %v3770
        %5665 = vmatpush1.bf16.msra.mxu0 %v3769
        %5666 = vmatprep.subr.bf16.mxu0 %v3774
        %5667 = vmatpush1.bf16.msra.mxu0 %v3773
        %5668 = vmatprep.subr.bf16.mxu0 %v3778
        %5669 = vmatpush1.bf16.msra.mxu0 %v3777
        %5670 = vmatprep.subr.bf16.mxu0 %v3782
        %5671 = vmatpush1.bf16.msra.mxu0 %v3781
        %5672 = vmatprep.subr.bf16.mxu0 %v3786
        %5673 = vmatpush1.bf16.msra.mxu0 %v3785
        %5674 = vmatprep.subr.bf16.mxu0 %v3790
        %5675 = vmatpush1.bf16.msra.mxu0 %v3789
        %5676 = vmatprep.subr.bf16.mxu0 %v3794
        %5677 = vmatpush1.bf16.msra.mxu0 %v3793
        %5678 = vmatprep.subr.bf16.mxu0 %v3798
        %5679 = vmatpush1.bf16.msra.mxu0 %v3797
        %5680 = vmatprep.mubr.bf16.mxu0 %v330
        %5681 = vmatmul.mubr.bf16.gmra.mrb[0].mxu0 %v329
        %v5682 = vpop.f32.mrb[0].mxu0
        %v5683 = vadd.f32 %v5642, %v5682
        %v5684 = vpop.f32.mrb[0].mxu0
        %v5685 = vadd.f32 %v5644, %v5684
        %v5686 = vpop.f32.mrb[0].mxu0
        %v5687 = vpop.f32.mrb[0].mxu0
        %5688 = vdwg.mxu0
        %5689 = vmatprep.subr.bf16.mxu0 %v3802
        %5690 = vmatpush1.bf16.msra.mxu0 %v3801
        %5691 = vmatprep.subr.bf16.mxu0 %v3806
        %5692 = vmatpush1.bf16.msra.mxu0 %v3805
        %5693 = vmatprep.subr.bf16.mxu0 %v3810
        %5694 = vmatpush1.bf16.msra.mxu0 %v3809
        %5695 = vmatprep.subr.bf16.mxu0 %v3814
        %5696 = vmatpush1.bf16.msra.mxu0 %v3813
        %5697 = vmatprep.subr.bf16.mxu0 %v3818
        %5698 = vmatpush1.bf16.msra.mxu0 %v3817
        %5699 = vmatprep.subr.bf16.mxu0 %v3822
        %5700 = vmatpush1.bf16.msra.mxu0 %v3821
        %5701 = vmatprep.subr.bf16.mxu0 %v3826
        %5702 = vmatpush1.bf16.msra.mxu0 %v3825
        %5703 = vmatprep.subr.bf16.mxu0 %v3830
        %5704 = vmatpush1.bf16.msra.mxu0 %v3829
        %5705 = vmatprep.subr.bf16.mxu0 %v3834
        %5706 = vmatpush1.bf16.msra.mxu0 %v3833
        %5707 = vmatprep.subr.bf16.mxu0 %v3838
        %5708 = vmatpush1.bf16.msra.mxu0 %v3837
        %5709 = vmatprep.subr.bf16.mxu0 %v3842
        %5710 = vmatpush1.bf16.msra.mxu0 %v3841
        %5711 = vmatprep.subr.bf16.mxu0 %v3846
        %5712 = vmatpush1.bf16.msra.mxu0 %v3845
        %5713 = vmatprep.subr.bf16.mxu0 %v3850
        %5714 = vmatpush1.bf16.msra.mxu0 %v3849
        %5715 = vmatprep.subr.bf16.mxu0 %v3854
        %5716 = vmatpush1.bf16.msra.mxu0 %v3853
        %5717 = vmatprep.subr.bf16.mxu0 %v3858
        %5718 = vmatpush1.bf16.msra.mxu0 %v3857
        %5719 = vmatprep.subr.bf16.mxu0 %v3862
        %5720 = vmatpush1.bf16.msra.mxu0 %v3861
        %5721 = vmatprep.mubr.bf16.mxu0 %v332
        %5722 = vmatmul.mubr.bf16.gmra.mrb[0].mxu0 %v331
        %v5723 = vpop.f32.mrb[0].mxu0
        %v5724 = vadd.f32 %v5683, %v5723
        %v5725 = vpop.f32.mrb[0].mxu0
        %v5726 = vadd.f32 %v5685, %v5725
        %v5727 = vpop.f32.mrb[0].mxu0
        %v5728 = vpop.f32.mrb[0].mxu0
        %5729 = vdwg.mxu0
        %5730 = vmatprep.subr.bf16.mxu0 %v3866
        %5731 = vmatpush1.bf16.msra.mxu0 %v3865
        %5732 = vmatprep.subr.bf16.mxu0 %v3870
        %5733 = vmatpush1.bf16.msra.mxu0 %v3869
        %5734 = vmatprep.subr.bf16.mxu0 %v3874
        %5735 = vmatpush1.bf16.msra.mxu0 %v3873
        %5736 = vmatprep.subr.bf16.mxu0 %v3878
        %5737 = vmatpush1.bf16.msra.mxu0 %v3877
        %5738 = vmatprep.subr.bf16.mxu0 %v3882
        %5739 = vmatpush1.bf16.msra.mxu0 %v3881
        %5740 = vmatprep.subr.bf16.mxu0 %v3886
        %5741 = vmatpush1.bf16.msra.mxu0 %v3885
        %5742 = vmatprep.subr.bf16.mxu0 %v3890
        %5743 = vmatpush1.bf16.msra.mxu0 %v3889
        %5744 = vmatprep.subr.bf16.mxu0 %v3894
        %5745 = vmatpush1.bf16.msra.mxu0 %v3893
        %5746 = vmatprep.subr.bf16.mxu0 %v3898
        %5747 = vmatpush1.bf16.msra.mxu0 %v3897
        %5748 = vmatprep.subr.bf16.mxu0 %v3902
        %5749 = vmatpush1.bf16.msra.mxu0 %v3901
        %5750 = vmatprep.subr.bf16.mxu0 %v3906
        %5751 = vmatpush1.bf16.msra.mxu0 %v3905
        %5752 = vmatprep.subr.bf16.mxu0 %v3910
        %5753 = vmatpush1.bf16.msra.mxu0 %v3909
        %5754 = vmatprep.subr.bf16.mxu0 %v3914
        %5755 = vmatpush1.bf16.msra.mxu0 %v3913
        %5756 = vmatprep.subr.bf16.mxu0 %v3918
        %5757 = vmatpush1.bf16.msra.mxu0 %v3917
        %5758 = vmatprep.subr.bf16.mxu0 %v3922
        %5759 = vmatpush1.bf16.msra.mxu0 %v3921
        %5760 = vmatprep.subr.bf16.mxu0 %v3926
        %5761 = vmatpush1.bf16.msra.mxu0 %v3925
        %5762 = vmatprep.mubr.bf16.mxu0 %v334
        %5763 = vmatmul.mubr.bf16.gmra.mrb[0].mxu0 %v333
        %v5764 = vpop.f32.mrb[0].mxu0
        %v5765 = vadd.f32 %v5724, %v5764
        %v5766 = vpop.f32.mrb[0].mxu0
        %v5767 = vadd.f32 %v5726, %v5766
        %v5768 = vpop.f32.mrb[0].mxu0
        %v5769 = vpop.f32.mrb[0].mxu0
        %5770 = vdwg.mxu0
        %5771 = vmatprep.subr.bf16.mxu0 %v3930
        %5772 = vmatpush1.bf16.msra.mxu0 %v3929
        %5773 = vmatprep.subr.bf16.mxu0 %v3934
        %5774 = vmatpush1.bf16.msra.mxu0 %v3933
        %5775 = vmatprep.subr.bf16.mxu0 %v3938
        %5776 = vmatpush1.bf16.msra.mxu0 %v3937
        %5777 = vmatprep.subr.bf16.mxu0 %v3942
        %5778 = vmatpush1.bf16.msra.mxu0 %v3941
        %5779 = vmatprep.subr.bf16.mxu0 %v3946
        %5780 = vmatpush1.bf16.msra.mxu0 %v3945
        %5781 = vmatprep.subr.bf16.mxu0 %v3950
        %5782 = vmatpush1.bf16.msra.mxu0 %v3949
        %5783 = vmatprep.subr.bf16.mxu0 %v3954
        %5784 = vmatpush1.bf16.msra.mxu0 %v3953
        %5785 = vmatprep.subr.bf16.mxu0 %v3958
        %5786 = vmatpush1.bf16.msra.mxu0 %v3957
        %5787 = vmatprep.subr.bf16.mxu0 %v3962
        %5788 = vmatpush1.bf16.msra.mxu0 %v3961
        %5789 = vmatprep.subr.bf16.mxu0 %v3966
        %5790 = vmatpush1.bf16.msra.mxu0 %v3965
        %5791 = vmatprep.subr.bf16.mxu0 %v3970
        %5792 = vmatpush1.bf16.msra.mxu0 %v3969
        %5793 = vmatprep.subr.bf16.mxu0 %v3974
        %5794 = vmatpush1.bf16.msra.mxu0 %v3973
        %5795 = vmatprep.subr.bf16.mxu0 %v3978
        %5796 = vmatpush1.bf16.msra.mxu0 %v3977
        %5797 = vmatprep.subr.bf16.mxu0 %v3982
        %5798 = vmatpush1.bf16.msra.mxu0 %v3981
        %5799 = vmatprep.subr.bf16.mxu0 %v3986
        %5800 = vmatpush1.bf16.msra.mxu0 %v3985
        %5801 = vmatprep.subr.bf16.mxu0 %v3990
        %5802 = vmatpush1.bf16.msra.mxu0 %v3989
        %5803 = vmatprep.mubr.bf16.mxu0 %v336
        %5804 = vmatmul.mubr.bf16.gmra.mrb[0].mxu0 %v335
        %v5805 = vpop.f32.mrb[0].mxu0
        %v5806 = vadd.f32 %v5765, %v5805
        %v5807 = vpop.f32.mrb[0].mxu0
        %v5808 = vadd.f32 %v5767, %v5807
        %v5809 = vpop.f32.mrb[0].mxu0
        %v5810 = vpop.f32.mrb[0].mxu0
        %5811 = vdwg.mxu0
        %5812 = vmatprep.subr.bf16.mxu0 %v3994
        %5813 = vmatpush1.bf16.msra.mxu0 %v3993
        %5814 = vmatprep.subr.bf16.mxu0 %v3998
        %5815 = vmatpush1.bf16.msra.mxu0 %v3997
        %5816 = vmatprep.subr.bf16.mxu0 %v4002
        %5817 = vmatpush1.bf16.msra.mxu0 %v4001
        %5818 = vmatprep.subr.bf16.mxu0 %v4006
        %5819 = vmatpush1.bf16.msra.mxu0 %v4005
        %5820 = vmatprep.subr.bf16.mxu0 %v4010
        %5821 = vmatpush1.bf16.msra.mxu0 %v4009
        %5822 = vmatprep.subr.bf16.mxu0 %v4014
        %5823 = vmatpush1.bf16.msra.mxu0 %v4013
        %5824 = vmatprep.subr.bf16.mxu0 %v4018
        %5825 = vmatpush1.bf16.msra.mxu0 %v4017
        %5826 = vmatprep.subr.bf16.mxu0 %v4022
        %5827 = vmatpush1.bf16.msra.mxu0 %v4021
        %5828 = vmatprep.subr.bf16.mxu0 %v4026
        %5829 = vmatpush1.bf16.msra.mxu0 %v4025
        %5830 = vmatprep.subr.bf16.mxu0 %v4030
        %5831 = vmatpush1.bf16.msra.mxu0 %v4029
        %5832 = vmatprep.subr.bf16.mxu0 %v4034
        %5833 = vmatpush1.bf16.msra.mxu0 %v4033
        %5834 = vmatprep.subr.bf16.mxu0 %v4038
        %5835 = vmatpush1.bf16.msra.mxu0 %v4037
        %5836 = vmatprep.subr.bf16.mxu0 %v4042
        %5837 = vmatpush1.bf16.msra.mxu0 %v4041
        %5838 = vmatprep.subr.bf16.mxu0 %v4046
        %5839 = vmatpush1.bf16.msra.mxu0 %v4045
        %5840 = vmatprep.subr.bf16.mxu0 %v4050
        %5841 = vmatpush1.bf16.msra.mxu0 %v4049
        %5842 = vmatprep.subr.bf16.mxu0 %v4054
        %5843 = vmatpush1.bf16.msra.mxu0 %v4053
        %5844 = vmatprep.mubr.bf16.mxu0 %v338
        %5845 = vmatmul.mubr.bf16.gmra.mrb[0].mxu0 %v337
        %v5846 = vpop.f32.mrb[0].mxu0
        %v5847 = vadd.f32 %v5806, %v5846
        %v5848 = vpop.f32.mrb[0].mxu0
        %v5849 = vadd.f32 %v5808, %v5848
        %v5850 = vpop.f32.mrb[0].mxu0
        %v5851 = vpop.f32.mrb[0].mxu0
        %5852 = vdwg.mxu0
        %5853 = vmatprep.subr.bf16.mxu0 %v4058
        %5854 = vmatpush1.bf16.msra.mxu0 %v4057
        %5855 = vmatprep.subr.bf16.mxu0 %v4062
        %5856 = vmatpush1.bf16.msra.mxu0 %v4061
        %5857 = vmatprep.subr.bf16.mxu0 %v4066
        %5858 = vmatpush1.bf16.msra.mxu0 %v4065
        %5859 = vmatprep.subr.bf16.mxu0 %v4070
        %5860 = vmatpush1.bf16.msra.mxu0 %v4069
        %5861 = vmatprep.subr.bf16.mxu0 %v4074
        %5862 = vmatpush1.bf16.msra.mxu0 %v4073
        %5863 = vmatprep.subr.bf16.mxu0 %v4078
        %5864 = vmatpush1.bf16.msra.mxu0 %v4077
        %5865 = vmatprep.subr.bf16.mxu0 %v4082
        %5866 = vmatpush1.bf16.msra.mxu0 %v4081
        %5867 = vmatprep.subr.bf16.mxu0 %v4086
        %5868 = vmatpush1.bf16.msra.mxu0 %v4085
        %5869 = vmatprep.subr.bf16.mxu0 %v4090
        %5870 = vmatpush1.bf16.msra.mxu0 %v4089
        %5871 = vmatprep.subr.bf16.mxu0 %v4094
        %5872 = vmatpush1.bf16.msra.mxu0 %v4093
        %5873 = vmatprep.subr.bf16.mxu0 %v4098
        %5874 = vmatpush1.bf16.msra.mxu0 %v4097
        %5875 = vmatprep.subr.bf16.mxu0 %v4102
        %5876 = vmatpush1.bf16.msra.mxu0 %v4101
        %5877 = vmatprep.subr.bf16.mxu0 %v4106
        %5878 = vmatpush1.bf16.msra.mxu0 %v4105
        %5879 = vmatprep.subr.bf16.mxu0 %v4110
        %5880 = vmatpush1.bf16.msra.mxu0 %v4109
        %5881 = vmatprep.subr.bf16.mxu0 %v4114
        %5882 = vmatpush1.bf16.msra.mxu0 %v4113
        %5883 = vmatprep.subr.bf16.mxu0 %v4118
        %5884 = vmatpush1.bf16.msra.mxu0 %v4117
        %5885 = vmatprep.mubr.bf16.mxu0 %v340
        %5886 = vmatmul.mubr.bf16.gmra.mrb[0].mxu0 %v339
        %v5887 = vpop.f32.mrb[0].mxu0
        %v5888 = vadd.f32 %v5847, %v5887
        %v5889 = vpop.f32.mrb[0].mxu0
        %v5890 = vadd.f32 %v5849, %v5889
        %v5891 = vpop.f32.mrb[0].mxu0
        %v5892 = vpop.f32.mrb[0].mxu0
        %5893 = vdwg.mxu0
        %5894 = vmatprep.subr.bf16.mxu0 %v4122
        %5895 = vmatpush1.bf16.msra.mxu0 %v4121
        %5896 = vmatprep.subr.bf16.mxu0 %v4126
        %5897 = vmatpush1.bf16.msra.mxu0 %v4125
        %5898 = vmatprep.subr.bf16.mxu0 %v4130
        %5899 = vmatpush1.bf16.msra.mxu0 %v4129
        %5900 = vmatprep.subr.bf16.mxu0 %v4134
        %5901 = vmatpush1.bf16.msra.mxu0 %v4133
        %5902 = vmatprep.subr.bf16.mxu0 %v4138
        %5903 = vmatpush1.bf16.msra.mxu0 %v4137
        %5904 = vmatprep.subr.bf16.mxu0 %v4142
        %5905 = vmatpush1.bf16.msra.mxu0 %v4141
        %5906 = vmatprep.subr.bf16.mxu0 %v4146
        %5907 = vmatpush1.bf16.msra.mxu0 %v4145
        %5908 = vmatprep.subr.bf16.mxu0 %v4150
        %5909 = vmatpush1.bf16.msra.mxu0 %v4149
        %5910 = vmatprep.subr.bf16.mxu0 %v4154
        %5911 = vmatpush1.bf16.msra.mxu0 %v4153
        %5912 = vmatprep.subr.bf16.mxu0 %v4158
        %5913 = vmatpush1.bf16.msra.mxu0 %v4157
        %5914 = vmatprep.subr.bf16.mxu0 %v4162
        %5915 = vmatpush1.bf16.msra.mxu0 %v4161
        %5916 = vmatprep.subr.bf16.mxu0 %v4166
        %5917 = vmatpush1.bf16.msra.mxu0 %v4165
        %5918 = vmatprep.subr.bf16.mxu0 %v4170
        %5919 = vmatpush1.bf16.msra.mxu0 %v4169
        %5920 = vmatprep.subr.bf16.mxu0 %v4174
        %5921 = vmatpush1.bf16.msra.mxu0 %v4173
        %5922 = vmatprep.subr.bf16.mxu0 %v4178
        %5923 = vmatpush1.bf16.msra.mxu0 %v4177
        %5924 = vmatprep.subr.bf16.mxu0 %v4182
        %5925 = vmatpush1.bf16.msra.mxu0 %v4181
        %5926 = vmatprep.mubr.bf16.mxu0 %v342
        %5927 = vmatmul.mubr.bf16.gmra.mrb[0].mxu0 %v341
        %v5928 = vpop.f32.mrb[0].mxu0
        %v5929 = vadd.f32 %v5888, %v5928
        %v5930 = vpop.f32.mrb[0].mxu0
        %v5931 = vadd.f32 %v5890, %v5930
        %v5932 = vpop.f32.mrb[0].mxu0
        %v5933 = vpop.f32.mrb[0].mxu0
        %5934 = vdwg.mxu0
        %v5935 = vmax.f32 %v5437, 0.0
        %v5936 = vmax.f32 %v5439, 0.0
        %v5937 = vmax.f32 %v5929, 0.0
        %v5938 = vmax.f32 %v5931, 0.0
        %v5939 = vld [vmem:[#allocation7] sm:$0xf]
        %v5941 = vlaneseq
        %v5942 = vshrl.u32 %v5941, 7
        %v5943 = vsub.s32 0, %v5942
        %v5944 = vrot.slane %v5939, %v5943
        %v5945 = vlaneseq
        %v5946 = vshrl.u32 %v5945, 7
        %v5947 = vsub.s32 1, %v5946
        %v5948 = vrot.slane %v5939, %v5947
        %v5949 = vlaneseq
        %v5950 = vshrl.u32 %v5949, 7
        %v5951 = vsub.s32 2, %v5950
        %v5952 = vrot.slane %v5939, %v5951
        %v5953 = vlaneseq
        %v5954 = vshrl.u32 %v5953, 7
        %v5955 = vsub.s32 3, %v5954
        %v5956 = vrot.slane %v5939, %v5955
        %v5961 = vmul.f32 %v5935, %v5944
        %v5962 = vmul.f32 %v5936, %v5948
        %v5963 = vmul.f32 %v5937, %v5952
        %v5964 = vmul.f32 %v5938, %v5956
        %5965 = vst [vmem:[%s293] sm:$0xff] %v5961
        %5966 = vst [vmem:[%s293 + $0x8] sm:$0xff] %v5962
        %5967 = vst [vmem:[%s293 + $0x10] sm:$0xff] %v5963
        %5968 = vst [vmem:[%s293 + $0x18] sm:$0xff] %v5964
        %v5969 = vpack.c.bf16 %v5961, %v5961
        %v5970 = vpack.c.bf16 %v5962, %v5962
        %v5971 = vpack.c.bf16 %v5963, %v5963
        %v5972 = vpack.c.bf16 %v5964, %v5964
        %v5973 = vld [vmem:[#allocation8] sm:$0xf]
        %v5974 = vld [vmem:[#allocation8 + $0x4] sm:$0xf]
        %v5975 = vld [vmem:[#allocation8 + $0x8] sm:$0xf]
        %v5976 = vld [vmem:[#allocation8 + $0xc] sm:$0xf]
        %v5977 = vld [vmem:[#allocation8 + $0x10] sm:$0xf]
        %v5978 = vld [vmem:[#allocation8 + $0x14] sm:$0xf]
        %v5979 = vld [vmem:[#allocation8 + $0x18] sm:$0xf]
        %v5980 = vld [vmem:[#allocation8 + $0x1c] sm:$0xf]
        %v5981 = vld [vmem:[#allocation8 + $0x20] sm:$0xf]
        %v5982 = vld [vmem:[#allocation8 + $0x24] sm:$0xf]
        %v5983 = vld [vmem:[#allocation8 + $0x28] sm:$0xf]
        %v5984 = vld [vmem:[#allocation8 + $0x2c] sm:$0xf]
        %v5985 = vld [vmem:[#allocation8 + $0x30] sm:$0xf]
        %v5986 = vld [vmem:[#allocation8 + $0x34] sm:$0xf]
        %v5987 = vld [vmem:[#allocation8 + $0x38] sm:$0xf]
        %v5988 = vld [vmem:[#allocation8 + $0x3c] sm:$0xf]
        %v5989 = vld [vmem:[#allocation8 + $0x40] sm:$0xf]
        %v5990 = vld [vmem:[#allocation8 + $0x44] sm:$0xf]
        %v5991 = vld [vmem:[#allocation8 + $0x48] sm:$0xf]
        %v5992 = vld [vmem:[#allocation8 + $0x4c] sm:$0xf]
        %v5993 = vld [vmem:[#allocation8 + $0x50] sm:$0xf]
        %v5994 = vld [vmem:[#allocation8 + $0x54] sm:$0xf]
        %v5995 = vld [vmem:[#allocation8 + $0x58] sm:$0xf]
        %v5996 = vld [vmem:[#allocation8 + $0x5c] sm:$0xf]
        %v5997 = vld [vmem:[#allocation8 + $0x60] sm:$0xf]
        %v5998 = vld [vmem:[#allocation8 + $0x64] sm:$0xf]
        %v5999 = vld [vmem:[#allocation8 + $0x68] sm:$0xf]
        %v6000 = vld [vmem:[#allocation8 + $0x6c] sm:$0xf]
        %v6001 = vld [vmem:[#allocation8 + $0x70] sm:$0xf]
        %v6002 = vld [vmem:[#allocation8 + $0x74] sm:$0xf]
        %v6003 = vld [vmem:[#allocation8 + $0x78] sm:$0xf]
        %v6004 = vld [vmem:[#allocation8 + $0x7c] sm:$0xf]
        %v6005 = vld [vmem:[#allocation8 + $0x80] sm:$0xf]
        %v6006 = vld [vmem:[#allocation8 + $0x84] sm:$0xf]
        %v6007 = vld [vmem:[#allocation8 + $0x88] sm:$0xf]
        %v6008 = vld [vmem:[#allocation8 + $0x8c] sm:$0xf]
        %v6009 = vld [vmem:[#allocation8 + $0x90] sm:$0xf]
        %v6010 = vld [vmem:[#allocation8 + $0x94] sm:$0xf]
        %v6011 = vld [vmem:[#allocation8 + $0x98] sm:$0xf]
        %v6012 = vld [vmem:[#allocation8 + $0x9c] sm:$0xf]
        %v6013 = vld [vmem:[#allocation8 + $0xa0] sm:$0xf]
        %v6014 = vld [vmem:[#allocation8 + $0xa4] sm:$0xf]
        %v6015 = vld [vmem:[#allocation8 + $0xa8] sm:$0xf]
        %v6016 = vld [vmem:[#allocation8 + $0xac] sm:$0xf]
        %v6017 = vld [vmem:[#allocation8 + $0xb0] sm:$0xf]
        %v6018 = vld [vmem:[#allocation8 + $0xb4] sm:$0xf]
        %v6019 = vld [vmem:[#allocation8 + $0xb8] sm:$0xf]
        %v6020 = vld [vmem:[#allocation8 + $0xbc] sm:$0xf]
        %v6021 = vld [vmem:[#allocation8 + $0xc0] sm:$0xf]
        %v6022 = vld [vmem:[#allocation8 + $0xc4] sm:$0xf]
        %v6023 = vld [vmem:[#allocation8 + $0xc8] sm:$0xf]
        %v6024 = vld [vmem:[#allocation8 + $0xcc] sm:$0xf]
        %v6025 = vld [vmem:[#allocation8 + $0xd0] sm:$0xf]
        %v6026 = vld [vmem:[#allocation8 + $0xd4] sm:$0xf]
        %v6027 = vld [vmem:[#allocation8 + $0xd8] sm:$0xf]
        %v6028 = vld [vmem:[#allocation8 + $0xdc] sm:$0xf]
        %v6029 = vld [vmem:[#allocation8 + $0xe0] sm:$0xf]
        %v6030 = vld [vmem:[#allocation8 + $0xe4] sm:$0xf]
        %v6031 = vld [vmem:[#allocation8 + $0xe8] sm:$0xf]
        %v6032 = vld [vmem:[#allocation8 + $0xec] sm:$0xf]
        %v6033 = vld [vmem:[#allocation8 + $0xf0] sm:$0xf]
        %v6034 = vld [vmem:[#allocation8 + $0xf4] sm:$0xf]
        %v6035 = vld [vmem:[#allocation8 + $0xf8] sm:$0xf]
        %v6036 = vld [vmem:[#allocation8 + $0xfc] sm:$0xf]
        %v6101 = vunpack.c.l.b16 %v5973
        %v6102 = vunpack.c.l.b16 %v5974
        %v6103 = vunpack.c.l.b16 %v5975
        %v6104 = vunpack.c.l.b16 %v5976
        %v6105 = vunpack.c.l.b16 %v5977
        %v6106 = vunpack.c.l.b16 %v5978
        %v6107 = vunpack.c.l.b16 %v5979
        %v6108 = vunpack.c.l.b16 %v5980
        %v6109 = vunpack.c.l.b16 %v5981
        %v6110 = vunpack.c.l.b16 %v5982
        %v6111 = vunpack.c.l.b16 %v5983
        %v6112 = vunpack.c.l.b16 %v5984
        %v6113 = vunpack.c.l.b16 %v5985
        %v6114 = vunpack.c.l.b16 %v5986
        %v6115 = vunpack.c.l.b16 %v5987
        %v6116 = vunpack.c.l.b16 %v5988
        %v6117 = vunpack.c.l.b16 %v5989
        %v6118 = vunpack.c.l.b16 %v5990
        %v6119 = vunpack.c.l.b16 %v5991
        %v6120 = vunpack.c.l.b16 %v5992
        %v6121 = vunpack.c.l.b16 %v5993
        %v6122 = vunpack.c.l.b16 %v5994
        %v6123 = vunpack.c.l.b16 %v5995
        %v6124 = vunpack.c.l.b16 %v5996
        %v6125 = vunpack.c.l.b16 %v5997
        %v6126 = vunpack.c.l.b16 %v5998
        %v6127 = vunpack.c.l.b16 %v5999
        %v6128 = vunpack.c.l.b16 %v6000
        %v6129 = vunpack.c.l.b16 %v6001
        %v6130 = vunpack.c.l.b16 %v6002
        %v6131 = vunpack.c.l.b16 %v6003
        %v6132 = vunpack.c.l.b16 %v6004
        %v6133 = vunpack.c.l.b16 %v6005
        %v6134 = vunpack.c.l.b16 %v6006
        %v6135 = vunpack.c.l.b16 %v6007
        %v6136 = vunpack.c.l.b16 %v6008
        %v6137 = vunpack.c.l.b16 %v6009
        %v6138 = vunpack.c.l.b16 %v6010
        %v6139 = vunpack.c.l.b16 %v6011
        %v6140 = vunpack.c.l.b16 %v6012
        %v6141 = vunpack.c.l.b16 %v6013
        %v6142 = vunpack.c.l.b16 %v6014
        %v6143 = vunpack.c.l.b16 %v6015
        %v6144 = vunpack.c.l.b16 %v6016
        %v6145 = vunpack.c.l.b16 %v6017
        %v6146 = vunpack.c.l.b16 %v6018
        %v6147 = vunpack.c.l.b16 %v6019
        %v6148 = vunpack.c.l.b16 %v6020
        %v6149 = vunpack.c.l.b16 %v6021
        %v6150 = vunpack.c.l.b16 %v6022
        %v6151 = vunpack.c.l.b16 %v6023
        %v6152 = vunpack.c.l.b16 %v6024
        %v6153 = vunpack.c.l.b16 %v6025
        %v6154 = vunpack.c.l.b16 %v6026
        %v6155 = vunpack.c.l.b16 %v6027
        %v6156 = vunpack.c.l.b16 %v6028
        %v6157 = vunpack.c.l.b16 %v6029
        %v6158 = vunpack.c.l.b16 %v6030
        %v6159 = vunpack.c.l.b16 %v6031
        %v6160 = vunpack.c.l.b16 %v6032
        %v6161 = vunpack.c.l.b16 %v6033
        %v6162 = vunpack.c.l.b16 %v6034
        %v6163 = vunpack.c.l.b16 %v6035
        %v6164 = vunpack.c.l.b16 %v6036
        %v6165 = vpack.c.b16 %v6102, %v6101
        %v6166 = vpack.c.b16 %v6104, %v6103
        %v6167 = vpack.c.b16 %v6106, %v6105
        %v6168 = vpack.c.b16 %v6108, %v6107
        %v6169 = vpack.c.b16 %v6110, %v6109
        %v6170 = vpack.c.b16 %v6112, %v6111
        %v6171 = vpack.c.b16 %v6114, %v6113
        %v6172 = vpack.c.b16 %v6116, %v6115
        %v6173 = vpack.c.b16 %v6118, %v6117
        %v6174 = vpack.c.b16 %v6120, %v6119
        %v6175 = vpack.c.b16 %v6122, %v6121
        %v6176 = vpack.c.b16 %v6124, %v6123
        %v6177 = vpack.c.b16 %v6126, %v6125
        %v6178 = vpack.c.b16 %v6128, %v6127
        %v6179 = vpack.c.b16 %v6130, %v6129
        %v6180 = vpack.c.b16 %v6132, %v6131
        %v6181 = vpack.c.b16 %v6134, %v6133
        %v6182 = vpack.c.b16 %v6136, %v6135
        %v6183 = vpack.c.b16 %v6138, %v6137
        %v6184 = vpack.c.b16 %v6140, %v6139
        %v6185 = vpack.c.b16 %v6142, %v6141
        %v6186 = vpack.c.b16 %v6144, %v6143
        %v6187 = vpack.c.b16 %v6146, %v6145
        %v6188 = vpack.c.b16 %v6148, %v6147
        %v6189 = vpack.c.b16 %v6150, %v6149
        %v6190 = vpack.c.b16 %v6152, %v6151
        %v6191 = vpack.c.b16 %v6154, %v6153
        %v6192 = vpack.c.b16 %v6156, %v6155
        %v6193 = vpack.c.b16 %v6158, %v6157
        %v6194 = vpack.c.b16 %v6160, %v6159
        %v6195 = vpack.c.b16 %v6162, %v6161
        %v6196 = vpack.c.b16 %v6164, %v6163
        %6229 = vmatprep.subr.bf16.mxu0 0
        %6230 = vmatpush1.bf16.msra.mxu0 %v6165
        %6231 = vmatprep.subr.bf16.mxu0 0
        %6232 = vmatpush1.bf16.msra.mxu0 %v6166
        %6233 = vmatprep.subr.bf16.mxu0 0
        %6234 = vmatpush1.bf16.msra.mxu0 %v6167
        %6235 = vmatprep.subr.bf16.mxu0 0
        %6236 = vmatpush1.bf16.msra.mxu0 %v6168
        %6237 = vmatprep.subr.bf16.mxu0 0
        %6238 = vmatpush1.bf16.msra.mxu0 %v6169
        %6239 = vmatprep.subr.bf16.mxu0 0
        %6240 = vmatpush1.bf16.msra.mxu0 %v6170
        %6241 = vmatprep.subr.bf16.mxu0 0
        %6242 = vmatpush1.bf16.msra.mxu0 %v6171
        %6243 = vmatprep.subr.bf16.mxu0 0
        %6244 = vmatpush1.bf16.msra.mxu0 %v6172
        %6245 = vmatprep.subr.bf16.mxu0 0
        %6246 = vmatpush1.bf16.msra.mxu0 %v6173
        %6247 = vmatprep.subr.bf16.mxu0 0
        %6248 = vmatpush1.bf16.msra.mxu0 %v6174
        %6249 = vmatprep.subr.bf16.mxu0 0
        %6250 = vmatpush1.bf16.msra.mxu0 %v6175
        %6251 = vmatprep.subr.bf16.mxu0 0
        %6252 = vmatpush1.bf16.msra.mxu0 %v6176
        %6253 = vmatprep.subr.bf16.mxu0 0
        %6254 = vmatpush1.bf16.msra.mxu0 %v6177
        %6255 = vmatprep.subr.bf16.mxu0 0
        %6256 = vmatpush1.bf16.msra.mxu0 %v6178
        %6257 = vmatprep.subr.bf16.mxu0 0
        %6258 = vmatpush1.bf16.msra.mxu0 %v6179
        %6259 = vmatprep.subr.bf16.mxu0 0
        %6260 = vmatpush1.bf16.msra.mxu0 %v6180
        %6261 = vmatprep.mubr.bf16.mxu0 %v5970
        %6262 = vmatmul.mubr.bf16.gmra.mrb[0].mxu0 %v5969
        %v6263 = vpop.f32.mrb[0].mxu0
        %v6264 = vadd.f32 0.0, %v6263
        %v6265 = vpop.f32.mrb[0].mxu0
        %v6266 = vpop.f32.mrb[0].mxu0
        %v6267 = vpop.f32.mrb[0].mxu0
        %6268 = vdwg.mxu0
        %6269 = vmatprep.subr.bf16.mxu0 0
        %6270 = vmatpush1.bf16.msra.mxu0 %v6181
        %6271 = vmatprep.subr.bf16.mxu0 0
        %6272 = vmatpush1.bf16.msra.mxu0 %v6182
        %6273 = vmatprep.subr.bf16.mxu0 0
        %6274 = vmatpush1.bf16.msra.mxu0 %v6183
        %6275 = vmatprep.subr.bf16.mxu0 0
        %6276 = vmatpush1.bf16.msra.mxu0 %v6184
        %6277 = vmatprep.subr.bf16.mxu0 0
        %6278 = vmatpush1.bf16.msra.mxu0 %v6185
        %6279 = vmatprep.subr.bf16.mxu0 0
        %6280 = vmatpush1.bf16.msra.mxu0 %v6186
        %6281 = vmatprep.subr.bf16.mxu0 0
        %6282 = vmatpush1.bf16.msra.mxu0 %v6187
        %6283 = vmatprep.subr.bf16.mxu0 0
        %6284 = vmatpush1.bf16.msra.mxu0 %v6188
        %6285 = vmatprep.subr.bf16.mxu0 0
        %6286 = vmatpush1.bf16.msra.mxu0 %v6189
        %6287 = vmatprep.subr.bf16.mxu0 0
        %6288 = vmatpush1.bf16.msra.mxu0 %v6190
        %6289 = vmatprep.subr.bf16.mxu0 0
        %6290 = vmatpush1.bf16.msra.mxu0 %v6191
        %6291 = vmatprep.subr.bf16.mxu0 0
        %6292 = vmatpush1.bf16.msra.mxu0 %v6192
        %6293 = vmatprep.subr.bf16.mxu0 0
        %6294 = vmatpush1.bf16.msra.mxu0 %v6193
        %6295 = vmatprep.subr.bf16.mxu0 0
        %6296 = vmatpush1.bf16.msra.mxu0 %v6194
        %6297 = vmatprep.subr.bf16.mxu0 0
        %6298 = vmatpush1.bf16.msra.mxu0 %v6195
        %6299 = vmatprep.subr.bf16.mxu0 0
        %6300 = vmatpush1.bf16.msra.mxu0 %v6196
        %6301 = vmatprep.mubr.bf16.mxu0 %v5972
        %6302 = vmatmul.mubr.bf16.gmra.mrb[0].mxu0 %v5971
        %v6303 = vpop.f32.mrb[0].mxu0
        %v6304 = vadd.f32 %v6264, %v6303
        %v6305 = vpop.f32.mrb[0].mxu0
        %v6306 = vpop.f32.mrb[0].mxu0
        %v6307 = vpop.f32.mrb[0].mxu0
        %6308 = vdwg.mxu0
        %v6309 = vlaneseq
        %v6310 = vand.u32 %v6309, 127
        %vm6311 = vcmp.lt.s32.totalorder %v6310, 10
        %v6312 = vsel %vm6311, %v6304, -1e+30
        %6313 = vmax.xlane.f32.xlu0 %v6312
        %v6314 = vpop.xlane.xlu0 %6313
        %v6315 = vsub.f32 %v6312, %v6314
        %v6316 = vmul.f32 %v6315, 1.442695
        %v6317 = vpow.pop %v6316
        %v6318 = vsel %vm6311, %v6317, 0.0
        %6319 = vadd.xlane.f32.xlu0 %v6318
        %v6320 = vpop.xlane.xlu0 %6319
        %v6321 = vlog2.pop %v6320
        %v6322 = vmul.f32 %v6321, 0.6931472
        %v6323 = vadd.f32 %v6322, %v6314
        %v6324 = vsub.f32 %v6312, %v6323
        %6325 = vst [vmem:[%s286] sm:$0xff] %v6324
        %s6326 = sand.u32 %s125, 1
        %s6327 = scalar_lea.sflag [#allocation4], %s6326
        %s6328 = sand.u32 %s125, 1
        %s6329 = smul.addr %s6328, 8
        %s6330 = scalar_lea.vmem [#allocation10], %s6329
        %s6331 = sand.u32 %s151, 1
        %s6332 = scalar_lea.sflag [#allocation12], %s6331
        %s6333 = sand.u32 %s151, 1
        %s6334 = smul.addr %s6333, 32
        %s6335 = scalar_lea.vmem [#allocation11], %s6334
        // Predicated region
        $region53: #{tpu_custom_call.1} parent=35 // pred_check
          %p6336 = pneg %p135
        $region54: #{tpu_custom_call.1} parent=35 // pred_check_branch
          %6338 = sbr.rel (%p6336) target = $region56
        $region55: #{tpu_custom_call.1} parent=35 // pred_region
          %s6340 = ssub.s32 128, 128
          %6341 = vsyncadd %s6327, %s6340
          %s6342 = smul.addr %s28, 128
          %s6343 = scalar_lea.hbm %s4, %s6342
          %s6345 = sshll.u32 %s6330, 4
          %s6346 = int_to_ptr.vmem [resolvable:$true] %s6345
          %6348 = dma.vmem_to_hbm [thread:$0]  %s6346, 128, %s6343, %s6327
        $region56: #{tpu_custom_call.1} parent=35 // pred_fallthru
          _
        // Predicated region
        $region57: #{tpu_custom_call.1} parent=35 // pred_check
          %p6349 = pneg %p161
        $region58: #{tpu_custom_call.1} parent=35 // pred_check_branch
          %6351 = sbr.rel (%p6349) target = $region60
        $region59: #{tpu_custom_call.1} parent=35 // pred_region
          %s6353 = ssub.s32 512, 512
          %6354 = vsyncadd %s6332, %s6353
          %s6355 = smul.addr %s28, 4
          %s6356 = smul.addr %s6355, 128
          %s6357 = scalar_lea.hbm %s5, %s6356
          %s6359 = sshll.u32 %s6335, 4
          %s6360 = int_to_ptr.vmem [resolvable:$true] %s6359
          %6362 = dma.vmem_to_hbm [thread:$0]  %s6360, 512, %s6357, %s6332
        $region60: #{tpu_custom_call.1} parent=35 // pred_fallthru
          _
      $region36: #{tpu_custom_call.1} parent=5 // pred_fallthru
        _
      %p6363 = scmp.le.s32.totalorder 2, %s23
      // Predicated region
      $region61: #{tpu_custom_call.1} parent=5 // pred_check
        %p6364 = pneg %p6363
      $region62: #{tpu_custom_call.1} parent=5 // pred_check_branch
        %6366 = sbr.rel (%p6364) target = $region64
      $region63: #{tpu_custom_call.1} parent=5 // pred_region
        %s6367 = ssub.s32 %s23, 2
        // Predicated region
        $region65: #{tpu_custom_call.1} parent=63 // pred_check
          %p6368 = pneg %p141
        $region66: #{tpu_custom_call.1} parent=63 // pred_check_branch
          %6370 = sbr.rel (%p6368) target = $region68
        $region67: #{tpu_custom_call.1} parent=63 // pred_region
          %s6371 = sand.u32 %s126, 1
          %s6372 = scalar_lea.sflag [#allocation4], %s6371
          %s6373 = sand.u32 %s126, 1
          %s6374 = smul.addr %s6373, 8
          %s6375 = scalar_lea.vmem [#allocation10], %s6374
          %6376 = dma.done %s6372, 128
        $region68: #{tpu_custom_call.1} parent=63 // pred_fallthru
          _
        // Predicated region
        $region69: #{tpu_custom_call.1} parent=63 // pred_check
          %p6377 = pneg %p167
        $region70: #{tpu_custom_call.1} parent=63 // pred_check_branch
          %6379 = sbr.rel (%p6377) target = $region72
        $region71: #{tpu_custom_call.1} parent=63 // pred_region
          %s6380 = sand.u32 %s152, 1
          %s6381 = scalar_lea.sflag [#allocation12], %s6380
          %s6382 = sand.u32 %s152, 1
          %s6383 = smul.addr %s6382, 32
          %s6384 = scalar_lea.vmem [#allocation11], %s6383
          %6385 = dma.done %s6381, 512
        $region72: #{tpu_custom_call.1} parent=63 // pred_fallthru
          _
      $region64: #{tpu_custom_call.1} parent=5 // pred_fallthru
        _
    $region6: #{tpu_custom_call.1} parent=1 // loop_footer
      %s27 = sadd.s32 1, %s23
    $region7: #{tpu_custom_call.1} parent=1 // loop_footer_branch
      %22 = sbr.rel target = $region3
    $region8: #{tpu_custom_call.1} parent=1 // loop_exit
      _
    %6386 = vsyncpa [#allocation3], 1
    %s6387 = scalar_lea.sflag [#allocation3], 1
    %6388 = vsyncpa %s6387, 1
    %6389 = vsyncpa [#allocation6], 1
    %6390 = vsyncpa [#allocation9], 1
    %6391 = vsyncpa [#allocation4], 1
    %s6392 = scalar_lea.sflag [#allocation4], 1
    %6393 = vsyncpa %s6392, 1
    %6394 = vsyncpa [#allocation12], 1
    %s6395 = scalar_lea.sflag [#allocation12], 1
    %6396 = vsyncpa %s6395, 1

</llo_original>
